<compile_context>
chip_gen: v5e
topology: v5e:2x2
jax: 0.10.0
libtpu: 0.0.40
codegen_flags: <defaults>
</compile_context>

<pallas_src>
import jax
import jax.numpy as jnp
import numpy as np
from jax.experimental import pallas as pl
from jax.experimental.pallas import tpu as pltpu

GRID_SIZE = 5
SPLINE_ORDER = 3
GRID_RANGE = (-1.0, 1.0)
NUM_BASES = GRID_SIZE + SPLINE_ORDER                      # 8 spline basis functions
_H = (GRID_RANGE[1] - GRID_RANGE[0]) / GRID_SIZE          # uniform knot spacing
_INV_H = 1.0 / _H
_U_OFFSET = SPLINE_ORDER - GRID_RANGE[0] * _INV_H         # u = x/h + offset; knot_t <-> u==t
_NUM_INTERVALS = GRID_SIZE + 2 * SPLINE_ORDER             # 11 degree-0 indicator intervals
_KNOTS = tuple(GRID_RANGE[0] + (t - SPLINE_ORDER) * _H
               for t in range(GRID_SIZE + 2 * SPLINE_ORDER + 1))   # (reference only)

# Max lane tile over N = B*C (multiple of 128).  Large tiles amortize the ~0.35 us
# per-grid-step pipeline overhead; the working set per tile is tiny at these L.
MAX_TILE_N = 4096


# -----------------------------------------------------------------------------
# In-kernel helpers
# -----------------------------------------------------------------------------
def _silu(x):
    # SiLU via tanh: x*sigmoid(x) = 0.5*x*(1 + tanh(x/2)).  tanh goes to the EUP slot,
    # so no divide/Newton sequence lands on the saturated VALU.
    half_x = 0.5 * x
    return half_x * jnp.tanh(half_x) + half_x


def _fill_kan_features(x, feat_ref, lp):
    """x: (lp, TN) f32 with lp a multiple of 8.  Writes the fused KAN feature map
    [SiLU(x); B_0(x); ...; B_7(x)] as 9 aligned full row blocks of height lp into
    feat_ref[0:9*lp, :]."""
    feat_ref[0:lp, :] = _silu(x)

    # Uniform-grid Cox-de-Boor.  u = (x - knot_0)/h, so knot_t corresponds to u == t;
    # all denominators fold into the constant 1/k and the recursion is pure VPU mul/add.
    u = x * _INV_H + _U_OFFSET
    cell = jnp.floor(u)
    b = [jnp.where(cell == float(t), 1.0, 0.0) for t in range(_NUM_INTERVALS)]
    for k in range(1, SPLINE_ORDER + 1):
        inv_k = 1.0 / k
        if k == 1:
            lf = [u - float(t) for t in range(len(b))]
        else:
            lf = [(u - float(t)) * inv_k for t in range(len(b))]
        # right factor = 1 - lf[t+1]  (uniform-grid identity)
        b = [lf[t] * b[t] + (1.0 - lf[t + 1]) * b[t + 1] for t in range(len(b) - 1)]
    # len(b) == NUM_BASES
    for s in range(NUM_BASES):
        feat_ref[(s + 1) * lp:(s + 2) * lp, :] = b[s]


def _make_fused_kernel(lps):
    """Fused kernel over ALL mixing layers for one N-tile.
    refs = (x_0..x_M, W1_0, W2_0, ..., W1_{M-1}, W2_{M-1}, out_1..out_M, feat_scratch)."""
    n_scales = len(lps)
    n_layers = n_scales - 1
    n_blocks = NUM_BASES + 1

    def kernel(*refs):
        x_refs = refs[:n_scales]
        w_refs = refs[n_scales:n_scales + 2 * n_layers]
        out_refs = refs[n_scales + 2 * n_layers:n_scales + 3 * n_layers]
        feat_ref = refs[n_scales + 3 * n_layers]

        h = x_refs[0][...].astype(jnp.float32)
        for li in range(n_layers):
            lp_in, lp_out = lps[li], lps[li + 1]
            # KANLinear #1 (L_hi -> L_lo): one fused MXU matmul.
            _fill_kan_features(h, feat_ref, lp_in)
            t = jnp.dot(w_refs[2 * li][...], feat_ref[0:n_blocks * lp_in, :],
                        preferred_element_type=jnp.float32)
            # KANLinear #2 (L_lo -> L_lo): intermediate never leaves VMEM.
            _fill_kan_features(t, feat_ref, lp_out)
            y = jnp.dot(w_refs[2 * li + 1][...], feat_ref[0:n_blocks * lp_out, :],
                        preferred_element_type=jnp.float32)
            # Residual with season_list[li+1]; carry to next layer in VMEM/vregs.
            h = x_refs[li + 1][...].astype(jnp.float32) + y
            out_refs[li][...] = h.astype(out_refs[li].dtype)

    return kernel


# -----------------------------------------------------------------------------
# Wrapper helpers
# -----------------------------------------------------------------------------
def _round_up(v, m):
    return ((v + m - 1) // m) * m


def _choose_tiling(n):
    """Pick lane tile (multiple of 128).  Large tiles amortize per-step overhead;
    for big N keep >= 2 grid steps so ("parallel",) shards over v7x's 2 TensorCores."""
    n128 = _round_up(n, 128)
    if n128 <= 256:
        return n128, n128                      # too small to split usefully
    half = max(128, (n128 // 2 // 128) * 128)  # ~half of N, multiple of 128
    tile_n = min(MAX_TILE_N, half)
    n_pad = _round_up(n, tile_n)
    return tile_n, n_pad


def _vmem_limit_bytes(lps, packed, tile_n):
    io_rows = sum(lps) + sum(lps[1:])                       # input + output block rows
    scratch_rows = (NUM_BASES + 1) * max(lps)
    est = 4 * tile_n * (2 * io_rows + scratch_rows)         # double-buffered I/O + scratch
    est += 2 * sum(int(np.prod(w.shape)) * 4 for w in packed)
    est += 4 << 20                                          # temporaries / headroom
    return int(min(64 << 20, max(32 << 20, 2 * est)))


def pack_kanlinear(params, lp_in, lp_out):
    """Pack one KANLinear into a fused matrix (lp_out, 9*lp_in).  Block b's columns
    [b*lp_in, b*lp_in+in_f) multiply feature block b (b=0: SiLU(x), b>=1: basis
    B_{b-1}(x)); padding rows/columns are zero so 8-aligned padded features are safe."""
    base_w = params["base_w"]
    out_f, in_f = base_w.shape
    scaled = params["spline_w"] * params["spline_scaler"][:, :, None]   # (OUT, IN, S)
    w = jnp.zeros((lp_out, (NUM_BASES + 1) * lp_in), dtype=jnp.float32)
    w = w.at[:out_f, :in_f].set(base_w)
    for s in range(NUM_BASES):
        c0 = (s + 1) * lp_in
        w = w.at[:out_f, c0:c0 + in_f].set(scaled[:, :, s])
    return w


# -----------------------------------------------------------------------------
# MultiScaleSeasonMixing forward (bottom-up season mixing), single fused pallas_call
# -----------------------------------------------------------------------------
def multi_scale_season_mixing(season_list, layer_params):
    B, C, _ = season_list[0].shape
    n = B * C
    dtype = season_list[0].dtype
    lengths = [int(s.shape[-1]) for s in season_list]
    lps = [_round_up(L, 8) for L in lengths]               # 8-sublane aligned L
    n_scales = len(season_list)
    n_layers = n_scales - 1
    assert len(layer_params) == n_layers

    tile_n, n_pad = _choose_tiling(n)

    # Lane-dense transposed layout, sublane-padded: (Lp_i, n_pad) with N on lanes.
    xs = []
    for s, L, lp in zip(season_list, lengths, lps):
        xt = jnp.transpose(s.reshape(n, L)).astype(jnp.float32)
        xs.append(jnp.pad(xt, ((0, lp - L), (0, n_pad - n))))

    # Fused, 8-sublane-aligned packed weights (resident across the grid).
    packed = []
    for li, p in enumerate(layer_params):
        packed.append(pack_kanlinear(p["kan1"], lps[li], lps[li + 1]))
        packed.append(pack_kanlinear(p["kan2"], lps[li + 1], lps[li + 1]))

    grid = (n_pad // tile_n,)
    in_specs = ([pl.BlockSpec((lp, tile_n), lambda i: (0, i)) for lp in lps]
                + [pl.BlockSpec(w.shape, lambda i: (0, 0)) for w in packed])
    out_specs = tuple(pl.BlockSpec((lps[li + 1], tile_n), lambda i: (0, i))
                      for li in range(n_layers))
    out_shape = tuple(jax.ShapeDtypeStruct((lps[li + 1], n_pad), jnp.float32)
                      for li in range(n_layers))

    outs = pl.pallas_call(
        _make_fused_kernel(lps),
        grid=grid,
        in_specs=in_specs,
        out_specs=out_specs,
        out_shape=out_shape,
        scratch_shapes=[pltpu.VMEM(((NUM_BASES + 1) * max(lps), tile_n), jnp.float32)],
        compiler_params=pltpu.CompilerParams(
            dimension_semantics=("parallel",),
            vmem_limit_bytes=_vmem_limit_bytes(lps, packed, tile_n)),
    )(*xs, *packed)

    # Back to the module's (B, C, L) layout; first entry is the unmodified input.
    results = [season_list[0]]
    for li in range(n_layers):
        o = outs[li][:lengths[li + 1], :n]
        results.append(jnp.transpose(o).reshape(B, C, -1).astype(dtype))
    return results


# -----------------------------------------------------------------------------
# Deterministic parameter init (raw KANLinear parameters)
# -----------------------------------------------------------------------------
def init_kanlinear(key, in_features, out_features):
    k1, k2, k3 = jax.random.split(key, 3)
    scale = 1.0 / np.sqrt(in_features)
    base_w = jax.random.uniform(k1, (out_features, in_features),
                                minval=-1.0, maxval=1.0, dtype=jnp.float32) * scale
    spline_w = jax.random.uniform(k2, (out_features, in_features, NUM_BASES),
                                  minval=-1.0, maxval=1.0, dtype=jnp.float32) * 0.1
    spline_scaler = jax.random.uniform(k3, (out_features, in_features),
                                       minval=-1.0, maxval=1.0, dtype=jnp.float32) * scale
    return {"base_w": base_w, "spline_w": spline_w, "spline_scaler": spline_scaler}


# -----------------------------------------------------------------------------
# Pure-JAX reference (general Cox-de-Boor with explicit knots) for validation
# -----------------------------------------------------------------------------
def kanlinear_ref(params, x):
    B, C, L = x.shape
    x2 = x.reshape(B * C, L)
    acc = (x2 / (1.0 + jnp.exp(-x2))) @ params["base_w"].T

    g = jnp.asarray(_KNOTS, dtype=jnp.float32)
    xg = x2[:, :, None]
    gb = g[None, None, :]
    bases = jnp.logical_and(xg >= gb[:, :, :-1], xg < gb[:, :, 1:]).astype(jnp.float32)
    for k in range(1, SPLINE_ORDER + 1):
        left = ((xg - gb[:, :, :-(k + 1)])
                / (gb[:, :, k:-1] - gb[:, :, :-(k + 1)])) * bases[:, :, :-1]
        right = ((gb[:, :, k + 1:] - xg)
                 / (gb[:, :, k + 1:] - gb[:, :, 1:-k])) * bases[:, :, 1:]
        bases = left + right
    scaled = params["spline_w"] * params["spline_scaler"][:, :, None]   # (OUT, IN, S)
    acc = acc + jnp.einsum("nis,ois->no", bases, scaled)
    return acc.reshape(B, C, -1)


def multi_scale_season_mixing_ref(season_list, layer_params):
    out_high = season_list[0]
    out_low = season_list[1]
    outs = [out_high]
    for i in range(len(season_list) - 1):
        p = layer_params[i]
        out_low_res = kanlinear_ref(p["kan2"], kanlinear_ref(p["kan1"], out_high))
        out_low = out_low + out_low_res
        out_high = out_low
        if i + 2 <= len(season_list) - 1:
            out_low = season_list[i + 2]
        outs.append(out_high)
    return outs


# -----------------------------------------------------------------------------
if __name__ == "__main__":
    key = jax.random.PRNGKey(0)

    # configs: seq_len=8, down_sampling_window=2, down_sampling_layers=2
    B, C = 2, 4
    seq_len, window, n_down = 8, 2, 2
    lengths = [seq_len // (window ** i) for i in range(n_down + 1)]   # [8, 4, 2]

    keys = jax.random.split(key, len(lengths) + 2 * n_down)

    season_list = [
        jax.random.normal(keys[i], (B, C, L), dtype=jnp.float32) * 0.5
        for i, L in enumerate(lengths)
    ]

    layer_params = []
    for i in range(n_down):
        p1 = init_kanlinear(keys[len(lengths) + 2 * i], lengths[i], lengths[i + 1])
        p2 = init_kanlinear(keys[len(lengths) + 2 * i + 1], lengths[i + 1], lengths[i + 1])
        layer_params.append({"kan1": p1, "kan2": p2})

    out_list = multi_scale_season_mixing(season_list, layer_params)
    out_list = [jax.block_until_ready(o) for o in out_list]

    ref_list = multi_scale_season_mixing_ref(season_list, layer_params)
    for o, r in zip(out_list, ref_list):
        assert o.shape == r.shape
        np.testing.assert_allclose(np.asarray(o), np.asarray(r), rtol=1e-4, atol=1e-4)
        assert np.all(np.isfinite(np.asarray(o)))

    print("KERNEL_OK")
</pallas_src>

<mosaic_0001>
module attributes {stable_mosaic.version = 11 : i64} {
  func.func @kernel(%arg0: i32, %arg1: memref<8x128xf32, #tpu.memory_space<vmem>>, %arg2: memref<8x128xf32, #tpu.memory_space<vmem>>, %arg3: memref<8x128xf32, #tpu.memory_space<vmem>>, %arg4: memref<8x72xf32, #tpu.memory_space<vmem>>, %arg5: memref<8x72xf32, #tpu.memory_space<vmem>>, %arg6: memref<8x72xf32, #tpu.memory_space<vmem>>, %arg7: memref<8x72xf32, #tpu.memory_space<vmem>>, %arg8: memref<8x128xf32, #tpu.memory_space<vmem>>, %arg9: memref<8x128xf32, #tpu.memory_space<vmem>>, %arg10: memref<72x128xf32, #tpu.memory_space<vmem>>) attributes {dimension_semantics = [#tpu.dimension_semantics<parallel>], iteration_bounds = array<i64: 1>, scalar_prefetch = 0 : i64, scratch_operands = 1 : i64, tpu.core_type = #tpu.core_type<tc>, window_params = [{transform_indices = @transform_0, window_bounds = array<i64: 8, 128>}, {transform_indices = @transform_1, window_bounds = array<i64: 8, 128>}, {transform_indices = @transform_2, window_bounds = array<i64: 8, 128>}, {pipeline_mode = #tpu.pipeline_mode<synchronous>, transform_indices = @transform_3, window_bounds = array<i64: 8, 72>}, {pipeline_mode = #tpu.pipeline_mode<synchronous>, transform_indices = @transform_4, window_bounds = array<i64: 8, 72>}, {pipeline_mode = #tpu.pipeline_mode<synchronous>, transform_indices = @transform_5, window_bounds = array<i64: 8, 72>}, {pipeline_mode = #tpu.pipeline_mode<synchronous>, transform_indices = @transform_6, window_bounds = array<i64: 8, 72>}, {transform_indices = @transform_7, window_bounds = array<i64: 8, 128>}, {transform_indices = @transform_8, window_bounds = array<i64: 8, 128>}]} {
    %c0 = arith.constant 0 : index
    %c0_0 = arith.constant 0 : index
    %0 = vector.load %arg1[%c0, %c0_0] : memref<8x128xf32, #tpu.memory_space<vmem>>, vector<8x128xf32>
    %cst = arith.constant 5.000000e-01 : f32
    %1 = vector.broadcast %cst : f32 to vector<8x128xf32>
    %2 = arith.mulf %1, %0 : vector<8x128xf32>
    %3 = math.tanh %2 : vector<8x128xf32>
    %4 = arith.mulf %2, %3 : vector<8x128xf32>
    %5 = arith.addf %4, %2 : vector<8x128xf32>
    %c0_1 = arith.constant 0 : index
    %c0_2 = arith.constant 0 : index
    %6 = vector.load %arg10[%c0_1, %c0_2] : memref<72x128xf32, #tpu.memory_space<vmem>>, vector<8x128xf32>
    tpu.vector_store %arg10[%c0_1, %c0_2], %5 {strides = array<i32>} : memref<72x128xf32, #tpu.memory_space<vmem>>, vector<8x128xf32>,
    %cst_3 = arith.constant 2.500000e+00 : f32
    %7 = vector.broadcast %cst_3 : f32 to vector<8x128xf32>
    %8 = arith.mulf %0, %7 : vector<8x128xf32>
    %cst_4 = arith.constant 5.500000e+00 : f32
    %9 = vector.broadcast %cst_4 : f32 to vector<8x128xf32>
    %10 = arith.addf %8, %9 : vector<8x128xf32>
    %11 = math.floor %10 : vector<8x128xf32>
    %cst_5 = arith.constant 0.000000e+00 : f32
    %12 = vector.broadcast %cst_5 : f32 to vector<8x128xf32>
    %13 = arith.cmpf oeq, %11, %12 : vector<8x128xf32>
    %cst_6 = arith.constant 1.000000e+00 : f32
    %cst_7 = arith.constant 0.000000e+00 : f32
    %14 = vector.broadcast %cst_6 : f32 to vector<8x128xf32>
    %15 = vector.broadcast %cst_7 : f32 to vector<8x128xf32>
    %16 = arith.select %13, %14, %15 : vector<8x128xi1>, vector<8x128xf32>
    %cst_8 = arith.constant 1.000000e+00 : f32
    %17 = vector.broadcast %cst_8 : f32 to vector<8x128xf32>
    %18 = arith.cmpf oeq, %11, %17 : vector<8x128xf32>
    %cst_9 = arith.constant 1.000000e+00 : f32
    %cst_10 = arith.constant 0.000000e+00 : f32
    %19 = vector.broadcast %cst_9 : f32 to vector<8x128xf32>
    %20 = vector.broadcast %cst_10 : f32 to vector<8x128xf32>
    %21 = arith.select %18, %19, %20 : vector<8x128xi1>, vector<8x128xf32>
    %cst_11 = arith.constant 2.000000e+00 : f32
    %22 = vector.broadcast %cst_11 : f32 to vector<8x128xf32>
    %23 = arith.cmpf oeq, %11, %22 : vector<8x128xf32>
    %cst_12 = arith.constant 1.000000e+00 : f32
    %cst_13 = arith.constant 0.000000e+00 : f32
    %24 = vector.broadcast %cst_12 : f32 to vector<8x128xf32>
    %25 = vector.broadcast %cst_13 : f32 to vector<8x128xf32>
    %26 = arith.select %23, %24, %25 : vector<8x128xi1>, vector<8x128xf32>
    %cst_14 = arith.constant 3.000000e+00 : f32
    %27 = vector.broadcast %cst_14 : f32 to vector<8x128xf32>
    %28 = arith.cmpf oeq, %11, %27 : vector<8x128xf32>
    %cst_15 = arith.constant 1.000000e+00 : f32
    %cst_16 = arith.constant 0.000000e+00 : f32
    %29 = vector.broadcast %cst_15 : f32 to vector<8x128xf32>
    %30 = vector.broadcast %cst_16 : f32 to vector<8x128xf32>
    %31 = arith.select %28, %29, %30 : vector<8x128xi1>, vector<8x128xf32>
    %cst_17 = arith.constant 4.000000e+00 : f32
    %32 = vector.broadcast %cst_17 : f32 to vector<8x128xf32>
    %33 = arith.cmpf oeq, %11, %32 : vector<8x128xf32>
    %cst_18 = arith.constant 1.000000e+00 : f32
    %cst_19 = arith.constant 0.000000e+00 : f32
    %34 = vector.broadcast %cst_18 : f32 to vector<8x128xf32>
    %35 = vector.broadcast %cst_19 : f32 to vector<8x128xf32>
    %36 = arith.select %33, %34, %35 : vector<8x128xi1>, vector<8x128xf32>
    %cst_20 = arith.constant 5.000000e+00 : f32
    %37 = vector.broadcast %cst_20 : f32 to vector<8x128xf32>
    %38 = arith.cmpf oeq, %11, %37 : vector<8x128xf32>
    %cst_21 = arith.constant 1.000000e+00 : f32
    %cst_22 = arith.constant 0.000000e+00 : f32
    %39 = vector.broadcast %cst_21 : f32 to vector<8x128xf32>
    %40 = vector.broadcast %cst_22 : f32 to vector<8x128xf32>
    %41 = arith.select %38, %39, %40 : vector<8x128xi1>, vector<8x128xf32>
    %cst_23 = arith.constant 6.000000e+00 : f32
    %42 = vector.broadcast %cst_23 : f32 to vector<8x128xf32>
    %43 = arith.cmpf oeq, %11, %42 : vector<8x128xf32>
    %cst_24 = arith.constant 1.000000e+00 : f32
    %cst_25 = arith.constant 0.000000e+00 : f32
    %44 = vector.broadcast %cst_24 : f32 to vector<8x128xf32>
    %45 = vector.broadcast %cst_25 : f32 to vector<8x128xf32>
    %46 = arith.select %43, %44, %45 : vector<8x128xi1>, vector<8x128xf32>
    %cst_26 = arith.constant 7.000000e+00 : f32
    %47 = vector.broadcast %cst_26 : f32 to vector<8x128xf32>
    %48 = arith.cmpf oeq, %11, %47 : vector<8x128xf32>
    %cst_27 = arith.constant 1.000000e+00 : f32
    %cst_28 = arith.constant 0.000000e+00 : f32
    %49 = vector.broadcast %cst_27 : f32 to vector<8x128xf32>
    %50 = vector.broadcast %cst_28 : f32 to vector<8x128xf32>
    %51 = arith.select %48, %49, %50 : vector<8x128xi1>, vector<8x128xf32>
    %cst_29 = arith.constant 8.000000e+00 : f32
    %52 = vector.broadcast %cst_29 : f32 to vector<8x128xf32>
    %53 = arith.cmpf oeq, %11, %52 : vector<8x128xf32>
    %cst_30 = arith.constant 1.000000e+00 : f32
    %cst_31 = arith.constant 0.000000e+00 : f32
    %54 = vector.broadcast %cst_30 : f32 to vector<8x128xf32>
    %55 = vector.broadcast %cst_31 : f32 to vector<8x128xf32>
    %56 = arith.select %53, %54, %55 : vector<8x128xi1>, vector<8x128xf32>
    %cst_32 = arith.constant 9.000000e+00 : f32
    %57 = vector.broadcast %cst_32 : f32 to vector<8x128xf32>
    %58 = arith.cmpf oeq, %11, %57 : vector<8x128xf32>
    %cst_33 = arith.constant 1.000000e+00 : f32
    %cst_34 = arith.constant 0.000000e+00 : f32
    %59 = vector.broadcast %cst_33 : f32 to vector<8x128xf32>
    %60 = vector.broadcast %cst_34 : f32 to vector<8x128xf32>
    %61 = arith.select %58, %59, %60 : vector<8x128xi1>, vector<8x128xf32>
    %cst_35 = arith.constant 1.000000e+01 : f32
    %62 = vector.broadcast %cst_35 : f32 to vector<8x128xf32>
    %63 = arith.cmpf oeq, %11, %62 : vector<8x128xf32>
    %cst_36 = arith.constant 1.000000e+00 : f32
    %cst_37 = arith.constant 0.000000e+00 : f32
    %64 = vector.broadcast %cst_36 : f32 to vector<8x128xf32>
    %65 = vector.broadcast %cst_37 : f32 to vector<8x128xf32>
    %66 = arith.select %63, %64, %65 : vector<8x128xi1>, vector<8x128xf32>
    %cst_38 = arith.constant 0.000000e+00 : f32
    %67 = vector.broadcast %cst_38 : f32 to vector<8x128xf32>
    %68 = arith.subf %10, %67 : vector<8x128xf32>
    %cst_39 = arith.constant 1.000000e+00 : f32
    %69 = vector.broadcast %cst_39 : f32 to vector<8x128xf32>
    %70 = arith.subf %10, %69 : vector<8x128xf32>
    %cst_40 = arith.constant 2.000000e+00 : f32
    %71 = vector.broadcast %cst_40 : f32 to vector<8x128xf32>
    %72 = arith.subf %10, %71 : vector<8x128xf32>
    %cst_41 = arith.constant 3.000000e+00 : f32
    %73 = vector.broadcast %cst_41 : f32 to vector<8x128xf32>
    %74 = arith.subf %10, %73 : vector<8x128xf32>
    %cst_42 = arith.constant 4.000000e+00 : f32
    %75 = vector.broadcast %cst_42 : f32 to vector<8x128xf32>
    %76 = arith.subf %10, %75 : vector<8x128xf32>
    %cst_43 = arith.constant 5.000000e+00 : f32
    %77 = vector.broadcast %cst_43 : f32 to vector<8x128xf32>
    %78 = arith.subf %10, %77 : vector<8x128xf32>
    %cst_44 = arith.constant 6.000000e+00 : f32
    %79 = vector.broadcast %cst_44 : f32 to vector<8x128xf32>
    %80 = arith.subf %10, %79 : vector<8x128xf32>
    %cst_45 = arith.constant 7.000000e+00 : f32
    %81 = vector.broadcast %cst_45 : f32 to vector<8x128xf32>
    %82 = arith.subf %10, %81 : vector<8x128xf32>
    %cst_46 = arith.constant 8.000000e+00 : f32
    %83 = vector.broadcast %cst_46 : f32 to vector<8x128xf32>
    %84 = arith.subf %10, %83 : vector<8x128xf32>
    %cst_47 = arith.constant 9.000000e+00 : f32
    %85 = vector.broadcast %cst_47 : f32 to vector<8x128xf32>
    %86 = arith.subf %10, %85 : vector<8x128xf32>
    %cst_48 = arith.constant 1.000000e+01 : f32
    %87 = vector.broadcast %cst_48 : f32 to vector<8x128xf32>
    %88 = arith.subf %10, %87 : vector<8x128xf32>
    %89 = arith.mulf %68, %16 : vector<8x128xf32>
    %cst_49 = arith.constant 1.000000e+00 : f32
    %90 = vector.broadcast %cst_49 : f32 to vector<8x128xf32>
    %91 = arith.subf %90, %70 : vector<8x128xf32>
    %92 = arith.mulf %91, %21 : vector<8x128xf32>
    %93 = arith.addf %89, %92 : vector<8x128xf32>
    %94 = arith.mulf %70, %21 : vector<8x128xf32>
    %cst_50 = arith.constant 1.000000e+00 : f32
    %95 = vector.broadcast %cst_50 : f32 to vector<8x128xf32>
    %96 = arith.subf %95, %72 : vector<8x128xf32>
    %97 = arith.mulf %96, %26 : vector<8x128xf32>
    %98 = arith.addf %94, %97 : vector<8x128xf32>
    %99 = arith.mulf %72, %26 : vector<8x128xf32>
    %cst_51 = arith.constant 1.000000e+00 : f32
    %100 = vector.broadcast %cst_51 : f32 to vector<8x128xf32>
    %101 = arith.subf %100, %74 : vector<8x128xf32>
    %102 = arith.mulf %101, %31 : vector<8x128xf32>
    %103 = arith.addf %99, %102 : vector<8x128xf32>
    %104 = arith.mulf %74, %31 : vector<8x128xf32>
    %cst_52 = arith.constant 1.000000e+00 : f32
    %105 = vector.broadcast %cst_52 : f32 to vector<8x128xf32>
    %106 = arith.subf %105, %76 : vector<8x128xf32>
    %107 = arith.mulf %106, %36 : vector<8x128xf32>
    %108 = arith.addf %104, %107 : vector<8x128xf32>
    %109 = arith.mulf %76, %36 : vector<8x128xf32>
    %cst_53 = arith.constant 1.000000e+00 : f32
    %110 = vector.broadcast %cst_53 : f32 to vector<8x128xf32>
    %111 = arith.subf %110, %78 : vector<8x128xf32>
    %112 = arith.mulf %111, %41 : vector<8x128xf32>
    %113 = arith.addf %109, %112 : vector<8x128xf32>
    %114 = arith.mulf %78, %41 : vector<8x128xf32>
    %cst_54 = arith.constant 1.000000e+00 : f32
    %115 = vector.broadcast %cst_54 : f32 to vector<8x128xf32>
    %116 = arith.subf %115, %80 : vector<8x128xf32>
    %117 = arith.mulf %116, %46 : vector<8x128xf32>
    %118 = arith.addf %114, %117 : vector<8x128xf32>
    %119 = arith.mulf %80, %46 : vector<8x128xf32>
    %cst_55 = arith.constant 1.000000e+00 : f32
    %120 = vector.broadcast %cst_55 : f32 to vector<8x128xf32>
    %121 = arith.subf %120, %82 : vector<8x128xf32>
    %122 = arith.mulf %121, %51 : vector<8x128xf32>
    %123 = arith.addf %119, %122 : vector<8x128xf32>
    %124 = arith.mulf %82, %51 : vector<8x128xf32>
    %cst_56 = arith.constant 1.000000e+00 : f32
    %125 = vector.broadcast %cst_56 : f32 to vector<8x128xf32>
    %126 = arith.subf %125, %84 : vector<8x128xf32>
    %127 = arith.mulf %126, %56 : vector<8x128xf32>
    %128 = arith.addf %124, %127 : vector<8x128xf32>
    %129 = arith.mulf %84, %56 : vector<8x128xf32>
    %cst_57 = arith.constant 1.000000e+00 : f32
    %130 = vector.broadcast %cst_57 : f32 to vector<8x128xf32>
    %131 = arith.subf %130, %86 : vector<8x128xf32>
    %132 = arith.mulf %131, %61 : vector<8x128xf32>
    %133 = arith.addf %129, %132 : vector<8x128xf32>
    %134 = arith.mulf %86, %61 : vector<8x128xf32>
    %cst_58 = arith.constant 1.000000e+00 : f32
    %135 = vector.broadcast %cst_58 : f32 to vector<8x128xf32>
    %136 = arith.subf %135, %88 : vector<8x128xf32>
    %137 = arith.mulf %136, %66 : vector<8x128xf32>
    %138 = arith.addf %134, %137 : vector<8x128xf32>
    %cst_59 = arith.constant 0.000000e+00 : f32
    %139 = vector.broadcast %cst_59 : f32 to vector<8x128xf32>
    %140 = arith.subf %10, %139 : vector<8x128xf32>
    %cst_60 = arith.constant 5.000000e-01 : f32
    %141 = vector.broadcast %cst_60 : f32 to vector<8x128xf32>
    %142 = arith.mulf %140, %141 : vector<8x128xf32>
    %cst_61 = arith.constant 1.000000e+00 : f32
    %143 = vector.broadcast %cst_61 : f32 to vector<8x128xf32>
    %144 = arith.subf %10, %143 : vector<8x128xf32>
    %cst_62 = arith.constant 5.000000e-01 : f32
    %145 = vector.broadcast %cst_62 : f32 to vector<8x128xf32>
    %146 = arith.mulf %144, %145 : vector<8x128xf32>
    %cst_63 = arith.constant 2.000000e+00 : f32
    %147 = vector.broadcast %cst_63 : f32 to vector<8x128xf32>
    %148 = arith.subf %10, %147 : vector<8x128xf32>
    %cst_64 = arith.constant 5.000000e-01 : f32
    %149 = vector.broadcast %cst_64 : f32 to vector<8x128xf32>
    %150 = arith.mulf %148, %149 : vector<8x128xf32>
    %cst_65 = arith.constant 3.000000e+00 : f32
    %151 = vector.broadcast %cst_65 : f32 to vector<8x128xf32>
    %152 = arith.subf %10, %151 : vector<8x128xf32>
    %cst_66 = arith.constant 5.000000e-01 : f32
    %153 = vector.broadcast %cst_66 : f32 to vector<8x128xf32>
    %154 = arith.mulf %152, %153 : vector<8x128xf32>
    %cst_67 = arith.constant 4.000000e+00 : f32
    %155 = vector.broadcast %cst_67 : f32 to vector<8x128xf32>
    %156 = arith.subf %10, %155 : vector<8x128xf32>
    %cst_68 = arith.constant 5.000000e-01 : f32
    %157 = vector.broadcast %cst_68 : f32 to vector<8x128xf32>
    %158 = arith.mulf %156, %157 : vector<8x128xf32>
    %cst_69 = arith.constant 5.000000e+00 : f32
    %159 = vector.broadcast %cst_69 : f32 to vector<8x128xf32>
    %160 = arith.subf %10, %159 : vector<8x128xf32>
    %cst_70 = arith.constant 5.000000e-01 : f32
    %161 = vector.broadcast %cst_70 : f32 to vector<8x128xf32>
    %162 = arith.mulf %160, %161 : vector<8x128xf32>
    %cst_71 = arith.constant 6.000000e+00 : f32
    %163 = vector.broadcast %cst_71 : f32 to vector<8x128xf32>
    %164 = arith.subf %10, %163 : vector<8x128xf32>
    %cst_72 = arith.constant 5.000000e-01 : f32
    %165 = vector.broadcast %cst_72 : f32 to vector<8x128xf32>
    %166 = arith.mulf %164, %165 : vector<8x128xf32>
    %cst_73 = arith.constant 7.000000e+00 : f32
    %167 = vector.broadcast %cst_73 : f32 to vector<8x128xf32>
    %168 = arith.subf %10, %167 : vector<8x128xf32>
    %cst_74 = arith.constant 5.000000e-01 : f32
    %169 = vector.broadcast %cst_74 : f32 to vector<8x128xf32>
    %170 = arith.mulf %168, %169 : vector<8x128xf32>
    %cst_75 = arith.constant 8.000000e+00 : f32
    %171 = vector.broadcast %cst_75 : f32 to vector<8x128xf32>
    %172 = arith.subf %10, %171 : vector<8x128xf32>
    %cst_76 = arith.constant 5.000000e-01 : f32
    %173 = vector.broadcast %cst_76 : f32 to vector<8x128xf32>
    %174 = arith.mulf %172, %173 : vector<8x128xf32>
    %cst_77 = arith.constant 9.000000e+00 : f32
    %175 = vector.broadcast %cst_77 : f32 to vector<8x128xf32>
    %176 = arith.subf %10, %175 : vector<8x128xf32>
    %cst_78 = arith.constant 5.000000e-01 : f32
    %177 = vector.broadcast %cst_78 : f32 to vector<8x128xf32>
    %178 = arith.mulf %176, %177 : vector<8x128xf32>
    %179 = arith.mulf %142, %93 : vector<8x128xf32>
    %cst_79 = arith.constant 1.000000e+00 : f32
    %180 = vector.broadcast %cst_79 : f32 to vector<8x128xf32>
    %181 = arith.subf %180, %146 : vector<8x128xf32>
    %182 = arith.mulf %181, %98 : vector<8x128xf32>
    %183 = arith.addf %179, %182 : vector<8x128xf32>
    %184 = arith.mulf %146, %98 : vector<8x128xf32>
    %cst_80 = arith.constant 1.000000e+00 : f32
    %185 = vector.broadcast %cst_80 : f32 to vector<8x128xf32>
    %186 = arith.subf %185, %150 : vector<8x128xf32>
    %187 = arith.mulf %186, %103 : vector<8x128xf32>
    %188 = arith.addf %184, %187 : vector<8x128xf32>
    %189 = arith.mulf %150, %103 : vector<8x128xf32>
    %cst_81 = arith.constant 1.000000e+00 : f32
    %190 = vector.broadcast %cst_81 : f32 to vector<8x128xf32>
    %191 = arith.subf %190, %154 : vector<8x128xf32>
    %192 = arith.mulf %191, %108 : vector<8x128xf32>
    %193 = arith.addf %189, %192 : vector<8x128xf32>
    %194 = arith.mulf %154, %108 : vector<8x128xf32>
    %cst_82 = arith.constant 1.000000e+00 : f32
    %195 = vector.broadcast %cst_82 : f32 to vector<8x128xf32>
    %196 = arith.subf %195, %158 : vector<8x128xf32>
    %197 = arith.mulf %196, %113 : vector<8x128xf32>
    %198 = arith.addf %194, %197 : vector<8x128xf32>
    %199 = arith.mulf %158, %113 : vector<8x128xf32>
    %cst_83 = arith.constant 1.000000e+00 : f32
    %200 = vector.broadcast %cst_83 : f32 to vector<8x128xf32>
    %201 = arith.subf %200, %162 : vector<8x128xf32>
    %202 = arith.mulf %201, %118 : vector<8x128xf32>
    %203 = arith.addf %199, %202 : vector<8x128xf32>
    %204 = arith.mulf %162, %118 : vector<8x128xf32>
    %cst_84 = arith.constant 1.000000e+00 : f32
    %205 = vector.broadcast %cst_84 : f32 to vector<8x128xf32>
    %206 = arith.subf %205, %166 : vector<8x128xf32>
    %207 = arith.mulf %206, %123 : vector<8x128xf32>
    %208 = arith.addf %204, %207 : vector<8x128xf32>
    %209 = arith.mulf %166, %123 : vector<8x128xf32>
    %cst_85 = arith.constant 1.000000e+00 : f32
    %210 = vector.broadcast %cst_85 : f32 to vector<8x128xf32>
    %211 = arith.subf %210, %170 : vector<8x128xf32>
    %212 = arith.mulf %211, %128 : vector<8x128xf32>
    %213 = arith.addf %209, %212 : vector<8x128xf32>
    %214 = arith.mulf %170, %128 : vector<8x128xf32>
    %cst_86 = arith.constant 1.000000e+00 : f32
    %215 = vector.broadcast %cst_86 : f32 to vector<8x128xf32>
    %216 = arith.subf %215, %174 : vector<8x128xf32>
    %217 = arith.mulf %216, %133 : vector<8x128xf32>
    %218 = arith.addf %214, %217 : vector<8x128xf32>
    %219 = arith.mulf %174, %133 : vector<8x128xf32>
    %cst_87 = arith.constant 1.000000e+00 : f32
    %220 = vector.broadcast %cst_87 : f32 to vector<8x128xf32>
    %221 = arith.subf %220, %178 : vector<8x128xf32>
    %222 = arith.mulf %221, %138 : vector<8x128xf32>
    %223 = arith.addf %219, %222 : vector<8x128xf32>
    %cst_88 = arith.constant 0.000000e+00 : f32
    %224 = vector.broadcast %cst_88 : f32 to vector<8x128xf32>
    %225 = arith.subf %10, %224 : vector<8x128xf32>
    %cst_89 = arith.constant 0.333333343 : f32
    %226 = vector.broadcast %cst_89 : f32 to vector<8x128xf32>
    %227 = arith.mulf %225, %226 : vector<8x128xf32>
    %cst_90 = arith.constant 1.000000e+00 : f32
    %228 = vector.broadcast %cst_90 : f32 to vector<8x128xf32>
    %229 = arith.subf %10, %228 : vector<8x128xf32>
    %cst_91 = arith.constant 0.333333343 : f32
    %230 = vector.broadcast %cst_91 : f32 to vector<8x128xf32>
    %231 = arith.mulf %229, %230 : vector<8x128xf32>
    %cst_92 = arith.constant 2.000000e+00 : f32
    %232 = vector.broadcast %cst_92 : f32 to vector<8x128xf32>
    %233 = arith.subf %10, %232 : vector<8x128xf32>
    %cst_93 = arith.constant 0.333333343 : f32
    %234 = vector.broadcast %cst_93 : f32 to vector<8x128xf32>
    %235 = arith.mulf %233, %234 : vector<8x128xf32>
    %cst_94 = arith.constant 3.000000e+00 : f32
    %236 = vector.broadcast %cst_94 : f32 to vector<8x128xf32>
    %237 = arith.subf %10, %236 : vector<8x128xf32>
    %cst_95 = arith.constant 0.333333343 : f32
    %238 = vector.broadcast %cst_95 : f32 to vector<8x128xf32>
    %239 = arith.mulf %237, %238 : vector<8x128xf32>
    %cst_96 = arith.constant 4.000000e+00 : f32
    %240 = vector.broadcast %cst_96 : f32 to vector<8x128xf32>
    %241 = arith.subf %10, %240 : vector<8x128xf32>
    %cst_97 = arith.constant 0.333333343 : f32
    %242 = vector.broadcast %cst_97 : f32 to vector<8x128xf32>
    %243 = arith.mulf %241, %242 : vector<8x128xf32>
    %cst_98 = arith.constant 5.000000e+00 : f32
    %244 = vector.broadcast %cst_98 : f32 to vector<8x128xf32>
    %245 = arith.subf %10, %244 : vector<8x128xf32>
    %cst_99 = arith.constant 0.333333343 : f32
    %246 = vector.broadcast %cst_99 : f32 to vector<8x128xf32>
    %247 = arith.mulf %245, %246 : vector<8x128xf32>
    %cst_100 = arith.constant 6.000000e+00 : f32
    %248 = vector.broadcast %cst_100 : f32 to vector<8x128xf32>
    %249 = arith.subf %10, %248 : vector<8x128xf32>
    %cst_101 = arith.constant 0.333333343 : f32
    %250 = vector.broadcast %cst_101 : f32 to vector<8x128xf32>
    %251 = arith.mulf %249, %250 : vector<8x128xf32>
    %cst_102 = arith.constant 7.000000e+00 : f32
    %252 = vector.broadcast %cst_102 : f32 to vector<8x128xf32>
    %253 = arith.subf %10, %252 : vector<8x128xf32>
    %cst_103 = arith.constant 0.333333343 : f32
    %254 = vector.broadcast %cst_103 : f32 to vector<8x128xf32>
    %255 = arith.mulf %253, %254 : vector<8x128xf32>
    %cst_104 = arith.constant 8.000000e+00 : f32
    %256 = vector.broadcast %cst_104 : f32 to vector<8x128xf32>
    %257 = arith.subf %10, %256 : vector<8x128xf32>
    %cst_105 = arith.constant 0.333333343 : f32
    %258 = vector.broadcast %cst_105 : f32 to vector<8x128xf32>
    %259 = arith.mulf %257, %258 : vector<8x128xf32>
    %260 = arith.mulf %227, %183 : vector<8x128xf32>
    %cst_106 = arith.constant 1.000000e+00 : f32
    %261 = vector.broadcast %cst_106 : f32 to vector<8x128xf32>
    %262 = arith.subf %261, %231 : vector<8x128xf32>
    %263 = arith.mulf %262, %188 : vector<8x128xf32>
    %264 = arith.addf %260, %263 : vector<8x128xf32>
    %265 = arith.mulf %231, %188 : vector<8x128xf32>
    %cst_107 = arith.constant 1.000000e+00 : f32
    %266 = vector.broadcast %cst_107 : f32 to vector<8x128xf32>
    %267 = arith.subf %266, %235 : vector<8x128xf32>
    %268 = arith.mulf %267, %193 : vector<8x128xf32>
    %269 = arith.addf %265, %268 : vector<8x128xf32>
    %270 = arith.mulf %235, %193 : vector<8x128xf32>
    %cst_108 = arith.constant 1.000000e+00 : f32
    %271 = vector.broadcast %cst_108 : f32 to vector<8x128xf32>
    %272 = arith.subf %271, %239 : vector<8x128xf32>
    %273 = arith.mulf %272, %198 : vector<8x128xf32>
    %274 = arith.addf %270, %273 : vector<8x128xf32>
    %275 = arith.mulf %239, %198 : vector<8x128xf32>
    %cst_109 = arith.constant 1.000000e+00 : f32
    %276 = vector.broadcast %cst_109 : f32 to vector<8x128xf32>
    %277 = arith.subf %276, %243 : vector<8x128xf32>
    %278 = arith.mulf %277, %203 : vector<8x128xf32>
    %279 = arith.addf %275, %278 : vector<8x128xf32>
    %280 = arith.mulf %243, %203 : vector<8x128xf32>
    %cst_110 = arith.constant 1.000000e+00 : f32
    %281 = vector.broadcast %cst_110 : f32 to vector<8x128xf32>
    %282 = arith.subf %281, %247 : vector<8x128xf32>
    %283 = arith.mulf %282, %208 : vector<8x128xf32>
    %284 = arith.addf %280, %283 : vector<8x128xf32>
    %285 = arith.mulf %247, %208 : vector<8x128xf32>
    %cst_111 = arith.constant 1.000000e+00 : f32
    %286 = vector.broadcast %cst_111 : f32 to vector<8x128xf32>
    %287 = arith.subf %286, %251 : vector<8x128xf32>
    %288 = arith.mulf %287, %213 : vector<8x128xf32>
    %289 = arith.addf %285, %288 : vector<8x128xf32>
    %290 = arith.mulf %251, %213 : vector<8x128xf32>
    %cst_112 = arith.constant 1.000000e+00 : f32
    %291 = vector.broadcast %cst_112 : f32 to vector<8x128xf32>
    %292 = arith.subf %291, %255 : vector<8x128xf32>
    %293 = arith.mulf %292, %218 : vector<8x128xf32>
    %294 = arith.addf %290, %293 : vector<8x128xf32>
    %295 = arith.mulf %255, %218 : vector<8x128xf32>
    %cst_113 = arith.constant 1.000000e+00 : f32
    %296 = vector.broadcast %cst_113 : f32 to vector<8x128xf32>
    %297 = arith.subf %296, %259 : vector<8x128xf32>
    %298 = arith.mulf %297, %223 : vector<8x128xf32>
    %299 = arith.addf %295, %298 : vector<8x128xf32>
    %c8 = arith.constant 8 : index
    %c0_114 = arith.constant 0 : index
    %300 = vector.load %arg10[%c8, %c0_114] : memref<72x128xf32, #tpu.memory_space<vmem>>, vector<8x128xf32>
    tpu.vector_store %arg10[%c8, %c0_114], %264 {strides = array<i32>} : memref<72x128xf32, #tpu.memory_space<vmem>>, vector<8x128xf32>,
    %c16 = arith.constant 16 : index
    %c0_115 = arith.constant 0 : index
    %301 = vector.load %arg10[%c16, %c0_115] : memref<72x128xf32, #tpu.memory_space<vmem>>, vector<8x128xf32>
    tpu.vector_store %arg10[%c16, %c0_115], %269 {strides = array<i32>} : memref<72x128xf32, #tpu.memory_space<vmem>>, vector<8x128xf32>,
    %c24 = arith.constant 24 : index
    %c0_116 = arith.constant 0 : index
    %302 = vector.load %arg10[%c24, %c0_116] : memref<72x128xf32, #tpu.memory_space<vmem>>, vector<8x128xf32>
    tpu.vector_store %arg10[%c24, %c0_116], %274 {strides = array<i32>} : memref<72x128xf32, #tpu.memory_space<vmem>>, vector<8x128xf32>,
    %c32 = arith.constant 32 : index
    %c0_117 = arith.constant 0 : index
    %303 = vector.load %arg10[%c32, %c0_117] : memref<72x128xf32, #tpu.memory_space<vmem>>, vector<8x128xf32>
    tpu.vector_store %arg10[%c32, %c0_117], %279 {strides = array<i32>} : memref<72x128xf32, #tpu.memory_space<vmem>>, vector<8x128xf32>,
    %c40 = arith.constant 40 : index
    %c0_118 = arith.constant 0 : index
    %304 = vector.load %arg10[%c40, %c0_118] : memref<72x128xf32, #tpu.memory_space<vmem>>, vector<8x128xf32>
    tpu.vector_store %arg10[%c40, %c0_118], %284 {strides = array<i32>} : memref<72x128xf32, #tpu.memory_space<vmem>>, vector<8x128xf32>,
    %c48 = arith.constant 48 : index
    %c0_119 = arith.constant 0 : index
    %305 = vector.load %arg10[%c48, %c0_119] : memref<72x128xf32, #tpu.memory_space<vmem>>, vector<8x128xf32>
    tpu.vector_store %arg10[%c48, %c0_119], %289 {strides = array<i32>} : memref<72x128xf32, #tpu.memory_space<vmem>>, vector<8x128xf32>,
    %c56 = arith.constant 56 : index
    %c0_120 = arith.constant 0 : index
    %306 = vector.load %arg10[%c56, %c0_120] : memref<72x128xf32, #tpu.memory_space<vmem>>, vector<8x128xf32>
    tpu.vector_store %arg10[%c56, %c0_120], %294 {strides = array<i32>} : memref<72x128xf32, #tpu.memory_space<vmem>>, vector<8x128xf32>,
    %c64 = arith.constant 64 : index
    %c0_121 = arith.constant 0 : index
    %307 = vector.load %arg10[%c64, %c0_121] : memref<72x128xf32, #tpu.memory_space<vmem>>, vector<8x128xf32>
    tpu.vector_store %arg10[%c64, %c0_121], %299 {strides = array<i32>} : memref<72x128xf32, #tpu.memory_space<vmem>>, vector<8x128xf32>,
    %c0_122 = arith.constant 0 : index
    %c0_123 = arith.constant 0 : index
    %308 = vector.load %arg4[%c0_122, %c0_123] : memref<8x72xf32, #tpu.memory_space<vmem>>, vector<8x72xf32>
    %c0_124 = arith.constant 0 : index
    %c0_125 = arith.constant 0 : index
    %309 = vector.load %arg10[%c0_124, %c0_125] : memref<72x128xf32, #tpu.memory_space<vmem>>, vector<72x128xf32>
    %cst_126 = arith.constant dense<0.000000e+00> : vector<8x128xf32>
    %310 = tpu.matmul %308, %309, %cst_126 {dimension_numbers = #tpu.dot_dimension_numbers<[1], [0], [0], [1], [0, 0, 1, 1], [], []>} : vector<8x72xf32>, vector<72x128xf32>, vector<8x128xf32> -> vector<8x128xf32>
    %cst_127 = arith.constant 5.000000e-01 : f32
    %311 = vector.broadcast %cst_127 : f32 to vector<8x128xf32>
    %312 = arith.mulf %311, %310 : vector<8x128xf32>
    %313 = math.tanh %312 : vector<8x128xf32>
    %314 = arith.mulf %312, %313 : vector<8x128xf32>
    %315 = arith.addf %314, %312 : vector<8x128xf32>
    %c0_128 = arith.constant 0 : index
    %c0_129 = arith.constant 0 : index
    %316 = vector.load %arg10[%c0_128, %c0_129] : memref<72x128xf32, #tpu.memory_space<vmem>>, vector<8x128xf32>
    tpu.vector_store %arg10[%c0_128, %c0_129], %315 {strides = array<i32>} : memref<72x128xf32, #tpu.memory_space<vmem>>, vector<8x128xf32>,
    %cst_130 = arith.constant 2.500000e+00 : f32
    %317 = vector.broadcast %cst_130 : f32 to vector<8x128xf32>
    %318 = arith.mulf %310, %317 : vector<8x128xf32>
    %cst_131 = arith.constant 5.500000e+00 : f32
    %319 = vector.broadcast %cst_131 : f32 to vector<8x128xf32>
    %320 = arith.addf %318, %319 : vector<8x128xf32>
    %321 = math.floor %320 : vector<8x128xf32>
    %cst_132 = arith.constant 0.000000e+00 : f32
    %322 = vector.broadcast %cst_132 : f32 to vector<8x128xf32>
    %323 = arith.cmpf oeq, %321, %322 : vector<8x128xf32>
    %cst_133 = arith.constant 1.000000e+00 : f32
    %cst_134 = arith.constant 0.000000e+00 : f32
    %324 = vector.broadcast %cst_133 : f32 to vector<8x128xf32>
    %325 = vector.broadcast %cst_134 : f32 to vector<8x128xf32>
    %326 = arith.select %323, %324, %325 : vector<8x128xi1>, vector<8x128xf32>
    %cst_135 = arith.constant 1.000000e+00 : f32
    %327 = vector.broadcast %cst_135 : f32 to vector<8x128xf32>
    %328 = arith.cmpf oeq, %321, %327 : vector<8x128xf32>
    %cst_136 = arith.constant 1.000000e+00 : f32
    %cst_137 = arith.constant 0.000000e+00 : f32
    %329 = vector.broadcast %cst_136 : f32 to vector<8x128xf32>
    %330 = vector.broadcast %cst_137 : f32 to vector<8x128xf32>
    %331 = arith.select %328, %329, %330 : vector<8x128xi1>, vector<8x128xf32>
    %cst_138 = arith.constant 2.000000e+00 : f32
    %332 = vector.broadcast %cst_138 : f32 to vector<8x128xf32>
    %333 = arith.cmpf oeq, %321, %332 : vector<8x128xf32>
    %cst_139 = arith.constant 1.000000e+00 : f32
    %cst_140 = arith.constant 0.000000e+00 : f32
    %334 = vector.broadcast %cst_139 : f32 to vector<8x128xf32>
    %335 = vector.broadcast %cst_140 : f32 to vector<8x128xf32>
    %336 = arith.select %333, %334, %335 : vector<8x128xi1>, vector<8x128xf32>
    %cst_141 = arith.constant 3.000000e+00 : f32
    %337 = vector.broadcast %cst_141 : f32 to vector<8x128xf32>
    %338 = arith.cmpf oeq, %321, %337 : vector<8x128xf32>
    %cst_142 = arith.constant 1.000000e+00 : f32
    %cst_143 = arith.constant 0.000000e+00 : f32
    %339 = vector.broadcast %cst_142 : f32 to vector<8x128xf32>
    %340 = vector.broadcast %cst_143 : f32 to vector<8x128xf32>
    %341 = arith.select %338, %339, %340 : vector<8x128xi1>, vector<8x128xf32>
    %cst_144 = arith.constant 4.000000e+00 : f32
    %342 = vector.broadcast %cst_144 : f32 to vector<8x128xf32>
    %343 = arith.cmpf oeq, %321, %342 : vector<8x128xf32>
    %cst_145 = arith.constant 1.000000e+00 : f32
    %cst_146 = arith.constant 0.000000e+00 : f32
    %344 = vector.broadcast %cst_145 : f32 to vector<8x128xf32>
    %345 = vector.broadcast %cst_146 : f32 to vector<8x128xf32>
    %346 = arith.select %343, %344, %345 : vector<8x128xi1>, vector<8x128xf32>
    %cst_147 = arith.constant 5.000000e+00 : f32
    %347 = vector.broadcast %cst_147 : f32 to vector<8x128xf32>
    %348 = arith.cmpf oeq, %321, %347 : vector<8x128xf32>
    %cst_148 = arith.constant 1.000000e+00 : f32
    %cst_149 = arith.constant 0.000000e+00 : f32
    %349 = vector.broadcast %cst_148 : f32 to vector<8x128xf32>
    %350 = vector.broadcast %cst_149 : f32 to vector<8x128xf32>
    %351 = arith.select %348, %349, %350 : vector<8x128xi1>, vector<8x128xf32>
    %cst_150 = arith.constant 6.000000e+00 : f32
    %352 = vector.broadcast %cst_150 : f32 to vector<8x128xf32>
    %353 = arith.cmpf oeq, %321, %352 : vector<8x128xf32>
    %cst_151 = arith.constant 1.000000e+00 : f32
    %cst_152 = arith.constant 0.000000e+00 : f32
    %354 = vector.broadcast %cst_151 : f32 to vector<8x128xf32>
    %355 = vector.broadcast %cst_152 : f32 to vector<8x128xf32>
    %356 = arith.select %353, %354, %355 : vector<8x128xi1>, vector<8x128xf32>
    %cst_153 = arith.constant 7.000000e+00 : f32
    %357 = vector.broadcast %cst_153 : f32 to vector<8x128xf32>
    %358 = arith.cmpf oeq, %321, %357 : vector<8x128xf32>
    %cst_154 = arith.constant 1.000000e+00 : f32
    %cst_155 = arith.constant 0.000000e+00 : f32
    %359 = vector.broadcast %cst_154 : f32 to vector<8x128xf32>
    %360 = vector.broadcast %cst_155 : f32 to vector<8x128xf32>
    %361 = arith.select %358, %359, %360 : vector<8x128xi1>, vector<8x128xf32>
    %cst_156 = arith.constant 8.000000e+00 : f32
    %362 = vector.broadcast %cst_156 : f32 to vector<8x128xf32>
    %363 = arith.cmpf oeq, %321, %362 : vector<8x128xf32>
    %cst_157 = arith.constant 1.000000e+00 : f32
    %cst_158 = arith.constant 0.000000e+00 : f32
    %364 = vector.broadcast %cst_157 : f32 to vector<8x128xf32>
    %365 = vector.broadcast %cst_158 : f32 to vector<8x128xf32>
    %366 = arith.select %363, %364, %365 : vector<8x128xi1>, vector<8x128xf32>
    %cst_159 = arith.constant 9.000000e+00 : f32
    %367 = vector.broadcast %cst_159 : f32 to vector<8x128xf32>
    %368 = arith.cmpf oeq, %321, %367 : vector<8x128xf32>
    %cst_160 = arith.constant 1.000000e+00 : f32
    %cst_161 = arith.constant 0.000000e+00 : f32
    %369 = vector.broadcast %cst_160 : f32 to vector<8x128xf32>
    %370 = vector.broadcast %cst_161 : f32 to vector<8x128xf32>
    %371 = arith.select %368, %369, %370 : vector<8x128xi1>, vector<8x128xf32>
    %cst_162 = arith.constant 1.000000e+01 : f32
    %372 = vector.broadcast %cst_162 : f32 to vector<8x128xf32>
    %373 = arith.cmpf oeq, %321, %372 : vector<8x128xf32>
    %cst_163 = arith.constant 1.000000e+00 : f32
    %cst_164 = arith.constant 0.000000e+00 : f32
    %374 = vector.broadcast %cst_163 : f32 to vector<8x128xf32>
    %375 = vector.broadcast %cst_164 : f32 to vector<8x128xf32>
    %376 = arith.select %373, %374, %375 : vector<8x128xi1>, vector<8x128xf32>
    %cst_165 = arith.constant 0.000000e+00 : f32
    %377 = vector.broadcast %cst_165 : f32 to vector<8x128xf32>
    %378 = arith.subf %320, %377 : vector<8x128xf32>
    %cst_166 = arith.constant 1.000000e+00 : f32
    %379 = vector.broadcast %cst_166 : f32 to vector<8x128xf32>
    %380 = arith.subf %320, %379 : vector<8x128xf32>
    %cst_167 = arith.constant 2.000000e+00 : f32
    %381 = vector.broadcast %cst_167 : f32 to vector<8x128xf32>
    %382 = arith.subf %320, %381 : vector<8x128xf32>
    %cst_168 = arith.constant 3.000000e+00 : f32
    %383 = vector.broadcast %cst_168 : f32 to vector<8x128xf32>
    %384 = arith.subf %320, %383 : vector<8x128xf32>
    %cst_169 = arith.constant 4.000000e+00 : f32
    %385 = vector.broadcast %cst_169 : f32 to vector<8x128xf32>
    %386 = arith.subf %320, %385 : vector<8x128xf32>
    %cst_170 = arith.constant 5.000000e+00 : f32
    %387 = vector.broadcast %cst_170 : f32 to vector<8x128xf32>
    %388 = arith.subf %320, %387 : vector<8x128xf32>
    %cst_171 = arith.constant 6.000000e+00 : f32
    %389 = vector.broadcast %cst_171 : f32 to vector<8x128xf32>
    %390 = arith.subf %320, %389 : vector<8x128xf32>
    %cst_172 = arith.constant 7.000000e+00 : f32
    %391 = vector.broadcast %cst_172 : f32 to vector<8x128xf32>
    %392 = arith.subf %320, %391 : vector<8x128xf32>
    %cst_173 = arith.constant 8.000000e+00 : f32
    %393 = vector.broadcast %cst_173 : f32 to vector<8x128xf32>
    %394 = arith.subf %320, %393 : vector<8x128xf32>
    %cst_174 = arith.constant 9.000000e+00 : f32
    %395 = vector.broadcast %cst_174 : f32 to vector<8x128xf32>
    %396 = arith.subf %320, %395 : vector<8x128xf32>
    %cst_175 = arith.constant 1.000000e+01 : f32
    %397 = vector.broadcast %cst_175 : f32 to vector<8x128xf32>
    %398 = arith.subf %320, %397 : vector<8x128xf32>
    %399 = arith.mulf %378, %326 : vector<8x128xf32>
    %cst_176 = arith.constant 1.000000e+00 : f32
    %400 = vector.broadcast %cst_176 : f32 to vector<8x128xf32>
    %401 = arith.subf %400, %380 : vector<8x128xf32>
    %402 = arith.mulf %401, %331 : vector<8x128xf32>
    %403 = arith.addf %399, %402 : vector<8x128xf32>
    %404 = arith.mulf %380, %331 : vector<8x128xf32>
    %cst_177 = arith.constant 1.000000e+00 : f32
    %405 = vector.broadcast %cst_177 : f32 to vector<8x128xf32>
    %406 = arith.subf %405, %382 : vector<8x128xf32>
    %407 = arith.mulf %406, %336 : vector<8x128xf32>
    %408 = arith.addf %404, %407 : vector<8x128xf32>
    %409 = arith.mulf %382, %336 : vector<8x128xf32>
    %cst_178 = arith.constant 1.000000e+00 : f32
    %410 = vector.broadcast %cst_178 : f32 to vector<8x128xf32>
    %411 = arith.subf %410, %384 : vector<8x128xf32>
    %412 = arith.mulf %411, %341 : vector<8x128xf32>
    %413 = arith.addf %409, %412 : vector<8x128xf32>
    %414 = arith.mulf %384, %341 : vector<8x128xf32>
    %cst_179 = arith.constant 1.000000e+00 : f32
    %415 = vector.broadcast %cst_179 : f32 to vector<8x128xf32>
    %416 = arith.subf %415, %386 : vector<8x128xf32>
    %417 = arith.mulf %416, %346 : vector<8x128xf32>
    %418 = arith.addf %414, %417 : vector<8x128xf32>
    %419 = arith.mulf %386, %346 : vector<8x128xf32>
    %cst_180 = arith.constant 1.000000e+00 : f32
    %420 = vector.broadcast %cst_180 : f32 to vector<8x128xf32>
    %421 = arith.subf %420, %388 : vector<8x128xf32>
    %422 = arith.mulf %421, %351 : vector<8x128xf32>
    %423 = arith.addf %419, %422 : vector<8x128xf32>
    %424 = arith.mulf %388, %351 : vector<8x128xf32>
    %cst_181 = arith.constant 1.000000e+00 : f32
    %425 = vector.broadcast %cst_181 : f32 to vector<8x128xf32>
    %426 = arith.subf %425, %390 : vector<8x128xf32>
    %427 = arith.mulf %426, %356 : vector<8x128xf32>
    %428 = arith.addf %424, %427 : vector<8x128xf32>
    %429 = arith.mulf %390, %356 : vector<8x128xf32>
    %cst_182 = arith.constant 1.000000e+00 : f32
    %430 = vector.broadcast %cst_182 : f32 to vector<8x128xf32>
    %431 = arith.subf %430, %392 : vector<8x128xf32>
    %432 = arith.mulf %431, %361 : vector<8x128xf32>
    %433 = arith.addf %429, %432 : vector<8x128xf32>
    %434 = arith.mulf %392, %361 : vector<8x128xf32>
    %cst_183 = arith.constant 1.000000e+00 : f32
    %435 = vector.broadcast %cst_183 : f32 to vector<8x128xf32>
    %436 = arith.subf %435, %394 : vector<8x128xf32>
    %437 = arith.mulf %436, %366 : vector<8x128xf32>
    %438 = arith.addf %434, %437 : vector<8x128xf32>
    %439 = arith.mulf %394, %366 : vector<8x128xf32>
    %cst_184 = arith.constant 1.000000e+00 : f32
    %440 = vector.broadcast %cst_184 : f32 to vector<8x128xf32>
    %441 = arith.subf %440, %396 : vector<8x128xf32>
    %442 = arith.mulf %441, %371 : vector<8x128xf32>
    %443 = arith.addf %439, %442 : vector<8x128xf32>
    %444 = arith.mulf %396, %371 : vector<8x128xf32>
    %cst_185 = arith.constant 1.000000e+00 : f32
    %445 = vector.broadcast %cst_185 : f32 to vector<8x128xf32>
    %446 = arith.subf %445, %398 : vector<8x128xf32>
    %447 = arith.mulf %446, %376 : vector<8x128xf32>
    %448 = arith.addf %444, %447 : vector<8x128xf32>
    %cst_186 = arith.constant 0.000000e+00 : f32
    %449 = vector.broadcast %cst_186 : f32 to vector<8x128xf32>
    %450 = arith.subf %320, %449 : vector<8x128xf32>
    %cst_187 = arith.constant 5.000000e-01 : f32
    %451 = vector.broadcast %cst_187 : f32 to vector<8x128xf32>
    %452 = arith.mulf %450, %451 : vector<8x128xf32>
    %cst_188 = arith.constant 1.000000e+00 : f32
    %453 = vector.broadcast %cst_188 : f32 to vector<8x128xf32>
    %454 = arith.subf %320, %453 : vector<8x128xf32>
    %cst_189 = arith.constant 5.000000e-01 : f32
    %455 = vector.broadcast %cst_189 : f32 to vector<8x128xf32>
    %456 = arith.mulf %454, %455 : vector<8x128xf32>
    %cst_190 = arith.constant 2.000000e+00 : f32
    %457 = vector.broadcast %cst_190 : f32 to vector<8x128xf32>
    %458 = arith.subf %320, %457 : vector<8x128xf32>
    %cst_191 = arith.constant 5.000000e-01 : f32
    %459 = vector.broadcast %cst_191 : f32 to vector<8x128xf32>
    %460 = arith.mulf %458, %459 : vector<8x128xf32>
    %cst_192 = arith.constant 3.000000e+00 : f32
    %461 = vector.broadcast %cst_192 : f32 to vector<8x128xf32>
    %462 = arith.subf %320, %461 : vector<8x128xf32>
    %cst_193 = arith.constant 5.000000e-01 : f32
    %463 = vector.broadcast %cst_193 : f32 to vector<8x128xf32>
    %464 = arith.mulf %462, %463 : vector<8x128xf32>
    %cst_194 = arith.constant 4.000000e+00 : f32
    %465 = vector.broadcast %cst_194 : f32 to vector<8x128xf32>
    %466 = arith.subf %320, %465 : vector<8x128xf32>
    %cst_195 = arith.constant 5.000000e-01 : f32
    %467 = vector.broadcast %cst_195 : f32 to vector<8x128xf32>
    %468 = arith.mulf %466, %467 : vector<8x128xf32>
    %cst_196 = arith.constant 5.000000e+00 : f32
    %469 = vector.broadcast %cst_196 : f32 to vector<8x128xf32>
    %470 = arith.subf %320, %469 : vector<8x128xf32>
    %cst_197 = arith.constant 5.000000e-01 : f32
    %471 = vector.broadcast %cst_197 : f32 to vector<8x128xf32>
    %472 = arith.mulf %470, %471 : vector<8x128xf32>
    %cst_198 = arith.constant 6.000000e+00 : f32
    %473 = vector.broadcast %cst_198 : f32 to vector<8x128xf32>
    %474 = arith.subf %320, %473 : vector<8x128xf32>
    %cst_199 = arith.constant 5.000000e-01 : f32
    %475 = vector.broadcast %cst_199 : f32 to vector<8x128xf32>
    %476 = arith.mulf %474, %475 : vector<8x128xf32>
    %cst_200 = arith.constant 7.000000e+00 : f32
    %477 = vector.broadcast %cst_200 : f32 to vector<8x128xf32>
    %478 = arith.subf %320, %477 : vector<8x128xf32>
    %cst_201 = arith.constant 5.000000e-01 : f32
    %479 = vector.broadcast %cst_201 : f32 to vector<8x128xf32>
    %480 = arith.mulf %478, %479 : vector<8x128xf32>
    %cst_202 = arith.constant 8.000000e+00 : f32
    %481 = vector.broadcast %cst_202 : f32 to vector<8x128xf32>
    %482 = arith.subf %320, %481 : vector<8x128xf32>
    %cst_203 = arith.constant 5.000000e-01 : f32
    %483 = vector.broadcast %cst_203 : f32 to vector<8x128xf32>
    %484 = arith.mulf %482, %483 : vector<8x128xf32>
    %cst_204 = arith.constant 9.000000e+00 : f32
    %485 = vector.broadcast %cst_204 : f32 to vector<8x128xf32>
    %486 = arith.subf %320, %485 : vector<8x128xf32>
    %cst_205 = arith.constant 5.000000e-01 : f32
    %487 = vector.broadcast %cst_205 : f32 to vector<8x128xf32>
    %488 = arith.mulf %486, %487 : vector<8x128xf32>
    %489 = arith.mulf %452, %403 : vector<8x128xf32>
    %cst_206 = arith.constant 1.000000e+00 : f32
    %490 = vector.broadcast %cst_206 : f32 to vector<8x128xf32>
    %491 = arith.subf %490, %456 : vector<8x128xf32>
    %492 = arith.mulf %491, %408 : vector<8x128xf32>
    %493 = arith.addf %489, %492 : vector<8x128xf32>
    %494 = arith.mulf %456, %408 : vector<8x128xf32>
    %cst_207 = arith.constant 1.000000e+00 : f32
    %495 = vector.broadcast %cst_207 : f32 to vector<8x128xf32>
    %496 = arith.subf %495, %460 : vector<8x128xf32>
    %497 = arith.mulf %496, %413 : vector<8x128xf32>
    %498 = arith.addf %494, %497 : vector<8x128xf32>
    %499 = arith.mulf %460, %413 : vector<8x128xf32>
    %cst_208 = arith.constant 1.000000e+00 : f32
    %500 = vector.broadcast %cst_208 : f32 to vector<8x128xf32>
    %501 = arith.subf %500, %464 : vector<8x128xf32>
    %502 = arith.mulf %501, %418 : vector<8x128xf32>
    %503 = arith.addf %499, %502 : vector<8x128xf32>
    %504 = arith.mulf %464, %418 : vector<8x128xf32>
    %cst_209 = arith.constant 1.000000e+00 : f32
    %505 = vector.broadcast %cst_209 : f32 to vector<8x128xf32>
    %506 = arith.subf %505, %468 : vector<8x128xf32>
    %507 = arith.mulf %506, %423 : vector<8x128xf32>
    %508 = arith.addf %504, %507 : vector<8x128xf32>
    %509 = arith.mulf %468, %423 : vector<8x128xf32>
    %cst_210 = arith.constant 1.000000e+00 : f32
    %510 = vector.broadcast %cst_210 : f32 to vector<8x128xf32>
    %511 = arith.subf %510, %472 : vector<8x128xf32>
    %512 = arith.mulf %511, %428 : vector<8x128xf32>
    %513 = arith.addf %509, %512 : vector<8x128xf32>
    %514 = arith.mulf %472, %428 : vector<8x128xf32>
    %cst_211 = arith.constant 1.000000e+00 : f32
    %515 = vector.broadcast %cst_211 : f32 to vector<8x128xf32>
    %516 = arith.subf %515, %476 : vector<8x128xf32>
    %517 = arith.mulf %516, %433 : vector<8x128xf32>
    %518 = arith.addf %514, %517 : vector<8x128xf32>
    %519 = arith.mulf %476, %433 : vector<8x128xf32>
    %cst_212 = arith.constant 1.000000e+00 : f32
    %520 = vector.broadcast %cst_212 : f32 to vector<8x128xf32>
    %521 = arith.subf %520, %480 : vector<8x128xf32>
    %522 = arith.mulf %521, %438 : vector<8x128xf32>
    %523 = arith.addf %519, %522 : vector<8x128xf32>
    %524 = arith.mulf %480, %438 : vector<8x128xf32>
    %cst_213 = arith.constant 1.000000e+00 : f32
    %525 = vector.broadcast %cst_213 : f32 to vector<8x128xf32>
    %526 = arith.subf %525, %484 : vector<8x128xf32>
    %527 = arith.mulf %526, %443 : vector<8x128xf32>
    %528 = arith.addf %524, %527 : vector<8x128xf32>
    %529 = arith.mulf %484, %443 : vector<8x128xf32>
    %cst_214 = arith.constant 1.000000e+00 : f32
    %530 = vector.broadcast %cst_214 : f32 to vector<8x128xf32>
    %531 = arith.subf %530, %488 : vector<8x128xf32>
    %532 = arith.mulf %531, %448 : vector<8x128xf32>
    %533 = arith.addf %529, %532 : vector<8x128xf32>
    %cst_215 = arith.constant 0.000000e+00 : f32
    %534 = vector.broadcast %cst_215 : f32 to vector<8x128xf32>
    %535 = arith.subf %320, %534 : vector<8x128xf32>
    %cst_216 = arith.constant 0.333333343 : f32
    %536 = vector.broadcast %cst_216 : f32 to vector<8x128xf32>
    %537 = arith.mulf %535, %536 : vector<8x128xf32>
    %cst_217 = arith.constant 1.000000e+00 : f32
    %538 = vector.broadcast %cst_217 : f32 to vector<8x128xf32>
    %539 = arith.subf %320, %538 : vector<8x128xf32>
    %cst_218 = arith.constant 0.333333343 : f32
    %540 = vector.broadcast %cst_218 : f32 to vector<8x128xf32>
    %541 = arith.mulf %539, %540 : vector<8x128xf32>
    %cst_219 = arith.constant 2.000000e+00 : f32
    %542 = vector.broadcast %cst_219 : f32 to vector<8x128xf32>
    %543 = arith.subf %320, %542 : vector<8x128xf32>
    %cst_220 = arith.constant 0.333333343 : f32
    %544 = vector.broadcast %cst_220 : f32 to vector<8x128xf32>
    %545 = arith.mulf %543, %544 : vector<8x128xf32>
    %cst_221 = arith.constant 3.000000e+00 : f32
    %546 = vector.broadcast %cst_221 : f32 to vector<8x128xf32>
    %547 = arith.subf %320, %546 : vector<8x128xf32>
    %cst_222 = arith.constant 0.333333343 : f32
    %548 = vector.broadcast %cst_222 : f32 to vector<8x128xf32>
    %549 = arith.mulf %547, %548 : vector<8x128xf32>
    %cst_223 = arith.constant 4.000000e+00 : f32
    %550 = vector.broadcast %cst_223 : f32 to vector<8x128xf32>
    %551 = arith.subf %320, %550 : vector<8x128xf32>
    %cst_224 = arith.constant 0.333333343 : f32
    %552 = vector.broadcast %cst_224 : f32 to vector<8x128xf32>
    %553 = arith.mulf %551, %552 : vector<8x128xf32>
    %cst_225 = arith.constant 5.000000e+00 : f32
    %554 = vector.broadcast %cst_225 : f32 to vector<8x128xf32>
    %555 = arith.subf %320, %554 : vector<8x128xf32>
    %cst_226 = arith.constant 0.333333343 : f32
    %556 = vector.broadcast %cst_226 : f32 to vector<8x128xf32>
    %557 = arith.mulf %555, %556 : vector<8x128xf32>
    %cst_227 = arith.constant 6.000000e+00 : f32
    %558 = vector.broadcast %cst_227 : f32 to vector<8x128xf32>
    %559 = arith.subf %320, %558 : vector<8x128xf32>
    %cst_228 = arith.constant 0.333333343 : f32
    %560 = vector.broadcast %cst_228 : f32 to vector<8x128xf32>
    %561 = arith.mulf %559, %560 : vector<8x128xf32>
    %cst_229 = arith.constant 7.000000e+00 : f32
    %562 = vector.broadcast %cst_229 : f32 to vector<8x128xf32>
    %563 = arith.subf %320, %562 : vector<8x128xf32>
    %cst_230 = arith.constant 0.333333343 : f32
    %564 = vector.broadcast %cst_230 : f32 to vector<8x128xf32>
    %565 = arith.mulf %563, %564 : vector<8x128xf32>
    %cst_231 = arith.constant 8.000000e+00 : f32
    %566 = vector.broadcast %cst_231 : f32 to vector<8x128xf32>
    %567 = arith.subf %320, %566 : vector<8x128xf32>
    %cst_232 = arith.constant 0.333333343 : f32
    %568 = vector.broadcast %cst_232 : f32 to vector<8x128xf32>
    %569 = arith.mulf %567, %568 : vector<8x128xf32>
    %570 = arith.mulf %537, %493 : vector<8x128xf32>
    %cst_233 = arith.constant 1.000000e+00 : f32
    %571 = vector.broadcast %cst_233 : f32 to vector<8x128xf32>
    %572 = arith.subf %571, %541 : vector<8x128xf32>
    %573 = arith.mulf %572, %498 : vector<8x128xf32>
    %574 = arith.addf %570, %573 : vector<8x128xf32>
    %575 = arith.mulf %541, %498 : vector<8x128xf32>
    %cst_234 = arith.constant 1.000000e+00 : f32
    %576 = vector.broadcast %cst_234 : f32 to vector<8x128xf32>
    %577 = arith.subf %576, %545 : vector<8x128xf32>
    %578 = arith.mulf %577, %503 : vector<8x128xf32>
    %579 = arith.addf %575, %578 : vector<8x128xf32>
    %580 = arith.mulf %545, %503 : vector<8x128xf32>
    %cst_235 = arith.constant 1.000000e+00 : f32
    %581 = vector.broadcast %cst_235 : f32 to vector<8x128xf32>
    %582 = arith.subf %581, %549 : vector<8x128xf32>
    %583 = arith.mulf %582, %508 : vector<8x128xf32>
    %584 = arith.addf %580, %583 : vector<8x128xf32>
    %585 = arith.mulf %549, %508 : vector<8x128xf32>
    %cst_236 = arith.constant 1.000000e+00 : f32
    %586 = vector.broadcast %cst_236 : f32 to vector<8x128xf32>
    %587 = arith.subf %586, %553 : vector<8x128xf32>
    %588 = arith.mulf %587, %513 : vector<8x128xf32>
    %589 = arith.addf %585, %588 : vector<8x128xf32>
    %590 = arith.mulf %553, %513 : vector<8x128xf32>
    %cst_237 = arith.constant 1.000000e+00 : f32
    %591 = vector.broadcast %cst_237 : f32 to vector<8x128xf32>
    %592 = arith.subf %591, %557 : vector<8x128xf32>
    %593 = arith.mulf %592, %518 : vector<8x128xf32>
    %594 = arith.addf %590, %593 : vector<8x128xf32>
    %595 = arith.mulf %557, %518 : vector<8x128xf32>
    %cst_238 = arith.constant 1.000000e+00 : f32
    %596 = vector.broadcast %cst_238 : f32 to vector<8x128xf32>
    %597 = arith.subf %596, %561 : vector<8x128xf32>
    %598 = arith.mulf %597, %523 : vector<8x128xf32>
    %599 = arith.addf %595, %598 : vector<8x128xf32>
    %600 = arith.mulf %561, %523 : vector<8x128xf32>
    %cst_239 = arith.constant 1.000000e+00 : f32
    %601 = vector.broadcast %cst_239 : f32 to vector<8x128xf32>
    %602 = arith.subf %601, %565 : vector<8x128xf32>
    %603 = arith.mulf %602, %528 : vector<8x128xf32>
    %604 = arith.addf %600, %603 : vector<8x128xf32>
    %605 = arith.mulf %565, %528 : vector<8x128xf32>
    %cst_240 = arith.constant 1.000000e+00 : f32
    %606 = vector.broadcast %cst_240 : f32 to vector<8x128xf32>
    %607 = arith.subf %606, %569 : vector<8x128xf32>
    %608 = arith.mulf %607, %533 : vector<8x128xf32>
    %609 = arith.addf %605, %608 : vector<8x128xf32>
    %c8_241 = arith.constant 8 : index
    %c0_242 = arith.constant 0 : index
    %610 = vector.load %arg10[%c8_241, %c0_242] : memref<72x128xf32, #tpu.memory_space<vmem>>, vector<8x128xf32>
    tpu.vector_store %arg10[%c8_241, %c0_242], %574 {strides = array<i32>} : memref<72x128xf32, #tpu.memory_space<vmem>>, vector<8x128xf32>,
    %c16_243 = arith.constant 16 : index
    %c0_244 = arith.constant 0 : index
    %611 = vector.load %arg10[%c16_243, %c0_244] : memref<72x128xf32, #tpu.memory_space<vmem>>, vector<8x128xf32>
    tpu.vector_store %arg10[%c16_243, %c0_244], %579 {strides = array<i32>} : memref<72x128xf32, #tpu.memory_space<vmem>>, vector<8x128xf32>,
    %c24_245 = arith.constant 24 : index
    %c0_246 = arith.constant 0 : index
    %612 = vector.load %arg10[%c24_245, %c0_246] : memref<72x128xf32, #tpu.memory_space<vmem>>, vector<8x128xf32>
    tpu.vector_store %arg10[%c24_245, %c0_246], %584 {strides = array<i32>} : memref<72x128xf32, #tpu.memory_space<vmem>>, vector<8x128xf32>,
    %c32_247 = arith.constant 32 : index
    %c0_248 = arith.constant 0 : index
    %613 = vector.load %arg10[%c32_247, %c0_248] : memref<72x128xf32, #tpu.memory_space<vmem>>, vector<8x128xf32>
    tpu.vector_store %arg10[%c32_247, %c0_248], %589 {strides = array<i32>} : memref<72x128xf32, #tpu.memory_space<vmem>>, vector<8x128xf32>,
    %c40_249 = arith.constant 40 : index
    %c0_250 = arith.constant 0 : index
    %614 = vector.load %arg10[%c40_249, %c0_250] : memref<72x128xf32, #tpu.memory_space<vmem>>, vector<8x128xf32>
    tpu.vector_store %arg10[%c40_249, %c0_250], %594 {strides = array<i32>} : memref<72x128xf32, #tpu.memory_space<vmem>>, vector<8x128xf32>,
    %c48_251 = arith.constant 48 : index
    %c0_252 = arith.constant 0 : index
    %615 = vector.load %arg10[%c48_251, %c0_252] : memref<72x128xf32, #tpu.memory_space<vmem>>, vector<8x128xf32>
    tpu.vector_store %arg10[%c48_251, %c0_252], %599 {strides = array<i32>} : memref<72x128xf32, #tpu.memory_space<vmem>>, vector<8x128xf32>,
    %c56_253 = arith.constant 56 : index
    %c0_254 = arith.constant 0 : index
    %616 = vector.load %arg10[%c56_253, %c0_254] : memref<72x128xf32, #tpu.memory_space<vmem>>, vector<8x128xf32>
    tpu.vector_store %arg10[%c56_253, %c0_254], %604 {strides = array<i32>} : memref<72x128xf32, #tpu.memory_space<vmem>>, vector<8x128xf32>,
    %c64_255 = arith.constant 64 : index
    %c0_256 = arith.constant 0 : index
    %617 = vector.load %arg10[%c64_255, %c0_256] : memref<72x128xf32, #tpu.memory_space<vmem>>, vector<8x128xf32>
    tpu.vector_store %arg10[%c64_255, %c0_256], %609 {strides = array<i32>} : memref<72x128xf32, #tpu.memory_space<vmem>>, vector<8x128xf32>,
    %c0_257 = arith.constant 0 : index
    %c0_258 = arith.constant 0 : index
    %618 = vector.load %arg5[%c0_257, %c0_258] : memref<8x72xf32, #tpu.memory_space<vmem>>, vector<8x72xf32>
    %c0_259 = arith.constant 0 : index
    %c0_260 = arith.constant 0 : index
    %619 = vector.load %arg10[%c0_259, %c0_260] : memref<72x128xf32, #tpu.memory_space<vmem>>, vector<72x128xf32>
    %cst_261 = arith.constant dense<0.000000e+00> : vector<8x128xf32>
    %620 = tpu.matmul %618, %619, %cst_261 {dimension_numbers = #tpu.dot_dimension_numbers<[1], [0], [0], [1], [0, 0, 1, 1], [], []>} : vector<8x72xf32>, vector<72x128xf32>, vector<8x128xf32> -> vector<8x128xf32>
    %c0_262 = arith.constant 0 : index
    %c0_263 = arith.constant 0 : index
    %621 = vector.load %arg2[%c0_262, %c0_263] : memref<8x128xf32, #tpu.memory_space<vmem>>, vector<8x128xf32>
    %622 = arith.addf %621, %620 : vector<8x128xf32>
    %c0_264 = arith.constant 0 : index
    %c0_265 = arith.constant 0 : index
    %623 = vector.load %arg8[%c0_264, %c0_265] : memref<8x128xf32, #tpu.memory_space<vmem>>, vector<8x128xf32>
    tpu.vector_store %arg8[%c0_264, %c0_265], %622 {strides = array<i32>} : memref<8x128xf32, #tpu.memory_space<vmem>>, vector<8x128xf32>,
    %cst_266 = arith.constant 5.000000e-01 : f32
    %624 = vector.broadcast %cst_266 : f32 to vector<8x128xf32>
    %625 = arith.mulf %624, %622 : vector<8x128xf32>
    %626 = math.tanh %625 : vector<8x128xf32>
    %627 = arith.mulf %625, %626 : vector<8x128xf32>
    %628 = arith.addf %627, %625 : vector<8x128xf32>
    %c0_267 = arith.constant 0 : index
    %c0_268 = arith.constant 0 : index
    %629 = vector.load %arg10[%c0_267, %c0_268] : memref<72x128xf32, #tpu.memory_space<vmem>>, vector<8x128xf32>
    tpu.vector_store %arg10[%c0_267, %c0_268], %628 {strides = array<i32>} : memref<72x128xf32, #tpu.memory_space<vmem>>, vector<8x128xf32>,
    %cst_269 = arith.constant 2.500000e+00 : f32
    %630 = vector.broadcast %cst_269 : f32 to vector<8x128xf32>
    %631 = arith.mulf %622, %630 : vector<8x128xf32>
    %cst_270 = arith.constant 5.500000e+00 : f32
    %632 = vector.broadcast %cst_270 : f32 to vector<8x128xf32>
    %633 = arith.addf %631, %632 : vector<8x128xf32>
    %634 = math.floor %633 : vector<8x128xf32>
    %cst_271 = arith.constant 0.000000e+00 : f32
    %635 = vector.broadcast %cst_271 : f32 to vector<8x128xf32>
    %636 = arith.cmpf oeq, %634, %635 : vector<8x128xf32>
    %cst_272 = arith.constant 1.000000e+00 : f32
    %cst_273 = arith.constant 0.000000e+00 : f32
    %637 = vector.broadcast %cst_272 : f32 to vector<8x128xf32>
    %638 = vector.broadcast %cst_273 : f32 to vector<8x128xf32>
    %639 = arith.select %636, %637, %638 : vector<8x128xi1>, vector<8x128xf32>
    %cst_274 = arith.constant 1.000000e+00 : f32
    %640 = vector.broadcast %cst_274 : f32 to vector<8x128xf32>
    %641 = arith.cmpf oeq, %634, %640 : vector<8x128xf32>
    %cst_275 = arith.constant 1.000000e+00 : f32
    %cst_276 = arith.constant 0.000000e+00 : f32
    %642 = vector.broadcast %cst_275 : f32 to vector<8x128xf32>
    %643 = vector.broadcast %cst_276 : f32 to vector<8x128xf32>
    %644 = arith.select %641, %642, %643 : vector<8x128xi1>, vector<8x128xf32>
    %cst_277 = arith.constant 2.000000e+00 : f32
    %645 = vector.broadcast %cst_277 : f32 to vector<8x128xf32>
    %646 = arith.cmpf oeq, %634, %645 : vector<8x128xf32>
    %cst_278 = arith.constant 1.000000e+00 : f32
    %cst_279 = arith.constant 0.000000e+00 : f32
    %647 = vector.broadcast %cst_278 : f32 to vector<8x128xf32>
    %648 = vector.broadcast %cst_279 : f32 to vector<8x128xf32>
    %649 = arith.select %646, %647, %648 : vector<8x128xi1>, vector<8x128xf32>
    %cst_280 = arith.constant 3.000000e+00 : f32
    %650 = vector.broadcast %cst_280 : f32 to vector<8x128xf32>
    %651 = arith.cmpf oeq, %634, %650 : vector<8x128xf32>
    %cst_281 = arith.constant 1.000000e+00 : f32
    %cst_282 = arith.constant 0.000000e+00 : f32
    %652 = vector.broadcast %cst_281 : f32 to vector<8x128xf32>
    %653 = vector.broadcast %cst_282 : f32 to vector<8x128xf32>
    %654 = arith.select %651, %652, %653 : vector<8x128xi1>, vector<8x128xf32>
    %cst_283 = arith.constant 4.000000e+00 : f32
    %655 = vector.broadcast %cst_283 : f32 to vector<8x128xf32>
    %656 = arith.cmpf oeq, %634, %655 : vector<8x128xf32>
    %cst_284 = arith.constant 1.000000e+00 : f32
    %cst_285 = arith.constant 0.000000e+00 : f32
    %657 = vector.broadcast %cst_284 : f32 to vector<8x128xf32>
    %658 = vector.broadcast %cst_285 : f32 to vector<8x128xf32>
    %659 = arith.select %656, %657, %658 : vector<8x128xi1>, vector<8x128xf32>
    %cst_286 = arith.constant 5.000000e+00 : f32
    %660 = vector.broadcast %cst_286 : f32 to vector<8x128xf32>
    %661 = arith.cmpf oeq, %634, %660 : vector<8x128xf32>
    %cst_287 = arith.constant 1.000000e+00 : f32
    %cst_288 = arith.constant 0.000000e+00 : f32
    %662 = vector.broadcast %cst_287 : f32 to vector<8x128xf32>
    %663 = vector.broadcast %cst_288 : f32 to vector<8x128xf32>
    %664 = arith.select %661, %662, %663 : vector<8x128xi1>, vector<8x128xf32>
    %cst_289 = arith.constant 6.000000e+00 : f32
    %665 = vector.broadcast %cst_289 : f32 to vector<8x128xf32>
    %666 = arith.cmpf oeq, %634, %665 : vector<8x128xf32>
    %cst_290 = arith.constant 1.000000e+00 : f32
    %cst_291 = arith.constant 0.000000e+00 : f32
    %667 = vector.broadcast %cst_290 : f32 to vector<8x128xf32>
    %668 = vector.broadcast %cst_291 : f32 to vector<8x128xf32>
    %669 = arith.select %666, %667, %668 : vector<8x128xi1>, vector<8x128xf32>
    %cst_292 = arith.constant 7.000000e+00 : f32
    %670 = vector.broadcast %cst_292 : f32 to vector<8x128xf32>
    %671 = arith.cmpf oeq, %634, %670 : vector<8x128xf32>
    %cst_293 = arith.constant 1.000000e+00 : f32
    %cst_294 = arith.constant 0.000000e+00 : f32
    %672 = vector.broadcast %cst_293 : f32 to vector<8x128xf32>
    %673 = vector.broadcast %cst_294 : f32 to vector<8x128xf32>
    %674 = arith.select %671, %672, %673 : vector<8x128xi1>, vector<8x128xf32>
    %cst_295 = arith.constant 8.000000e+00 : f32
    %675 = vector.broadcast %cst_295 : f32 to vector<8x128xf32>
    %676 = arith.cmpf oeq, %634, %675 : vector<8x128xf32>
    %cst_296 = arith.constant 1.000000e+00 : f32
    %cst_297 = arith.constant 0.000000e+00 : f32
    %677 = vector.broadcast %cst_296 : f32 to vector<8x128xf32>
    %678 = vector.broadcast %cst_297 : f32 to vector<8x128xf32>
    %679 = arith.select %676, %677, %678 : vector<8x128xi1>, vector<8x128xf32>
    %cst_298 = arith.constant 9.000000e+00 : f32
    %680 = vector.broadcast %cst_298 : f32 to vector<8x128xf32>
    %681 = arith.cmpf oeq, %634, %680 : vector<8x128xf32>
    %cst_299 = arith.constant 1.000000e+00 : f32
    %cst_300 = arith.constant 0.000000e+00 : f32
    %682 = vector.broadcast %cst_299 : f32 to vector<8x128xf32>
    %683 = vector.broadcast %cst_300 : f32 to vector<8x128xf32>
    %684 = arith.select %681, %682, %683 : vector<8x128xi1>, vector<8x128xf32>
    %cst_301 = arith.constant 1.000000e+01 : f32
    %685 = vector.broadcast %cst_301 : f32 to vector<8x128xf32>
    %686 = arith.cmpf oeq, %634, %685 : vector<8x128xf32>
    %cst_302 = arith.constant 1.000000e+00 : f32
    %cst_303 = arith.constant 0.000000e+00 : f32
    %687 = vector.broadcast %cst_302 : f32 to vector<8x128xf32>
    %688 = vector.broadcast %cst_303 : f32 to vector<8x128xf32>
    %689 = arith.select %686, %687, %688 : vector<8x128xi1>, vector<8x128xf32>
    %cst_304 = arith.constant 0.000000e+00 : f32
    %690 = vector.broadcast %cst_304 : f32 to vector<8x128xf32>
    %691 = arith.subf %633, %690 : vector<8x128xf32>
    %cst_305 = arith.constant 1.000000e+00 : f32
    %692 = vector.broadcast %cst_305 : f32 to vector<8x128xf32>
    %693 = arith.subf %633, %692 : vector<8x128xf32>
    %cst_306 = arith.constant 2.000000e+00 : f32
    %694 = vector.broadcast %cst_306 : f32 to vector<8x128xf32>
    %695 = arith.subf %633, %694 : vector<8x128xf32>
    %cst_307 = arith.constant 3.000000e+00 : f32
    %696 = vector.broadcast %cst_307 : f32 to vector<8x128xf32>
    %697 = arith.subf %633, %696 : vector<8x128xf32>
    %cst_308 = arith.constant 4.000000e+00 : f32
    %698 = vector.broadcast %cst_308 : f32 to vector<8x128xf32>
    %699 = arith.subf %633, %698 : vector<8x128xf32>
    %cst_309 = arith.constant 5.000000e+00 : f32
    %700 = vector.broadcast %cst_309 : f32 to vector<8x128xf32>
    %701 = arith.subf %633, %700 : vector<8x128xf32>
    %cst_310 = arith.constant 6.000000e+00 : f32
    %702 = vector.broadcast %cst_310 : f32 to vector<8x128xf32>
    %703 = arith.subf %633, %702 : vector<8x128xf32>
    %cst_311 = arith.constant 7.000000e+00 : f32
    %704 = vector.broadcast %cst_311 : f32 to vector<8x128xf32>
    %705 = arith.subf %633, %704 : vector<8x128xf32>
    %cst_312 = arith.constant 8.000000e+00 : f32
    %706 = vector.broadcast %cst_312 : f32 to vector<8x128xf32>
    %707 = arith.subf %633, %706 : vector<8x128xf32>
    %cst_313 = arith.constant 9.000000e+00 : f32
    %708 = vector.broadcast %cst_313 : f32 to vector<8x128xf32>
    %709 = arith.subf %633, %708 : vector<8x128xf32>
    %cst_314 = arith.constant 1.000000e+01 : f32
    %710 = vector.broadcast %cst_314 : f32 to vector<8x128xf32>
    %711 = arith.subf %633, %710 : vector<8x128xf32>
    %712 = arith.mulf %691, %639 : vector<8x128xf32>
    %cst_315 = arith.constant 1.000000e+00 : f32
    %713 = vector.broadcast %cst_315 : f32 to vector<8x128xf32>
    %714 = arith.subf %713, %693 : vector<8x128xf32>
    %715 = arith.mulf %714, %644 : vector<8x128xf32>
    %716 = arith.addf %712, %715 : vector<8x128xf32>
    %717 = arith.mulf %693, %644 : vector<8x128xf32>
    %cst_316 = arith.constant 1.000000e+00 : f32
    %718 = vector.broadcast %cst_316 : f32 to vector<8x128xf32>
    %719 = arith.subf %718, %695 : vector<8x128xf32>
    %720 = arith.mulf %719, %649 : vector<8x128xf32>
    %721 = arith.addf %717, %720 : vector<8x128xf32>
    %722 = arith.mulf %695, %649 : vector<8x128xf32>
    %cst_317 = arith.constant 1.000000e+00 : f32
    %723 = vector.broadcast %cst_317 : f32 to vector<8x128xf32>
    %724 = arith.subf %723, %697 : vector<8x128xf32>
    %725 = arith.mulf %724, %654 : vector<8x128xf32>
    %726 = arith.addf %722, %725 : vector<8x128xf32>
    %727 = arith.mulf %697, %654 : vector<8x128xf32>
    %cst_318 = arith.constant 1.000000e+00 : f32
    %728 = vector.broadcast %cst_318 : f32 to vector<8x128xf32>
    %729 = arith.subf %728, %699 : vector<8x128xf32>
    %730 = arith.mulf %729, %659 : vector<8x128xf32>
    %731 = arith.addf %727, %730 : vector<8x128xf32>
    %732 = arith.mulf %699, %659 : vector<8x128xf32>
    %cst_319 = arith.constant 1.000000e+00 : f32
    %733 = vector.broadcast %cst_319 : f32 to vector<8x128xf32>
    %734 = arith.subf %733, %701 : vector<8x128xf32>
    %735 = arith.mulf %734, %664 : vector<8x128xf32>
    %736 = arith.addf %732, %735 : vector<8x128xf32>
    %737 = arith.mulf %701, %664 : vector<8x128xf32>
    %cst_320 = arith.constant 1.000000e+00 : f32
    %738 = vector.broadcast %cst_320 : f32 to vector<8x128xf32>
    %739 = arith.subf %738, %703 : vector<8x128xf32>
    %740 = arith.mulf %739, %669 : vector<8x128xf32>
    %741 = arith.addf %737, %740 : vector<8x128xf32>
    %742 = arith.mulf %703, %669 : vector<8x128xf32>
    %cst_321 = arith.constant 1.000000e+00 : f32
    %743 = vector.broadcast %cst_321 : f32 to vector<8x128xf32>
    %744 = arith.subf %743, %705 : vector<8x128xf32>
    %745 = arith.mulf %744, %674 : vector<8x128xf32>
    %746 = arith.addf %742, %745 : vector<8x128xf32>
    %747 = arith.mulf %705, %674 : vector<8x128xf32>
    %cst_322 = arith.constant 1.000000e+00 : f32
    %748 = vector.broadcast %cst_322 : f32 to vector<8x128xf32>
    %749 = arith.subf %748, %707 : vector<8x128xf32>
    %750 = arith.mulf %749, %679 : vector<8x128xf32>
    %751 = arith.addf %747, %750 : vector<8x128xf32>
    %752 = arith.mulf %707, %679 : vector<8x128xf32>
    %cst_323 = arith.constant 1.000000e+00 : f32
    %753 = vector.broadcast %cst_323 : f32 to vector<8x128xf32>
    %754 = arith.subf %753, %709 : vector<8x128xf32>
    %755 = arith.mulf %754, %684 : vector<8x128xf32>
    %756 = arith.addf %752, %755 : vector<8x128xf32>
    %757 = arith.mulf %709, %684 : vector<8x128xf32>
    %cst_324 = arith.constant 1.000000e+00 : f32
    %758 = vector.broadcast %cst_324 : f32 to vector<8x128xf32>
    %759 = arith.subf %758, %711 : vector<8x128xf32>
    %760 = arith.mulf %759, %689 : vector<8x128xf32>
    %761 = arith.addf %757, %760 : vector<8x128xf32>
    %cst_325 = arith.constant 0.000000e+00 : f32
    %762 = vector.broadcast %cst_325 : f32 to vector<8x128xf32>
    %763 = arith.subf %633, %762 : vector<8x128xf32>
    %cst_326 = arith.constant 5.000000e-01 : f32
    %764 = vector.broadcast %cst_326 : f32 to vector<8x128xf32>
    %765 = arith.mulf %763, %764 : vector<8x128xf32>
    %cst_327 = arith.constant 1.000000e+00 : f32
    %766 = vector.broadcast %cst_327 : f32 to vector<8x128xf32>
    %767 = arith.subf %633, %766 : vector<8x128xf32>
    %cst_328 = arith.constant 5.000000e-01 : f32
    %768 = vector.broadcast %cst_328 : f32 to vector<8x128xf32>
    %769 = arith.mulf %767, %768 : vector<8x128xf32>
    %cst_329 = arith.constant 2.000000e+00 : f32
    %770 = vector.broadcast %cst_329 : f32 to vector<8x128xf32>
    %771 = arith.subf %633, %770 : vector<8x128xf32>
    %cst_330 = arith.constant 5.000000e-01 : f32
    %772 = vector.broadcast %cst_330 : f32 to vector<8x128xf32>
    %773 = arith.mulf %771, %772 : vector<8x128xf32>
    %cst_331 = arith.constant 3.000000e+00 : f32
    %774 = vector.broadcast %cst_331 : f32 to vector<8x128xf32>
    %775 = arith.subf %633, %774 : vector<8x128xf32>
    %cst_332 = arith.constant 5.000000e-01 : f32
    %776 = vector.broadcast %cst_332 : f32 to vector<8x128xf32>
    %777 = arith.mulf %775, %776 : vector<8x128xf32>
    %cst_333 = arith.constant 4.000000e+00 : f32
    %778 = vector.broadcast %cst_333 : f32 to vector<8x128xf32>
    %779 = arith.subf %633, %778 : vector<8x128xf32>
    %cst_334 = arith.constant 5.000000e-01 : f32
    %780 = vector.broadcast %cst_334 : f32 to vector<8x128xf32>
    %781 = arith.mulf %779, %780 : vector<8x128xf32>
    %cst_335 = arith.constant 5.000000e+00 : f32
    %782 = vector.broadcast %cst_335 : f32 to vector<8x128xf32>
    %783 = arith.subf %633, %782 : vector<8x128xf32>
    %cst_336 = arith.constant 5.000000e-01 : f32
    %784 = vector.broadcast %cst_336 : f32 to vector<8x128xf32>
    %785 = arith.mulf %783, %784 : vector<8x128xf32>
    %cst_337 = arith.constant 6.000000e+00 : f32
    %786 = vector.broadcast %cst_337 : f32 to vector<8x128xf32>
    %787 = arith.subf %633, %786 : vector<8x128xf32>
    %cst_338 = arith.constant 5.000000e-01 : f32
    %788 = vector.broadcast %cst_338 : f32 to vector<8x128xf32>
    %789 = arith.mulf %787, %788 : vector<8x128xf32>
    %cst_339 = arith.constant 7.000000e+00 : f32
    %790 = vector.broadcast %cst_339 : f32 to vector<8x128xf32>
    %791 = arith.subf %633, %790 : vector<8x128xf32>
    %cst_340 = arith.constant 5.000000e-01 : f32
    %792 = vector.broadcast %cst_340 : f32 to vector<8x128xf32>
    %793 = arith.mulf %791, %792 : vector<8x128xf32>
    %cst_341 = arith.constant 8.000000e+00 : f32
    %794 = vector.broadcast %cst_341 : f32 to vector<8x128xf32>
    %795 = arith.subf %633, %794 : vector<8x128xf32>
    %cst_342 = arith.constant 5.000000e-01 : f32
    %796 = vector.broadcast %cst_342 : f32 to vector<8x128xf32>
    %797 = arith.mulf %795, %796 : vector<8x128xf32>
    %cst_343 = arith.constant 9.000000e+00 : f32
    %798 = vector.broadcast %cst_343 : f32 to vector<8x128xf32>
    %799 = arith.subf %633, %798 : vector<8x128xf32>
    %cst_344 = arith.constant 5.000000e-01 : f32
    %800 = vector.broadcast %cst_344 : f32 to vector<8x128xf32>
    %801 = arith.mulf %799, %800 : vector<8x128xf32>
    %802 = arith.mulf %765, %716 : vector<8x128xf32>
    %cst_345 = arith.constant 1.000000e+00 : f32
    %803 = vector.broadcast %cst_345 : f32 to vector<8x128xf32>
    %804 = arith.subf %803, %769 : vector<8x128xf32>
    %805 = arith.mulf %804, %721 : vector<8x128xf32>
    %806 = arith.addf %802, %805 : vector<8x128xf32>
    %807 = arith.mulf %769, %721 : vector<8x128xf32>
    %cst_346 = arith.constant 1.000000e+00 : f32
    %808 = vector.broadcast %cst_346 : f32 to vector<8x128xf32>
    %809 = arith.subf %808, %773 : vector<8x128xf32>
    %810 = arith.mulf %809, %726 : vector<8x128xf32>
    %811 = arith.addf %807, %810 : vector<8x128xf32>
    %812 = arith.mulf %773, %726 : vector<8x128xf32>
    %cst_347 = arith.constant 1.000000e+00 : f32
    %813 = vector.broadcast %cst_347 : f32 to vector<8x128xf32>
    %814 = arith.subf %813, %777 : vector<8x128xf32>
    %815 = arith.mulf %814, %731 : vector<8x128xf32>
    %816 = arith.addf %812, %815 : vector<8x128xf32>
    %817 = arith.mulf %777, %731 : vector<8x128xf32>
    %cst_348 = arith.constant 1.000000e+00 : f32
    %818 = vector.broadcast %cst_348 : f32 to vector<8x128xf32>
    %819 = arith.subf %818, %781 : vector<8x128xf32>
    %820 = arith.mulf %819, %736 : vector<8x128xf32>
    %821 = arith.addf %817, %820 : vector<8x128xf32>
    %822 = arith.mulf %781, %736 : vector<8x128xf32>
    %cst_349 = arith.constant 1.000000e+00 : f32
    %823 = vector.broadcast %cst_349 : f32 to vector<8x128xf32>
    %824 = arith.subf %823, %785 : vector<8x128xf32>
    %825 = arith.mulf %824, %741 : vector<8x128xf32>
    %826 = arith.addf %822, %825 : vector<8x128xf32>
    %827 = arith.mulf %785, %741 : vector<8x128xf32>
    %cst_350 = arith.constant 1.000000e+00 : f32
    %828 = vector.broadcast %cst_350 : f32 to vector<8x128xf32>
    %829 = arith.subf %828, %789 : vector<8x128xf32>
    %830 = arith.mulf %829, %746 : vector<8x128xf32>
    %831 = arith.addf %827, %830 : vector<8x128xf32>
    %832 = arith.mulf %789, %746 : vector<8x128xf32>
    %cst_351 = arith.constant 1.000000e+00 : f32
    %833 = vector.broadcast %cst_351 : f32 to vector<8x128xf32>
    %834 = arith.subf %833, %793 : vector<8x128xf32>
    %835 = arith.mulf %834, %751 : vector<8x128xf32>
    %836 = arith.addf %832, %835 : vector<8x128xf32>
    %837 = arith.mulf %793, %751 : vector<8x128xf32>
    %cst_352 = arith.constant 1.000000e+00 : f32
    %838 = vector.broadcast %cst_352 : f32 to vector<8x128xf32>
    %839 = arith.subf %838, %797 : vector<8x128xf32>
    %840 = arith.mulf %839, %756 : vector<8x128xf32>
    %841 = arith.addf %837, %840 : vector<8x128xf32>
    %842 = arith.mulf %797, %756 : vector<8x128xf32>
    %cst_353 = arith.constant 1.000000e+00 : f32
    %843 = vector.broadcast %cst_353 : f32 to vector<8x128xf32>
    %844 = arith.subf %843, %801 : vector<8x128xf32>
    %845 = arith.mulf %844, %761 : vector<8x128xf32>
    %846 = arith.addf %842, %845 : vector<8x128xf32>
    %cst_354 = arith.constant 0.000000e+00 : f32
    %847 = vector.broadcast %cst_354 : f32 to vector<8x128xf32>
    %848 = arith.subf %633, %847 : vector<8x128xf32>
    %cst_355 = arith.constant 0.333333343 : f32
    %849 = vector.broadcast %cst_355 : f32 to vector<8x128xf32>
    %850 = arith.mulf %848, %849 : vector<8x128xf32>
    %cst_356 = arith.constant 1.000000e+00 : f32
    %851 = vector.broadcast %cst_356 : f32 to vector<8x128xf32>
    %852 = arith.subf %633, %851 : vector<8x128xf32>
    %cst_357 = arith.constant 0.333333343 : f32
    %853 = vector.broadcast %cst_357 : f32 to vector<8x128xf32>
    %854 = arith.mulf %852, %853 : vector<8x128xf32>
    %cst_358 = arith.constant 2.000000e+00 : f32
    %855 = vector.broadcast %cst_358 : f32 to vector<8x128xf32>
    %856 = arith.subf %633, %855 : vector<8x128xf32>
    %cst_359 = arith.constant 0.333333343 : f32
    %857 = vector.broadcast %cst_359 : f32 to vector<8x128xf32>
    %858 = arith.mulf %856, %857 : vector<8x128xf32>
    %cst_360 = arith.constant 3.000000e+00 : f32
    %859 = vector.broadcast %cst_360 : f32 to vector<8x128xf32>
    %860 = arith.subf %633, %859 : vector<8x128xf32>
    %cst_361 = arith.constant 0.333333343 : f32
    %861 = vector.broadcast %cst_361 : f32 to vector<8x128xf32>
    %862 = arith.mulf %860, %861 : vector<8x128xf32>
    %cst_362 = arith.constant 4.000000e+00 : f32
    %863 = vector.broadcast %cst_362 : f32 to vector<8x128xf32>
    %864 = arith.subf %633, %863 : vector<8x128xf32>
    %cst_363 = arith.constant 0.333333343 : f32
    %865 = vector.broadcast %cst_363 : f32 to vector<8x128xf32>
    %866 = arith.mulf %864, %865 : vector<8x128xf32>
    %cst_364 = arith.constant 5.000000e+00 : f32
    %867 = vector.broadcast %cst_364 : f32 to vector<8x128xf32>
    %868 = arith.subf %633, %867 : vector<8x128xf32>
    %cst_365 = arith.constant 0.333333343 : f32
    %869 = vector.broadcast %cst_365 : f32 to vector<8x128xf32>
    %870 = arith.mulf %868, %869 : vector<8x128xf32>
    %cst_366 = arith.constant 6.000000e+00 : f32
    %871 = vector.broadcast %cst_366 : f32 to vector<8x128xf32>
    %872 = arith.subf %633, %871 : vector<8x128xf32>
    %cst_367 = arith.constant 0.333333343 : f32
    %873 = vector.broadcast %cst_367 : f32 to vector<8x128xf32>
    %874 = arith.mulf %872, %873 : vector<8x128xf32>
    %cst_368 = arith.constant 7.000000e+00 : f32
    %875 = vector.broadcast %cst_368 : f32 to vector<8x128xf32>
    %876 = arith.subf %633, %875 : vector<8x128xf32>
    %cst_369 = arith.constant 0.333333343 : f32
    %877 = vector.broadcast %cst_369 : f32 to vector<8x128xf32>
    %878 = arith.mulf %876, %877 : vector<8x128xf32>
    %cst_370 = arith.constant 8.000000e+00 : f32
    %879 = vector.broadcast %cst_370 : f32 to vector<8x128xf32>
    %880 = arith.subf %633, %879 : vector<8x128xf32>
    %cst_371 = arith.constant 0.333333343 : f32
    %881 = vector.broadcast %cst_371 : f32 to vector<8x128xf32>
    %882 = arith.mulf %880, %881 : vector<8x128xf32>
    %883 = arith.mulf %850, %806 : vector<8x128xf32>
    %cst_372 = arith.constant 1.000000e+00 : f32
    %884 = vector.broadcast %cst_372 : f32 to vector<8x128xf32>
    %885 = arith.subf %884, %854 : vector<8x128xf32>
    %886 = arith.mulf %885, %811 : vector<8x128xf32>
    %887 = arith.addf %883, %886 : vector<8x128xf32>
    %888 = arith.mulf %854, %811 : vector<8x128xf32>
    %cst_373 = arith.constant 1.000000e+00 : f32
    %889 = vector.broadcast %cst_373 : f32 to vector<8x128xf32>
    %890 = arith.subf %889, %858 : vector<8x128xf32>
    %891 = arith.mulf %890, %816 : vector<8x128xf32>
    %892 = arith.addf %888, %891 : vector<8x128xf32>
    %893 = arith.mulf %858, %816 : vector<8x128xf32>
    %cst_374 = arith.constant 1.000000e+00 : f32
    %894 = vector.broadcast %cst_374 : f32 to vector<8x128xf32>
    %895 = arith.subf %894, %862 : vector<8x128xf32>
    %896 = arith.mulf %895, %821 : vector<8x128xf32>
    %897 = arith.addf %893, %896 : vector<8x128xf32>
    %898 = arith.mulf %862, %821 : vector<8x128xf32>
    %cst_375 = arith.constant 1.000000e+00 : f32
    %899 = vector.broadcast %cst_375 : f32 to vector<8x128xf32>
    %900 = arith.subf %899, %866 : vector<8x128xf32>
    %901 = arith.mulf %900, %826 : vector<8x128xf32>
    %902 = arith.addf %898, %901 : vector<8x128xf32>
    %903 = arith.mulf %866, %826 : vector<8x128xf32>
    %cst_376 = arith.constant 1.000000e+00 : f32
    %904 = vector.broadcast %cst_376 : f32 to vector<8x128xf32>
    %905 = arith.subf %904, %870 : vector<8x128xf32>
    %906 = arith.mulf %905, %831 : vector<8x128xf32>
    %907 = arith.addf %903, %906 : vector<8x128xf32>
    %908 = arith.mulf %870, %831 : vector<8x128xf32>
    %cst_377 = arith.constant 1.000000e+00 : f32
    %909 = vector.broadcast %cst_377 : f32 to vector<8x128xf32>
    %910 = arith.subf %909, %874 : vector<8x128xf32>
    %911 = arith.mulf %910, %836 : vector<8x128xf32>
    %912 = arith.addf %908, %911 : vector<8x128xf32>
    %913 = arith.mulf %874, %836 : vector<8x128xf32>
    %cst_378 = arith.constant 1.000000e+00 : f32
    %914 = vector.broadcast %cst_378 : f32 to vector<8x128xf32>
    %915 = arith.subf %914, %878 : vector<8x128xf32>
    %916 = arith.mulf %915, %841 : vector<8x128xf32>
    %917 = arith.addf %913, %916 : vector<8x128xf32>
    %918 = arith.mulf %878, %841 : vector<8x128xf32>
    %cst_379 = arith.constant 1.000000e+00 : f32
    %919 = vector.broadcast %cst_379 : f32 to vector<8x128xf32>
    %920 = arith.subf %919, %882 : vector<8x128xf32>
    %921 = arith.mulf %920, %846 : vector<8x128xf32>
    %922 = arith.addf %918, %921 : vector<8x128xf32>
    %c8_380 = arith.constant 8 : index
    %c0_381 = arith.constant 0 : index
    %923 = vector.load %arg10[%c8_380, %c0_381] : memref<72x128xf32, #tpu.memory_space<vmem>>, vector<8x128xf32>
    tpu.vector_store %arg10[%c8_380, %c0_381], %887 {strides = array<i32>} : memref<72x128xf32, #tpu.memory_space<vmem>>, vector<8x128xf32>,
    %c16_382 = arith.constant 16 : index
    %c0_383 = arith.constant 0 : index
    %924 = vector.load %arg10[%c16_382, %c0_383] : memref<72x128xf32, #tpu.memory_space<vmem>>, vector<8x128xf32>
    tpu.vector_store %arg10[%c16_382, %c0_383], %892 {strides = array<i32>} : memref<72x128xf32, #tpu.memory_space<vmem>>, vector<8x128xf32>,
    %c24_384 = arith.constant 24 : index
    %c0_385 = arith.constant 0 : index
    %925 = vector.load %arg10[%c24_384, %c0_385] : memref<72x128xf32, #tpu.memory_space<vmem>>, vector<8x128xf32>
    tpu.vector_store %arg10[%c24_384, %c0_385], %897 {strides = array<i32>} : memref<72x128xf32, #tpu.memory_space<vmem>>, vector<8x128xf32>,
    %c32_386 = arith.constant 32 : index
    %c0_387 = arith.constant 0 : index
    %926 = vector.load %arg10[%c32_386, %c0_387] : memref<72x128xf32, #tpu.memory_space<vmem>>, vector<8x128xf32>
    tpu.vector_store %arg10[%c32_386, %c0_387], %902 {strides = array<i32>} : memref<72x128xf32, #tpu.memory_space<vmem>>, vector<8x128xf32>,
    %c40_388 = arith.constant 40 : index
    %c0_389 = arith.constant 0 : index
    %927 = vector.load %arg10[%c40_388, %c0_389] : memref<72x128xf32, #tpu.memory_space<vmem>>, vector<8x128xf32>
    tpu.vector_store %arg10[%c40_388, %c0_389], %907 {strides = array<i32>} : memref<72x128xf32, #tpu.memory_space<vmem>>, vector<8x128xf32>,
    %c48_390 = arith.constant 48 : index
    %c0_391 = arith.constant 0 : index
    %928 = vector.load %arg10[%c48_390, %c0_391] : memref<72x128xf32, #tpu.memory_space<vmem>>, vector<8x128xf32>
    tpu.vector_store %arg10[%c48_390, %c0_391], %912 {strides = array<i32>} : memref<72x128xf32, #tpu.memory_space<vmem>>, vector<8x128xf32>,
    %c56_392 = arith.constant 56 : index
    %c0_393 = arith.constant 0 : index
    %929 = vector.load %arg10[%c56_392, %c0_393] : memref<72x128xf32, #tpu.memory_space<vmem>>, vector<8x128xf32>
    tpu.vector_store %arg10[%c56_392, %c0_393], %917 {strides = array<i32>} : memref<72x128xf32, #tpu.memory_space<vmem>>, vector<8x128xf32>,
    %c64_394 = arith.constant 64 : index
    %c0_395 = arith.constant 0 : index
    %930 = vector.load %arg10[%c64_394, %c0_395] : memref<72x128xf32, #tpu.memory_space<vmem>>, vector<8x128xf32>
    tpu.vector_store %arg10[%c64_394, %c0_395], %922 {strides = array<i32>} : memref<72x128xf32, #tpu.memory_space<vmem>>, vector<8x128xf32>,
    %c0_396 = arith.constant 0 : index
    %c0_397 = arith.constant 0 : index
    %931 = vector.load %arg6[%c0_396, %c0_397] : memref<8x72xf32, #tpu.memory_space<vmem>>, vector<8x72xf32>
    %c0_398 = arith.constant 0 : index
    %c0_399 = arith.constant 0 : index
    %932 = vector.load %arg10[%c0_398, %c0_399] : memref<72x128xf32, #tpu.memory_space<vmem>>, vector<72x128xf32>
    %cst_400 = arith.constant dense<0.000000e+00> : vector<8x128xf32>
    %933 = tpu.matmul %931, %932, %cst_400 {dimension_numbers = #tpu.dot_dimension_numbers<[1], [0], [0], [1], [0, 0, 1, 1], [], []>} : vector<8x72xf32>, vector<72x128xf32>, vector<8x128xf32> -> vector<8x128xf32>
    %cst_401 = arith.constant 5.000000e-01 : f32
    %934 = vector.broadcast %cst_401 : f32 to vector<8x128xf32>
    %935 = arith.mulf %934, %933 : vector<8x128xf32>
    %936 = math.tanh %935 : vector<8x128xf32>
    %937 = arith.mulf %935, %936 : vector<8x128xf32>
    %938 = arith.addf %937, %935 : vector<8x128xf32>
    %c0_402 = arith.constant 0 : index
    %c0_403 = arith.constant 0 : index
    %939 = vector.load %arg10[%c0_402, %c0_403] : memref<72x128xf32, #tpu.memory_space<vmem>>, vector<8x128xf32>
    tpu.vector_store %arg10[%c0_402, %c0_403], %938 {strides = array<i32>} : memref<72x128xf32, #tpu.memory_space<vmem>>, vector<8x128xf32>,
    %cst_404 = arith.constant 2.500000e+00 : f32
    %940 = vector.broadcast %cst_404 : f32 to vector<8x128xf32>
    %941 = arith.mulf %933, %940 : vector<8x128xf32>
    %cst_405 = arith.constant 5.500000e+00 : f32
    %942 = vector.broadcast %cst_405 : f32 to vector<8x128xf32>
    %943 = arith.addf %941, %942 : vector<8x128xf32>
    %944 = math.floor %943 : vector<8x128xf32>
    %cst_406 = arith.constant 0.000000e+00 : f32
    %945 = vector.broadcast %cst_406 : f32 to vector<8x128xf32>
    %946 = arith.cmpf oeq, %944, %945 : vector<8x128xf32>
    %cst_407 = arith.constant 1.000000e+00 : f32
    %cst_408 = arith.constant 0.000000e+00 : f32
    %947 = vector.broadcast %cst_407 : f32 to vector<8x128xf32>
    %948 = vector.broadcast %cst_408 : f32 to vector<8x128xf32>
    %949 = arith.select %946, %947, %948 : vector<8x128xi1>, vector<8x128xf32>
    %cst_409 = arith.constant 1.000000e+00 : f32
    %950 = vector.broadcast %cst_409 : f32 to vector<8x128xf32>
    %951 = arith.cmpf oeq, %944, %950 : vector<8x128xf32>
    %cst_410 = arith.constant 1.000000e+00 : f32
    %cst_411 = arith.constant 0.000000e+00 : f32
    %952 = vector.broadcast %cst_410 : f32 to vector<8x128xf32>
    %953 = vector.broadcast %cst_411 : f32 to vector<8x128xf32>
    %954 = arith.select %951, %952, %953 : vector<8x128xi1>, vector<8x128xf32>
    %cst_412 = arith.constant 2.000000e+00 : f32
    %955 = vector.broadcast %cst_412 : f32 to vector<8x128xf32>
    %956 = arith.cmpf oeq, %944, %955 : vector<8x128xf32>
    %cst_413 = arith.constant 1.000000e+00 : f32
    %cst_414 = arith.constant 0.000000e+00 : f32
    %957 = vector.broadcast %cst_413 : f32 to vector<8x128xf32>
    %958 = vector.broadcast %cst_414 : f32 to vector<8x128xf32>
    %959 = arith.select %956, %957, %958 : vector<8x128xi1>, vector<8x128xf32>
    %cst_415 = arith.constant 3.000000e+00 : f32
    %960 = vector.broadcast %cst_415 : f32 to vector<8x128xf32>
    %961 = arith.cmpf oeq, %944, %960 : vector<8x128xf32>
    %cst_416 = arith.constant 1.000000e+00 : f32
    %cst_417 = arith.constant 0.000000e+00 : f32
    %962 = vector.broadcast %cst_416 : f32 to vector<8x128xf32>
    %963 = vector.broadcast %cst_417 : f32 to vector<8x128xf32>
    %964 = arith.select %961, %962, %963 : vector<8x128xi1>, vector<8x128xf32>
    %cst_418 = arith.constant 4.000000e+00 : f32
    %965 = vector.broadcast %cst_418 : f32 to vector<8x128xf32>
    %966 = arith.cmpf oeq, %944, %965 : vector<8x128xf32>
    %cst_419 = arith.constant 1.000000e+00 : f32
    %cst_420 = arith.constant 0.000000e+00 : f32
    %967 = vector.broadcast %cst_419 : f32 to vector<8x128xf32>
    %968 = vector.broadcast %cst_420 : f32 to vector<8x128xf32>
    %969 = arith.select %966, %967, %968 : vector<8x128xi1>, vector<8x128xf32>
    %cst_421 = arith.constant 5.000000e+00 : f32
    %970 = vector.broadcast %cst_421 : f32 to vector<8x128xf32>
    %971 = arith.cmpf oeq, %944, %970 : vector<8x128xf32>
    %cst_422 = arith.constant 1.000000e+00 : f32
    %cst_423 = arith.constant 0.000000e+00 : f32
    %972 = vector.broadcast %cst_422 : f32 to vector<8x128xf32>
    %973 = vector.broadcast %cst_423 : f32 to vector<8x128xf32>
    %974 = arith.select %971, %972, %973 : vector<8x128xi1>, vector<8x128xf32>
    %cst_424 = arith.constant 6.000000e+00 : f32
    %975 = vector.broadcast %cst_424 : f32 to vector<8x128xf32>
    %976 = arith.cmpf oeq, %944, %975 : vector<8x128xf32>
    %cst_425 = arith.constant 1.000000e+00 : f32
    %cst_426 = arith.constant 0.000000e+00 : f32
    %977 = vector.broadcast %cst_425 : f32 to vector<8x128xf32>
    %978 = vector.broadcast %cst_426 : f32 to vector<8x128xf32>
    %979 = arith.select %976, %977, %978 : vector<8x128xi1>, vector<8x128xf32>
    %cst_427 = arith.constant 7.000000e+00 : f32
    %980 = vector.broadcast %cst_427 : f32 to vector<8x128xf32>
    %981 = arith.cmpf oeq, %944, %980 : vector<8x128xf32>
    %cst_428 = arith.constant 1.000000e+00 : f32
    %cst_429 = arith.constant 0.000000e+00 : f32
    %982 = vector.broadcast %cst_428 : f32 to vector<8x128xf32>
    %983 = vector.broadcast %cst_429 : f32 to vector<8x128xf32>
    %984 = arith.select %981, %982, %983 : vector<8x128xi1>, vector<8x128xf32>
    %cst_430 = arith.constant 8.000000e+00 : f32
    %985 = vector.broadcast %cst_430 : f32 to vector<8x128xf32>
    %986 = arith.cmpf oeq, %944, %985 : vector<8x128xf32>
    %cst_431 = arith.constant 1.000000e+00 : f32
    %cst_432 = arith.constant 0.000000e+00 : f32
    %987 = vector.broadcast %cst_431 : f32 to vector<8x128xf32>
    %988 = vector.broadcast %cst_432 : f32 to vector<8x128xf32>
    %989 = arith.select %986, %987, %988 : vector<8x128xi1>, vector<8x128xf32>
    %cst_433 = arith.constant 9.000000e+00 : f32
    %990 = vector.broadcast %cst_433 : f32 to vector<8x128xf32>
    %991 = arith.cmpf oeq, %944, %990 : vector<8x128xf32>
    %cst_434 = arith.constant 1.000000e+00 : f32
    %cst_435 = arith.constant 0.000000e+00 : f32
    %992 = vector.broadcast %cst_434 : f32 to vector<8x128xf32>
    %993 = vector.broadcast %cst_435 : f32 to vector<8x128xf32>
    %994 = arith.select %991, %992, %993 : vector<8x128xi1>, vector<8x128xf32>
    %cst_436 = arith.constant 1.000000e+01 : f32
    %995 = vector.broadcast %cst_436 : f32 to vector<8x128xf32>
    %996 = arith.cmpf oeq, %944, %995 : vector<8x128xf32>
    %cst_437 = arith.constant 1.000000e+00 : f32
    %cst_438 = arith.constant 0.000000e+00 : f32
    %997 = vector.broadcast %cst_437 : f32 to vector<8x128xf32>
    %998 = vector.broadcast %cst_438 : f32 to vector<8x128xf32>
    %999 = arith.select %996, %997, %998 : vector<8x128xi1>, vector<8x128xf32>
    %cst_439 = arith.constant 0.000000e+00 : f32
    %1000 = vector.broadcast %cst_439 : f32 to vector<8x128xf32>
    %1001 = arith.subf %943, %1000 : vector<8x128xf32>
    %cst_440 = arith.constant 1.000000e+00 : f32
    %1002 = vector.broadcast %cst_440 : f32 to vector<8x128xf32>
    %1003 = arith.subf %943, %1002 : vector<8x128xf32>
    %cst_441 = arith.constant 2.000000e+00 : f32
    %1004 = vector.broadcast %cst_441 : f32 to vector<8x128xf32>
    %1005 = arith.subf %943, %1004 : vector<8x128xf32>
    %cst_442 = arith.constant 3.000000e+00 : f32
    %1006 = vector.broadcast %cst_442 : f32 to vector<8x128xf32>
    %1007 = arith.subf %943, %1006 : vector<8x128xf32>
    %cst_443 = arith.constant 4.000000e+00 : f32
    %1008 = vector.broadcast %cst_443 : f32 to vector<8x128xf32>
    %1009 = arith.subf %943, %1008 : vector<8x128xf32>
    %cst_444 = arith.constant 5.000000e+00 : f32
    %1010 = vector.broadcast %cst_444 : f32 to vector<8x128xf32>
    %1011 = arith.subf %943, %1010 : vector<8x128xf32>
    %cst_445 = arith.constant 6.000000e+00 : f32
    %1012 = vector.broadcast %cst_445 : f32 to vector<8x128xf32>
    %1013 = arith.subf %943, %1012 : vector<8x128xf32>
    %cst_446 = arith.constant 7.000000e+00 : f32
    %1014 = vector.broadcast %cst_446 : f32 to vector<8x128xf32>
    %1015 = arith.subf %943, %1014 : vector<8x128xf32>
    %cst_447 = arith.constant 8.000000e+00 : f32
    %1016 = vector.broadcast %cst_447 : f32 to vector<8x128xf32>
    %1017 = arith.subf %943, %1016 : vector<8x128xf32>
    %cst_448 = arith.constant 9.000000e+00 : f32
    %1018 = vector.broadcast %cst_448 : f32 to vector<8x128xf32>
    %1019 = arith.subf %943, %1018 : vector<8x128xf32>
    %cst_449 = arith.constant 1.000000e+01 : f32
    %1020 = vector.broadcast %cst_449 : f32 to vector<8x128xf32>
    %1021 = arith.subf %943, %1020 : vector<8x128xf32>
    %1022 = arith.mulf %1001, %949 : vector<8x128xf32>
    %cst_450 = arith.constant 1.000000e+00 : f32
    %1023 = vector.broadcast %cst_450 : f32 to vector<8x128xf32>
    %1024 = arith.subf %1023, %1003 : vector<8x128xf32>
    %1025 = arith.mulf %1024, %954 : vector<8x128xf32>
    %1026 = arith.addf %1022, %1025 : vector<8x128xf32>
    %1027 = arith.mulf %1003, %954 : vector<8x128xf32>
    %cst_451 = arith.constant 1.000000e+00 : f32
    %1028 = vector.broadcast %cst_451 : f32 to vector<8x128xf32>
    %1029 = arith.subf %1028, %1005 : vector<8x128xf32>
    %1030 = arith.mulf %1029, %959 : vector<8x128xf32>
    %1031 = arith.addf %1027, %1030 : vector<8x128xf32>
    %1032 = arith.mulf %1005, %959 : vector<8x128xf32>
    %cst_452 = arith.constant 1.000000e+00 : f32
    %1033 = vector.broadcast %cst_452 : f32 to vector<8x128xf32>
    %1034 = arith.subf %1033, %1007 : vector<8x128xf32>
    %1035 = arith.mulf %1034, %964 : vector<8x128xf32>
    %1036 = arith.addf %1032, %1035 : vector<8x128xf32>
    %1037 = arith.mulf %1007, %964 : vector<8x128xf32>
    %cst_453 = arith.constant 1.000000e+00 : f32
    %1038 = vector.broadcast %cst_453 : f32 to vector<8x128xf32>
    %1039 = arith.subf %1038, %1009 : vector<8x128xf32>
    %1040 = arith.mulf %1039, %969 : vector<8x128xf32>
    %1041 = arith.addf %1037, %1040 : vector<8x128xf32>
    %1042 = arith.mulf %1009, %969 : vector<8x128xf32>
    %cst_454 = arith.constant 1.000000e+00 : f32
    %1043 = vector.broadcast %cst_454 : f32 to vector<8x128xf32>
    %1044 = arith.subf %1043, %1011 : vector<8x128xf32>
    %1045 = arith.mulf %1044, %974 : vector<8x128xf32>
    %1046 = arith.addf %1042, %1045 : vector<8x128xf32>
    %1047 = arith.mulf %1011, %974 : vector<8x128xf32>
    %cst_455 = arith.constant 1.000000e+00 : f32
    %1048 = vector.broadcast %cst_455 : f32 to vector<8x128xf32>
    %1049 = arith.subf %1048, %1013 : vector<8x128xf32>
    %1050 = arith.mulf %1049, %979 : vector<8x128xf32>
    %1051 = arith.addf %1047, %1050 : vector<8x128xf32>
    %1052 = arith.mulf %1013, %979 : vector<8x128xf32>
    %cst_456 = arith.constant 1.000000e+00 : f32
    %1053 = vector.broadcast %cst_456 : f32 to vector<8x128xf32>
    %1054 = arith.subf %1053, %1015 : vector<8x128xf32>
    %1055 = arith.mulf %1054, %984 : vector<8x128xf32>
    %1056 = arith.addf %1052, %1055 : vector<8x128xf32>
    %1057 = arith.mulf %1015, %984 : vector<8x128xf32>
    %cst_457 = arith.constant 1.000000e+00 : f32
    %1058 = vector.broadcast %cst_457 : f32 to vector<8x128xf32>
    %1059 = arith.subf %1058, %1017 : vector<8x128xf32>
    %1060 = arith.mulf %1059, %989 : vector<8x128xf32>
    %1061 = arith.addf %1057, %1060 : vector<8x128xf32>
    %1062 = arith.mulf %1017, %989 : vector<8x128xf32>
    %cst_458 = arith.constant 1.000000e+00 : f32
    %1063 = vector.broadcast %cst_458 : f32 to vector<8x128xf32>
    %1064 = arith.subf %1063, %1019 : vector<8x128xf32>
    %1065 = arith.mulf %1064, %994 : vector<8x128xf32>
    %1066 = arith.addf %1062, %1065 : vector<8x128xf32>
    %1067 = arith.mulf %1019, %994 : vector<8x128xf32>
    %cst_459 = arith.constant 1.000000e+00 : f32
    %1068 = vector.broadcast %cst_459 : f32 to vector<8x128xf32>
    %1069 = arith.subf %1068, %1021 : vector<8x128xf32>
    %1070 = arith.mulf %1069, %999 : vector<8x128xf32>
    %1071 = arith.addf %1067, %1070 : vector<8x128xf32>
    %cst_460 = arith.constant 0.000000e+00 : f32
    %1072 = vector.broadcast %cst_460 : f32 to vector<8x128xf32>
    %1073 = arith.subf %943, %1072 : vector<8x128xf32>
    %cst_461 = arith.constant 5.000000e-01 : f32
    %1074 = vector.broadcast %cst_461 : f32 to vector<8x128xf32>
    %1075 = arith.mulf %1073, %1074 : vector<8x128xf32>
    %cst_462 = arith.constant 1.000000e+00 : f32
    %1076 = vector.broadcast %cst_462 : f32 to vector<8x128xf32>
    %1077 = arith.subf %943, %1076 : vector<8x128xf32>
    %cst_463 = arith.constant 5.000000e-01 : f32
    %1078 = vector.broadcast %cst_463 : f32 to vector<8x128xf32>
    %1079 = arith.mulf %1077, %1078 : vector<8x128xf32>
    %cst_464 = arith.constant 2.000000e+00 : f32
    %1080 = vector.broadcast %cst_464 : f32 to vector<8x128xf32>
    %1081 = arith.subf %943, %1080 : vector<8x128xf32>
    %cst_465 = arith.constant 5.000000e-01 : f32
    %1082 = vector.broadcast %cst_465 : f32 to vector<8x128xf32>
    %1083 = arith.mulf %1081, %1082 : vector<8x128xf32>
    %cst_466 = arith.constant 3.000000e+00 : f32
    %1084 = vector.broadcast %cst_466 : f32 to vector<8x128xf32>
    %1085 = arith.subf %943, %1084 : vector<8x128xf32>
    %cst_467 = arith.constant 5.000000e-01 : f32
    %1086 = vector.broadcast %cst_467 : f32 to vector<8x128xf32>
    %1087 = arith.mulf %1085, %1086 : vector<8x128xf32>
    %cst_468 = arith.constant 4.000000e+00 : f32
    %1088 = vector.broadcast %cst_468 : f32 to vector<8x128xf32>
    %1089 = arith.subf %943, %1088 : vector<8x128xf32>
    %cst_469 = arith.constant 5.000000e-01 : f32
    %1090 = vector.broadcast %cst_469 : f32 to vector<8x128xf32>
    %1091 = arith.mulf %1089, %1090 : vector<8x128xf32>
    %cst_470 = arith.constant 5.000000e+00 : f32
    %1092 = vector.broadcast %cst_470 : f32 to vector<8x128xf32>
    %1093 = arith.subf %943, %1092 : vector<8x128xf32>
    %cst_471 = arith.constant 5.000000e-01 : f32
    %1094 = vector.broadcast %cst_471 : f32 to vector<8x128xf32>
    %1095 = arith.mulf %1093, %1094 : vector<8x128xf32>
    %cst_472 = arith.constant 6.000000e+00 : f32
    %1096 = vector.broadcast %cst_472 : f32 to vector<8x128xf32>
    %1097 = arith.subf %943, %1096 : vector<8x128xf32>
    %cst_473 = arith.constant 5.000000e-01 : f32
    %1098 = vector.broadcast %cst_473 : f32 to vector<8x128xf32>
    %1099 = arith.mulf %1097, %1098 : vector<8x128xf32>
    %cst_474 = arith.constant 7.000000e+00 : f32
    %1100 = vector.broadcast %cst_474 : f32 to vector<8x128xf32>
    %1101 = arith.subf %943, %1100 : vector<8x128xf32>
    %cst_475 = arith.constant 5.000000e-01 : f32
    %1102 = vector.broadcast %cst_475 : f32 to vector<8x128xf32>
    %1103 = arith.mulf %1101, %1102 : vector<8x128xf32>
    %cst_476 = arith.constant 8.000000e+00 : f32
    %1104 = vector.broadcast %cst_476 : f32 to vector<8x128xf32>
    %1105 = arith.subf %943, %1104 : vector<8x128xf32>
    %cst_477 = arith.constant 5.000000e-01 : f32
    %1106 = vector.broadcast %cst_477 : f32 to vector<8x128xf32>
    %1107 = arith.mulf %1105, %1106 : vector<8x128xf32>
    %cst_478 = arith.constant 9.000000e+00 : f32
    %1108 = vector.broadcast %cst_478 : f32 to vector<8x128xf32>
    %1109 = arith.subf %943, %1108 : vector<8x128xf32>
    %cst_479 = arith.constant 5.000000e-01 : f32
    %1110 = vector.broadcast %cst_479 : f32 to vector<8x128xf32>
    %1111 = arith.mulf %1109, %1110 : vector<8x128xf32>
    %1112 = arith.mulf %1075, %1026 : vector<8x128xf32>
    %cst_480 = arith.constant 1.000000e+00 : f32
    %1113 = vector.broadcast %cst_480 : f32 to vector<8x128xf32>
    %1114 = arith.subf %1113, %1079 : vector<8x128xf32>
    %1115 = arith.mulf %1114, %1031 : vector<8x128xf32>
    %1116 = arith.addf %1112, %1115 : vector<8x128xf32>
    %1117 = arith.mulf %1079, %1031 : vector<8x128xf32>
    %cst_481 = arith.constant 1.000000e+00 : f32
    %1118 = vector.broadcast %cst_481 : f32 to vector<8x128xf32>
    %1119 = arith.subf %1118, %1083 : vector<8x128xf32>
    %1120 = arith.mulf %1119, %1036 : vector<8x128xf32>
    %1121 = arith.addf %1117, %1120 : vector<8x128xf32>
    %1122 = arith.mulf %1083, %1036 : vector<8x128xf32>
    %cst_482 = arith.constant 1.000000e+00 : f32
    %1123 = vector.broadcast %cst_482 : f32 to vector<8x128xf32>
    %1124 = arith.subf %1123, %1087 : vector<8x128xf32>
    %1125 = arith.mulf %1124, %1041 : vector<8x128xf32>
    %1126 = arith.addf %1122, %1125 : vector<8x128xf32>
    %1127 = arith.mulf %1087, %1041 : vector<8x128xf32>
    %cst_483 = arith.constant 1.000000e+00 : f32
    %1128 = vector.broadcast %cst_483 : f32 to vector<8x128xf32>
    %1129 = arith.subf %1128, %1091 : vector<8x128xf32>
    %1130 = arith.mulf %1129, %1046 : vector<8x128xf32>
    %1131 = arith.addf %1127, %1130 : vector<8x128xf32>
    %1132 = arith.mulf %1091, %1046 : vector<8x128xf32>
    %cst_484 = arith.constant 1.000000e+00 : f32
    %1133 = vector.broadcast %cst_484 : f32 to vector<8x128xf32>
    %1134 = arith.subf %1133, %1095 : vector<8x128xf32>
    %1135 = arith.mulf %1134, %1051 : vector<8x128xf32>
    %1136 = arith.addf %1132, %1135 : vector<8x128xf32>
    %1137 = arith.mulf %1095, %1051 : vector<8x128xf32>
    %cst_485 = arith.constant 1.000000e+00 : f32
    %1138 = vector.broadcast %cst_485 : f32 to vector<8x128xf32>
    %1139 = arith.subf %1138, %1099 : vector<8x128xf32>
    %1140 = arith.mulf %1139, %1056 : vector<8x128xf32>
    %1141 = arith.addf %1137, %1140 : vector<8x128xf32>
    %1142 = arith.mulf %1099, %1056 : vector<8x128xf32>
    %cst_486 = arith.constant 1.000000e+00 : f32
    %1143 = vector.broadcast %cst_486 : f32 to vector<8x128xf32>
    %1144 = arith.subf %1143, %1103 : vector<8x128xf32>
    %1145 = arith.mulf %1144, %1061 : vector<8x128xf32>
    %1146 = arith.addf %1142, %1145 : vector<8x128xf32>
    %1147 = arith.mulf %1103, %1061 : vector<8x128xf32>
    %cst_487 = arith.constant 1.000000e+00 : f32
    %1148 = vector.broadcast %cst_487 : f32 to vector<8x128xf32>
    %1149 = arith.subf %1148, %1107 : vector<8x128xf32>
    %1150 = arith.mulf %1149, %1066 : vector<8x128xf32>
    %1151 = arith.addf %1147, %1150 : vector<8x128xf32>
    %1152 = arith.mulf %1107, %1066 : vector<8x128xf32>
    %cst_488 = arith.constant 1.000000e+00 : f32
    %1153 = vector.broadcast %cst_488 : f32 to vector<8x128xf32>
    %1154 = arith.subf %1153, %1111 : vector<8x128xf32>
    %1155 = arith.mulf %1154, %1071 : vector<8x128xf32>
    %1156 = arith.addf %1152, %1155 : vector<8x128xf32>
    %cst_489 = arith.constant 0.000000e+00 : f32
    %1157 = vector.broadcast %cst_489 : f32 to vector<8x128xf32>
    %1158 = arith.subf %943, %1157 : vector<8x128xf32>
    %cst_490 = arith.constant 0.333333343 : f32
    %1159 = vector.broadcast %cst_490 : f32 to vector<8x128xf32>
    %1160 = arith.mulf %1158, %1159 : vector<8x128xf32>
    %cst_491 = arith.constant 1.000000e+00 : f32
    %1161 = vector.broadcast %cst_491 : f32 to vector<8x128xf32>
    %1162 = arith.subf %943, %1161 : vector<8x128xf32>
    %cst_492 = arith.constant 0.333333343 : f32
    %1163 = vector.broadcast %cst_492 : f32 to vector<8x128xf32>
    %1164 = arith.mulf %1162, %1163 : vector<8x128xf32>
    %cst_493 = arith.constant 2.000000e+00 : f32
    %1165 = vector.broadcast %cst_493 : f32 to vector<8x128xf32>
    %1166 = arith.subf %943, %1165 : vector<8x128xf32>
    %cst_494 = arith.constant 0.333333343 : f32
    %1167 = vector.broadcast %cst_494 : f32 to vector<8x128xf32>
    %1168 = arith.mulf %1166, %1167 : vector<8x128xf32>
    %cst_495 = arith.constant 3.000000e+00 : f32
    %1169 = vector.broadcast %cst_495 : f32 to vector<8x128xf32>
    %1170 = arith.subf %943, %1169 : vector<8x128xf32>
    %cst_496 = arith.constant 0.333333343 : f32
    %1171 = vector.broadcast %cst_496 : f32 to vector<8x128xf32>
    %1172 = arith.mulf %1170, %1171 : vector<8x128xf32>
    %cst_497 = arith.constant 4.000000e+00 : f32
    %1173 = vector.broadcast %cst_497 : f32 to vector<8x128xf32>
    %1174 = arith.subf %943, %1173 : vector<8x128xf32>
    %cst_498 = arith.constant 0.333333343 : f32
    %1175 = vector.broadcast %cst_498 : f32 to vector<8x128xf32>
    %1176 = arith.mulf %1174, %1175 : vector<8x128xf32>
    %cst_499 = arith.constant 5.000000e+00 : f32
    %1177 = vector.broadcast %cst_499 : f32 to vector<8x128xf32>
    %1178 = arith.subf %943, %1177 : vector<8x128xf32>
    %cst_500 = arith.constant 0.333333343 : f32
    %1179 = vector.broadcast %cst_500 : f32 to vector<8x128xf32>
    %1180 = arith.mulf %1178, %1179 : vector<8x128xf32>
    %cst_501 = arith.constant 6.000000e+00 : f32
    %1181 = vector.broadcast %cst_501 : f32 to vector<8x128xf32>
    %1182 = arith.subf %943, %1181 : vector<8x128xf32>
    %cst_502 = arith.constant 0.333333343 : f32
    %1183 = vector.broadcast %cst_502 : f32 to vector<8x128xf32>
    %1184 = arith.mulf %1182, %1183 : vector<8x128xf32>
    %cst_503 = arith.constant 7.000000e+00 : f32
    %1185 = vector.broadcast %cst_503 : f32 to vector<8x128xf32>
    %1186 = arith.subf %943, %1185 : vector<8x128xf32>
    %cst_504 = arith.constant 0.333333343 : f32
    %1187 = vector.broadcast %cst_504 : f32 to vector<8x128xf32>
    %1188 = arith.mulf %1186, %1187 : vector<8x128xf32>
    %cst_505 = arith.constant 8.000000e+00 : f32
    %1189 = vector.broadcast %cst_505 : f32 to vector<8x128xf32>
    %1190 = arith.subf %943, %1189 : vector<8x128xf32>
    %cst_506 = arith.constant 0.333333343 : f32
    %1191 = vector.broadcast %cst_506 : f32 to vector<8x128xf32>
    %1192 = arith.mulf %1190, %1191 : vector<8x128xf32>
    %1193 = arith.mulf %1160, %1116 : vector<8x128xf32>
    %cst_507 = arith.constant 1.000000e+00 : f32
    %1194 = vector.broadcast %cst_507 : f32 to vector<8x128xf32>
    %1195 = arith.subf %1194, %1164 : vector<8x128xf32>
    %1196 = arith.mulf %1195, %1121 : vector<8x128xf32>
    %1197 = arith.addf %1193, %1196 : vector<8x128xf32>
    %1198 = arith.mulf %1164, %1121 : vector<8x128xf32>
    %cst_508 = arith.constant 1.000000e+00 : f32
    %1199 = vector.broadcast %cst_508 : f32 to vector<8x128xf32>
    %1200 = arith.subf %1199, %1168 : vector<8x128xf32>
    %1201 = arith.mulf %1200, %1126 : vector<8x128xf32>
    %1202 = arith.addf %1198, %1201 : vector<8x128xf32>
    %1203 = arith.mulf %1168, %1126 : vector<8x128xf32>
    %cst_509 = arith.constant 1.000000e+00 : f32
    %1204 = vector.broadcast %cst_509 : f32 to vector<8x128xf32>
    %1205 = arith.subf %1204, %1172 : vector<8x128xf32>
    %1206 = arith.mulf %1205, %1131 : vector<8x128xf32>
    %1207 = arith.addf %1203, %1206 : vector<8x128xf32>
    %1208 = arith.mulf %1172, %1131 : vector<8x128xf32>
    %cst_510 = arith.constant 1.000000e+00 : f32
    %1209 = vector.broadcast %cst_510 : f32 to vector<8x128xf32>
    %1210 = arith.subf %1209, %1176 : vector<8x128xf32>
    %1211 = arith.mulf %1210, %1136 : vector<8x128xf32>
    %1212 = arith.addf %1208, %1211 : vector<8x128xf32>
    %1213 = arith.mulf %1176, %1136 : vector<8x128xf32>
    %cst_511 = arith.constant 1.000000e+00 : f32
    %1214 = vector.broadcast %cst_511 : f32 to vector<8x128xf32>
    %1215 = arith.subf %1214, %1180 : vector<8x128xf32>
    %1216 = arith.mulf %1215, %1141 : vector<8x128xf32>
    %1217 = arith.addf %1213, %1216 : vector<8x128xf32>
    %1218 = arith.mulf %1180, %1141 : vector<8x128xf32>
    %cst_512 = arith.constant 1.000000e+00 : f32
    %1219 = vector.broadcast %cst_512 : f32 to vector<8x128xf32>
    %1220 = arith.subf %1219, %1184 : vector<8x128xf32>
    %1221 = arith.mulf %1220, %1146 : vector<8x128xf32>
    %1222 = arith.addf %1218, %1221 : vector<8x128xf32>
    %1223 = arith.mulf %1184, %1146 : vector<8x128xf32>
    %cst_513 = arith.constant 1.000000e+00 : f32
    %1224 = vector.broadcast %cst_513 : f32 to vector<8x128xf32>
    %1225 = arith.subf %1224, %1188 : vector<8x128xf32>
    %1226 = arith.mulf %1225, %1151 : vector<8x128xf32>
    %1227 = arith.addf %1223, %1226 : vector<8x128xf32>
    %1228 = arith.mulf %1188, %1151 : vector<8x128xf32>
    %cst_514 = arith.constant 1.000000e+00 : f32
    %1229 = vector.broadcast %cst_514 : f32 to vector<8x128xf32>
    %1230 = arith.subf %1229, %1192 : vector<8x128xf32>
    %1231 = arith.mulf %1230, %1156 : vector<8x128xf32>
    %1232 = arith.addf %1228, %1231 : vector<8x128xf32>
    %c8_515 = arith.constant 8 : index
    %c0_516 = arith.constant 0 : index
    %1233 = vector.load %arg10[%c8_515, %c0_516] : memref<72x128xf32, #tpu.memory_space<vmem>>, vector<8x128xf32>
    tpu.vector_store %arg10[%c8_515, %c0_516], %1197 {strides = array<i32>} : memref<72x128xf32, #tpu.memory_space<vmem>>, vector<8x128xf32>,
    %c16_517 = arith.constant 16 : index
    %c0_518 = arith.constant 0 : index
    %1234 = vector.load %arg10[%c16_517, %c0_518] : memref<72x128xf32, #tpu.memory_space<vmem>>, vector<8x128xf32>
    tpu.vector_store %arg10[%c16_517, %c0_518], %1202 {strides = array<i32>} : memref<72x128xf32, #tpu.memory_space<vmem>>, vector<8x128xf32>,
    %c24_519 = arith.constant 24 : index
    %c0_520 = arith.constant 0 : index
    %1235 = vector.load %arg10[%c24_519, %c0_520] : memref<72x128xf32, #tpu.memory_space<vmem>>, vector<8x128xf32>
    tpu.vector_store %arg10[%c24_519, %c0_520], %1207 {strides = array<i32>} : memref<72x128xf32, #tpu.memory_space<vmem>>, vector<8x128xf32>,
    %c32_521 = arith.constant 32 : index
    %c0_522 = arith.constant 0 : index
    %1236 = vector.load %arg10[%c32_521, %c0_522] : memref<72x128xf32, #tpu.memory_space<vmem>>, vector<8x128xf32>
    tpu.vector_store %arg10[%c32_521, %c0_522], %1212 {strides = array<i32>} : memref<72x128xf32, #tpu.memory_space<vmem>>, vector<8x128xf32>,
    %c40_523 = arith.constant 40 : index
    %c0_524 = arith.constant 0 : index
    %1237 = vector.load %arg10[%c40_523, %c0_524] : memref<72x128xf32, #tpu.memory_space<vmem>>, vector<8x128xf32>
    tpu.vector_store %arg10[%c40_523, %c0_524], %1217 {strides = array<i32>} : memref<72x128xf32, #tpu.memory_space<vmem>>, vector<8x128xf32>,
    %c48_525 = arith.constant 48 : index
    %c0_526 = arith.constant 0 : index
    %1238 = vector.load %arg10[%c48_525, %c0_526] : memref<72x128xf32, #tpu.memory_space<vmem>>, vector<8x128xf32>
    tpu.vector_store %arg10[%c48_525, %c0_526], %1222 {strides = array<i32>} : memref<72x128xf32, #tpu.memory_space<vmem>>, vector<8x128xf32>,
    %c56_527 = arith.constant 56 : index
    %c0_528 = arith.constant 0 : index
    %1239 = vector.load %arg10[%c56_527, %c0_528] : memref<72x128xf32, #tpu.memory_space<vmem>>, vector<8x128xf32>
    tpu.vector_store %arg10[%c56_527, %c0_528], %1227 {strides = array<i32>} : memref<72x128xf32, #tpu.memory_space<vmem>>, vector<8x128xf32>,
    %c64_529 = arith.constant 64 : index
    %c0_530 = arith.constant 0 : index
    %1240 = vector.load %arg10[%c64_529, %c0_530] : memref<72x128xf32, #tpu.memory_space<vmem>>, vector<8x128xf32>
    tpu.vector_store %arg10[%c64_529, %c0_530], %1232 {strides = array<i32>} : memref<72x128xf32, #tpu.memory_space<vmem>>, vector<8x128xf32>,
    %c0_531 = arith.constant 0 : index
    %c0_532 = arith.constant 0 : index
    %1241 = vector.load %arg7[%c0_531, %c0_532] : memref<8x72xf32, #tpu.memory_space<vmem>>, vector<8x72xf32>
    %c0_533 = arith.constant 0 : index
    %c0_534 = arith.constant 0 : index
    %1242 = vector.load %arg10[%c0_533, %c0_534] : memref<72x128xf32, #tpu.memory_space<vmem>>, vector<72x128xf32>
    %cst_535 = arith.constant dense<0.000000e+00> : vector<8x128xf32>
    %1243 = tpu.matmul %1241, %1242, %cst_535 {dimension_numbers = #tpu.dot_dimension_numbers<[1], [0], [0], [1], [0, 0, 1, 1], [], []>} : vector<8x72xf32>, vector<72x128xf32>, vector<8x128xf32> -> vector<8x128xf32>
    %c0_536 = arith.constant 0 : index
    %c0_537 = arith.constant 0 : index
    %1244 = vector.load %arg3[%c0_536, %c0_537] : memref<8x128xf32, #tpu.memory_space<vmem>>, vector<8x128xf32>
    %1245 = arith.addf %1244, %1243 : vector<8x128xf32>
    %c0_538 = arith.constant 0 : index
    %c0_539 = arith.constant 0 : index
    %1246 = vector.load %arg9[%c0_538, %c0_539] : memref<8x128xf32, #tpu.memory_space<vmem>>, vector<8x128xf32>
    tpu.vector_store %arg9[%c0_538, %c0_539], %1245 {strides = array<i32>} : memref<8x128xf32, #tpu.memory_space<vmem>>, vector<8x128xf32>,
    return
  }
  func.func @transform_0(%arg0: i32) -> (i32, i32) {
    %c0_i32 = arith.constant 0 : i32
    %c0_i32_0 = arith.constant 0 : i32
    return %c0_i32, %arg0 : i32, i32
  }
  func.func @transform_1(%arg0: i32) -> (i32, i32) {
    %c0_i32 = arith.constant 0 : i32
    %c0_i32_0 = arith.constant 0 : i32
    return %c0_i32, %arg0 : i32, i32
  }
  func.func @transform_2(%arg0: i32) -> (i32, i32) {
    %c0_i32 = arith.constant 0 : i32
    %c0_i32_0 = arith.constant 0 : i32
    return %c0_i32, %arg0 : i32, i32
  }
  func.func @transform_3(%arg0: i32) -> (i32, i32) {
    %c0_i32 = arith.constant 0 : i32
    %c0_i32_0 = arith.constant 0 : i32
    %c0_i32_1 = arith.constant 0 : i32
    return %c0_i32, %c0_i32_0 : i32, i32
  }
  func.func @transform_4(%arg0: i32) -> (i32, i32) {
    %c0_i32 = arith.constant 0 : i32
    %c0_i32_0 = arith.constant 0 : i32
    %c0_i32_1 = arith.constant 0 : i32
    return %c0_i32, %c0_i32_0 : i32, i32
  }
  func.func @transform_5(%arg0: i32) -> (i32, i32) {
    %c0_i32 = arith.constant 0 : i32
    %c0_i32_0 = arith.constant 0 : i32
    %c0_i32_1 = arith.constant 0 : i32
    return %c0_i32, %c0_i32_0 : i32, i32
  }
  func.func @transform_6(%arg0: i32) -> (i32, i32) {
    %c0_i32 = arith.constant 0 : i32
    %c0_i32_0 = arith.constant 0 : i32
    %c0_i32_1 = arith.constant 0 : i32
    return %c0_i32, %c0_i32_0 : i32, i32
  }
  func.func @transform_7(%arg0: i32) -> (i32, i32) {
    %c0_i32 = arith.constant 0 : i32
    %c0_i32_0 = arith.constant 0 : i32
    return %c0_i32, %arg0 : i32, i32
  }
  func.func @transform_8(%arg0: i32) -> (i32, i32) {
    %c0_i32 = arith.constant 0 : i32
    %c0_i32_0 = arith.constant 0 : i32
    return %c0_i32, %arg0 : i32, i32
  }
}

</mosaic_0001>

<llo_original>
// kernel: tpu_custom_call.1
$region0: #{tpu_custom_call.1}
  #allocation0 [shape = 'u32[]', space=smem, size = 0x4, offset = 0x4, fixed_abs, tag = 'smem constant byte address 0x4 - core index']
  #allocation1 [shape = 'u32[72,128]{1,0:T(1,128)}', space=vmem, size = 0x9000, scoped, tag = 'internal scratch']
  #allocation2 [shape = 'f32[72,128]{1,0:T(8,128)}', space=vmem, size = 0x9000, scoped, tag = 'scratch operand']
  %s0 = inlined_call_operand.hbm [shape: f32[8,128], index: 0, kind: input, shape index: {}]
  %s1 = inlined_call_operand.hbm [shape: f32[8,128], index: 1, kind: input, shape index: {}]
  %s2 = inlined_call_operand.hbm [shape: f32[8,128], index: 2, kind: input, shape index: {}]
  %s3 = inlined_call_operand.hbm [shape: f32[8,72], index: 3, kind: input, shape index: {}]
  %s4 = inlined_call_operand.hbm [shape: f32[8,72], index: 4, kind: input, shape index: {}]
  %s5 = inlined_call_operand.hbm [shape: f32[8,72], index: 5, kind: input, shape index: {}]
  %s6 = inlined_call_operand.hbm [shape: f32[8,72], index: 6, kind: input, shape index: {}]
  %s7 = inlined_call_operand.hbm [shape: f32[8,128], index: 7, kind: output, shape index: {0}]
  %s8 = inlined_call_operand.hbm [shape: f32[8,128], index: 8, kind: output, shape index: {1}]
  %9 = xla_tuple %s7, %s8
  %s10 = sld [smem:[#allocation0]]
  $region74: #{tpu_custom_call.1} parent=0
    _
  %s12 = ssub.s32 1, %s10
  %s13 = scalar_select 0, %s12, %s10
  $region1: #{tpu_custom_call.1} parent=0
    #allocation3 [shape = 'u8[4096]{0}', space=vmem, size = 0x1000, scoped, tag = 'input window, operand 0, single buffered']
    #allocation4 [shape = 's32[1]{0}', space=sflag, size = 0x4, scoped, tag = 'scoped memory for tpu_custom_call.1']
    #allocation5 [shape = 's32[1]{0}', space=sflag, size = 0x4, scoped, tag = 'scoped memory for tpu_custom_call.1']
    #allocation6 [shape = 'u8[4096]{0}', space=vmem, size = 0x1000, scoped, tag = 'input window, operand 1, single buffered']
    #allocation7 [shape = 's32[1]{0}', space=sflag, size = 0x4, scoped, tag = 'scoped memory for tpu_custom_call.1']
    #allocation8 [shape = 'u8[4096]{0}', space=vmem, size = 0x1000, scoped, tag = 'input window, operand 2, single buffered']
    #allocation9 [shape = 'u8[4096]{0}', space=vmem, size = 0x1000, scoped, tag = 'input window, operand 3, single buffered']
    #allocation10 [shape = 's32[1]{0}', space=sflag, size = 0x4, scoped, tag = 'scoped memory for tpu_custom_call.1']
    #allocation11 [shape = 'u8[4096]{0}', space=vmem, size = 0x1000, scoped, tag = 'input window, operand 4, single buffered']
    #allocation12 [shape = 'u8[4096]{0}', space=vmem, size = 0x1000, scoped, tag = 'input window, operand 5, single buffered']
    #allocation13 [shape = 's32[1]{0}', space=sflag, size = 0x4, scoped, tag = 'scoped memory for tpu_custom_call.1']
    #allocation14 [shape = 'u8[4096]{0}', space=vmem, size = 0x1000, scoped, tag = 'input window, operand 6, single buffered']
    #allocation15 [shape = 'u8[4096]{0}', space=vmem, size = 0x1000, scoped, tag = 'output window, operand 0, single buffered']
    #allocation16 [shape = 'u8[4096]{0}', space=vmem, size = 0x1000, scoped, tag = 'output window, operand 1, single buffered']
    #allocation17 [shape = 's32[1]{0}', space=sflag, size = 0x4, scoped, tag = 'scoped memory for tpu_custom_call.1']
    %14 = vsyncpa [#allocation4], 0
    %15 = vsyncpa [#allocation7], 0
    %16 = vsyncpa [#allocation10], 0
    %17 = vsyncpa [#allocation13], 0
    %18 = vsyncpa [#allocation5], 0
    %19 = vsyncpa [#allocation17], 0
    // Predicated region
    $region2: #{tpu_custom_call.1} parent=1 // pred_check
      _
    $region3: #{tpu_custom_call.1} parent=1 // pred_check_branch
      %21 = sbr.rel (0) target = $region5
    $region4: #{tpu_custom_call.1} parent=1 // pred_region
      %23 = vsyncadd [#allocation4], 0
      %s25 = sshll.u32 %s0, 4
      %s26 = int_to_ptr.hbm [resolvable:$true] %s25
      %s27 = sshll.u32 [#allocation3], 4
      %s28 = int_to_ptr.vmem [resolvable:$true] %s27
      %30 = dma.hbm_to_vmem [thread:$0]  %s26, 128, %s28, [#allocation4]
    $region5: #{tpu_custom_call.1} parent=1 // pred_fallthru
      _
    // Predicated region
    $region6: #{tpu_custom_call.1} parent=1 // pred_check
      _
    $region7: #{tpu_custom_call.1} parent=1 // pred_check_branch
      %32 = sbr.rel (0) target = $region9
    $region8: #{tpu_custom_call.1} parent=1 // pred_region
      %34 = vsyncadd [#allocation7], 0
      %s36 = sshll.u32 %s1, 4
      %s37 = int_to_ptr.hbm [resolvable:$true] %s36
      %s38 = sshll.u32 [#allocation6], 4
      %s39 = int_to_ptr.vmem [resolvable:$true] %s38
      %41 = dma.hbm_to_vmem [thread:$0]  %s37, 128, %s39, [#allocation7]
    $region9: #{tpu_custom_call.1} parent=1 // pred_fallthru
      _
    // Predicated region
    $region10: #{tpu_custom_call.1} parent=1 // pred_check
      _
    $region11: #{tpu_custom_call.1} parent=1 // pred_check_branch
      %43 = sbr.rel (0) target = $region13
    $region12: #{tpu_custom_call.1} parent=1 // pred_region
      %45 = vsyncadd [#allocation7], 0
      %s47 = sshll.u32 %s2, 4
      %s48 = int_to_ptr.hbm [resolvable:$true] %s47
      %s49 = sshll.u32 [#allocation8], 4
      %s50 = int_to_ptr.vmem [resolvable:$true] %s49
      %52 = dma.hbm_to_vmem [thread:$0]  %s48, 128, %s50, [#allocation7]
    $region13: #{tpu_custom_call.1} parent=1 // pred_fallthru
      _
    // Predicated region
    $region14: #{tpu_custom_call.1} parent=1 // pred_check
      _
    $region15: #{tpu_custom_call.1} parent=1 // pred_check_branch
      %54 = sbr.rel (0) target = $region17
    $region16: #{tpu_custom_call.1} parent=1 // pred_region
      %56 = vsyncadd [#allocation10], 0
      %s58 = sshll.u32 %s3, 4
      %s59 = int_to_ptr.hbm [resolvable:$true] %s58
      %s60 = sshll.u32 [#allocation9], 4
      %s61 = int_to_ptr.vmem [resolvable:$true] %s60
      %63 = dma.hbm_to_vmem [thread:$0]  %s59, 128, %s61, [#allocation10]
    $region17: #{tpu_custom_call.1} parent=1 // pred_fallthru
      _
    // Predicated region
    $region18: #{tpu_custom_call.1} parent=1 // pred_check
      _
    $region19: #{tpu_custom_call.1} parent=1 // pred_check_branch
      %65 = sbr.rel (0) target = $region21
    $region20: #{tpu_custom_call.1} parent=1 // pred_region
      %67 = vsyncadd [#allocation10], 0
      %s69 = sshll.u32 %s4, 4
      %s70 = int_to_ptr.hbm [resolvable:$true] %s69
      %s71 = sshll.u32 [#allocation11], 4
      %s72 = int_to_ptr.vmem [resolvable:$true] %s71
      %74 = dma.hbm_to_vmem [thread:$0]  %s70, 128, %s72, [#allocation10]
    $region21: #{tpu_custom_call.1} parent=1 // pred_fallthru
      _
    // Predicated region
    $region22: #{tpu_custom_call.1} parent=1 // pred_check
      _
    $region23: #{tpu_custom_call.1} parent=1 // pred_check_branch
      %76 = sbr.rel (0) target = $region25
    $region24: #{tpu_custom_call.1} parent=1 // pred_region
      %78 = vsyncadd [#allocation13], 0
      %s80 = sshll.u32 %s5, 4
      %s81 = int_to_ptr.hbm [resolvable:$true] %s80
      %s82 = sshll.u32 [#allocation12], 4
      %s83 = int_to_ptr.vmem [resolvable:$true] %s82
      %85 = dma.hbm_to_vmem [thread:$0]  %s81, 128, %s83, [#allocation13]
    $region25: #{tpu_custom_call.1} parent=1 // pred_fallthru
      _
    // Predicated region
    $region26: #{tpu_custom_call.1} parent=1 // pred_check
      _
    $region27: #{tpu_custom_call.1} parent=1 // pred_check_branch
      %87 = sbr.rel (0) target = $region29
    $region28: #{tpu_custom_call.1} parent=1 // pred_region
      %89 = vsyncadd [#allocation13], 0
      %s91 = sshll.u32 %s6, 4
      %s92 = int_to_ptr.hbm [resolvable:$true] %s91
      %s93 = sshll.u32 [#allocation14], 4
      %s94 = int_to_ptr.vmem [resolvable:$true] %s93
      %96 = dma.hbm_to_vmem [thread:$0]  %s92, 128, %s94, [#allocation13]
    $region29: #{tpu_custom_call.1} parent=1 // pred_fallthru
      _
    // Predicated region
    $region30: #{tpu_custom_call.1} parent=1 // pred_check
      _
    $region31: #{tpu_custom_call.1} parent=1 // pred_check_branch
      %98 = sbr.rel (0) target = $region33
    $region32: #{tpu_custom_call.1} parent=1 // pred_region
      %100 = dma.done [#allocation4], 128
    $region33: #{tpu_custom_call.1} parent=1 // pred_fallthru
      _
    // Predicated region
    $region34: #{tpu_custom_call.1} parent=1 // pred_check
      _
    $region35: #{tpu_custom_call.1} parent=1 // pred_check_branch
      %102 = sbr.rel (0) target = $region37
    $region36: #{tpu_custom_call.1} parent=1 // pred_region
      %104 = dma.done [#allocation7], 128
    $region37: #{tpu_custom_call.1} parent=1 // pred_fallthru
      _
    // Predicated region
    $region38: #{tpu_custom_call.1} parent=1 // pred_check
      _
    $region39: #{tpu_custom_call.1} parent=1 // pred_check_branch
      %106 = sbr.rel (0) target = $region41
    $region40: #{tpu_custom_call.1} parent=1 // pred_region
      %108 = dma.done [#allocation7], 128
    $region41: #{tpu_custom_call.1} parent=1 // pred_fallthru
      _
    // Predicated region
    $region42: #{tpu_custom_call.1} parent=1 // pred_check
      _
    $region43: #{tpu_custom_call.1} parent=1 // pred_check_branch
      %110 = sbr.rel (0) target = $region45
    $region44: #{tpu_custom_call.1} parent=1 // pred_region
      %112 = dma.done [#allocation10], 128
    $region45: #{tpu_custom_call.1} parent=1 // pred_fallthru
      _
    // Predicated region
    $region46: #{tpu_custom_call.1} parent=1 // pred_check
      _
    $region47: #{tpu_custom_call.1} parent=1 // pred_check_branch
      %114 = sbr.rel (0) target = $region49
    $region48: #{tpu_custom_call.1} parent=1 // pred_region
      %116 = dma.done [#allocation10], 128
    $region49: #{tpu_custom_call.1} parent=1 // pred_fallthru
      _
    // Predicated region
    $region50: #{tpu_custom_call.1} parent=1 // pred_check
      _
    $region51: #{tpu_custom_call.1} parent=1 // pred_check_branch
      %118 = sbr.rel (0) target = $region53
    $region52: #{tpu_custom_call.1} parent=1 // pred_region
      %120 = dma.done [#allocation13], 128
    $region53: #{tpu_custom_call.1} parent=1 // pred_fallthru
      _
    // Predicated region
    $region54: #{tpu_custom_call.1} parent=1 // pred_check
      _
    $region55: #{tpu_custom_call.1} parent=1 // pred_check_branch
      %122 = sbr.rel (0) target = $region57
    $region56: #{tpu_custom_call.1} parent=1 // pred_region
      %124 = dma.done [#allocation13], 128
    $region57: #{tpu_custom_call.1} parent=1 // pred_fallthru
      _
    %v125 = vld [vmem:[#allocation3] sm:$0xff]
    %v126 = vmul.f32 %v125, 0.5
    %v127 = vtanh.pop %v126
    %v128 = vmul.f32 %v126, %v127
    %v129 = vadd.f32 %v128, %v126
    %130 = vst [vmem:[#allocation2] sm:$0xff] %v129
    %v131 = vmul.f32 %v125, 2.5
    %v132 = vadd.f32 %v131, 5.5
    %v133 = vfloor.f32 %v132
    %vm134 = vcmp.eq.f32.partialorder %v133, 0.0
    %v135 = vsel %vm134, 1.0, 0.0
    %vm136 = vcmp.eq.f32.partialorder %v133, 1.0
    %v137 = vsel %vm136, 1.0, 0.0
    %vm138 = vcmp.eq.f32.partialorder %v133, 2.0
    %v139 = vsel %vm138, 1.0, 0.0
    %vm140 = vcmp.eq.f32.partialorder %v133, 3.0
    %v141 = vsel %vm140, 1.0, 0.0
    %vm142 = vcmp.eq.f32.partialorder %v133, 4.0
    %v143 = vsel %vm142, 1.0, 0.0
    %vm144 = vcmp.eq.f32.partialorder %v133, 5.0
    %v145 = vsel %vm144, 1.0, 0.0
    %vm146 = vcmp.eq.f32.partialorder %v133, 6.0
    %v147 = vsel %vm146, 1.0, 0.0
    %vm148 = vcmp.eq.f32.partialorder %v133, 7.0
    %v149 = vsel %vm148, 1.0, 0.0
    %vm150 = vcmp.eq.f32.partialorder %v133, 8.0
    %v151 = vsel %vm150, 1.0, 0.0
    %vm152 = vcmp.eq.f32.partialorder %v133, 9.0
    %v153 = vsel %vm152, 1.0, 0.0
    %vm154 = vcmp.eq.f32.partialorder %v133, 10.0
    %v155 = vsel %vm154, 1.0, 0.0
    %v156 = vsub.f32 %v132, 1.0
    %v157 = vsub.f32 %v132, 2.0
    %v158 = vsub.f32 %v132, 3.0
    %v159 = vsub.f32 %v132, 4.0
    %v160 = vsub.f32 %v132, 5.0
    %v161 = vsub.f32 %v132, 6.0
    %v162 = vsub.f32 %v132, 7.0
    %v163 = vsub.f32 %v132, 8.0
    %v164 = vsub.f32 %v132, 9.0
    %v165 = vsub.f32 %v132, 10.0
    %v166 = vmul.f32 %v132, %v135
    %v167 = vsub.f32 1.0, %v156
    %v168 = vmul.f32 %v167, %v137
    %v169 = vadd.f32 %v166, %v168
    %v170 = vmul.f32 %v156, %v137
    %v171 = vsub.f32 1.0, %v157
    %v172 = vmul.f32 %v171, %v139
    %v173 = vadd.f32 %v170, %v172
    %v174 = vmul.f32 %v157, %v139
    %v175 = vsub.f32 1.0, %v158
    %v176 = vmul.f32 %v175, %v141
    %v177 = vadd.f32 %v174, %v176
    %v178 = vmul.f32 %v158, %v141
    %v179 = vsub.f32 1.0, %v159
    %v180 = vmul.f32 %v179, %v143
    %v181 = vadd.f32 %v178, %v180
    %v182 = vmul.f32 %v159, %v143
    %v183 = vsub.f32 1.0, %v160
    %v184 = vmul.f32 %v183, %v145
    %v185 = vadd.f32 %v182, %v184
    %v186 = vmul.f32 %v160, %v145
    %v187 = vsub.f32 1.0, %v161
    %v188 = vmul.f32 %v187, %v147
    %v189 = vadd.f32 %v186, %v188
    %v190 = vmul.f32 %v161, %v147
    %v191 = vsub.f32 1.0, %v162
    %v192 = vmul.f32 %v191, %v149
    %v193 = vadd.f32 %v190, %v192
    %v194 = vmul.f32 %v162, %v149
    %v195 = vsub.f32 1.0, %v163
    %v196 = vmul.f32 %v195, %v151
    %v197 = vadd.f32 %v194, %v196
    %v198 = vmul.f32 %v163, %v151
    %v199 = vsub.f32 1.0, %v164
    %v200 = vmul.f32 %v199, %v153
    %v201 = vadd.f32 %v198, %v200
    %v202 = vmul.f32 %v164, %v153
    %v203 = vsub.f32 1.0, %v165
    %v204 = vmul.f32 %v203, %v155
    %v205 = vadd.f32 %v202, %v204
    %v206 = vmul.f32 %v132, 0.5
    %v207 = vmul.f32 %v156, 0.5
    %v208 = vmul.f32 %v157, 0.5
    %v209 = vmul.f32 %v158, 0.5
    %v210 = vmul.f32 %v159, 0.5
    %v211 = vmul.f32 %v160, 0.5
    %v212 = vmul.f32 %v161, 0.5
    %v213 = vmul.f32 %v162, 0.5
    %v214 = vmul.f32 %v163, 0.5
    %v215 = vmul.f32 %v164, 0.5
    %v216 = vmul.f32 %v206, %v169
    %v217 = vsub.f32 1.0, %v207
    %v218 = vmul.f32 %v217, %v173
    %v219 = vadd.f32 %v216, %v218
    %v220 = vmul.f32 %v207, %v173
    %v221 = vsub.f32 1.0, %v208
    %v222 = vmul.f32 %v221, %v177
    %v223 = vadd.f32 %v220, %v222
    %v224 = vmul.f32 %v208, %v177
    %v225 = vsub.f32 1.0, %v209
    %v226 = vmul.f32 %v225, %v181
    %v227 = vadd.f32 %v224, %v226
    %v228 = vmul.f32 %v209, %v181
    %v229 = vsub.f32 1.0, %v210
    %v230 = vmul.f32 %v229, %v185
    %v231 = vadd.f32 %v228, %v230
    %v232 = vmul.f32 %v210, %v185
    %v233 = vsub.f32 1.0, %v211
    %v234 = vmul.f32 %v233, %v189
    %v235 = vadd.f32 %v232, %v234
    %v236 = vmul.f32 %v211, %v189
    %v237 = vsub.f32 1.0, %v212
    %v238 = vmul.f32 %v237, %v193
    %v239 = vadd.f32 %v236, %v238
    %v240 = vmul.f32 %v212, %v193
    %v241 = vsub.f32 1.0, %v213
    %v242 = vmul.f32 %v241, %v197
    %v243 = vadd.f32 %v240, %v242
    %v244 = vmul.f32 %v213, %v197
    %v245 = vsub.f32 1.0, %v214
    %v246 = vmul.f32 %v245, %v201
    %v247 = vadd.f32 %v244, %v246
    %v248 = vmul.f32 %v214, %v201
    %v249 = vsub.f32 1.0, %v215
    %v250 = vmul.f32 %v249, %v205
    %v251 = vadd.f32 %v248, %v250
    %v252 = vmul.f32 %v132, 0.33333334
    %v253 = vmul.f32 %v156, 0.33333334
    %v254 = vmul.f32 %v157, 0.33333334
    %v255 = vmul.f32 %v158, 0.33333334
    %v256 = vmul.f32 %v159, 0.33333334
    %v257 = vmul.f32 %v160, 0.33333334
    %v258 = vmul.f32 %v161, 0.33333334
    %v259 = vmul.f32 %v162, 0.33333334
    %v260 = vmul.f32 %v163, 0.33333334
    %v261 = vmul.f32 %v252, %v219
    %v262 = vsub.f32 1.0, %v253
    %v263 = vmul.f32 %v262, %v223
    %v264 = vadd.f32 %v261, %v263
    %v265 = vmul.f32 %v253, %v223
    %v266 = vsub.f32 1.0, %v254
    %v267 = vmul.f32 %v266, %v227
    %v268 = vadd.f32 %v265, %v267
    %v269 = vmul.f32 %v254, %v227
    %v270 = vsub.f32 1.0, %v255
    %v271 = vmul.f32 %v270, %v231
    %v272 = vadd.f32 %v269, %v271
    %v273 = vmul.f32 %v255, %v231
    %v274 = vsub.f32 1.0, %v256
    %v275 = vmul.f32 %v274, %v235
    %v276 = vadd.f32 %v273, %v275
    %v277 = vmul.f32 %v256, %v235
    %v278 = vsub.f32 1.0, %v257
    %v279 = vmul.f32 %v278, %v239
    %v280 = vadd.f32 %v277, %v279
    %v281 = vmul.f32 %v257, %v239
    %v282 = vsub.f32 1.0, %v258
    %v283 = vmul.f32 %v282, %v243
    %v284 = vadd.f32 %v281, %v283
    %v285 = vmul.f32 %v258, %v243
    %v286 = vsub.f32 1.0, %v259
    %v287 = vmul.f32 %v286, %v247
    %v288 = vadd.f32 %v285, %v287
    %v289 = vmul.f32 %v259, %v247
    %v290 = vsub.f32 1.0, %v260
    %v291 = vmul.f32 %v290, %v251
    %v292 = vadd.f32 %v289, %v291
    %293 = vst [vmem:[#allocation2 + $0x8] sm:$0xff] %v264
    %294 = vst [vmem:[#allocation2 + $0x10] sm:$0xff] %v268
    %295 = vst [vmem:[#allocation2 + $0x18] sm:$0xff] %v272
    %296 = vst [vmem:[#allocation2 + $0x20] sm:$0xff] %v276
    %297 = vst [vmem:[#allocation2 + $0x28] sm:$0xff] %v280
    %298 = vst [vmem:[#allocation2 + $0x30] sm:$0xff] %v284
    %299 = vst [vmem:[#allocation2 + $0x38] sm:$0xff] %v288
    %300 = vst [vmem:[#allocation2 + $0x40] sm:$0xff] %v292
    %v301 = vld [vmem:[#allocation9] sm:$0xff]
    %v302 = vld [vmem:[#allocation2] sm:$0xff]
    %v303 = vld [vmem:[#allocation2 + $0x8] sm:$0xff]
    %v304 = vld [vmem:[#allocation2 + $0x10] sm:$0xff]
    %v305 = vld [vmem:[#allocation2 + $0x18] sm:$0xff]
    %v306 = vld [vmem:[#allocation2 + $0x20] sm:$0xff]
    %v307 = vld [vmem:[#allocation2 + $0x28] sm:$0xff]
    %v308 = vld [vmem:[#allocation2 + $0x30] sm:$0xff]
    %v309 = vld [vmem:[#allocation2 + $0x38] sm:$0xff]
    %v310 = vld [vmem:[#allocation2 + $0x40] sm:$0xff]
    %vm311 = vcmask 588800
    %v313 = vsel %vm311, %v301, 0
    %315 = vmatpush.msra.mxu0 0.0
    %316 = vmatpush.msra.mxu0 0.0
    %317 = vmatpush.msra.mxu0 0.0
    %318 = vmatpush.msra.mxu0 0.0
    %319 = vmatpush.msra.mxu0 0.0
    %320 = vmatpush.msra.mxu0 0.0
    %321 = vmatpush.msra.mxu0 0.0
    %322 = vmatpush.msra.mxu0 %v310
    %323 = vmatpush.msra.mxu0 %v309
    %324 = vmatpush.msra.mxu0 %v308
    %325 = vmatpush.msra.mxu0 %v307
    %326 = vmatpush.msra.mxu0 %v306
    %327 = vmatpush.msra.mxu0 %v305
    %328 = vmatpush.msra.mxu0 %v304
    %329 = vmatpush.msra.mxu0 %v303
    %330 = vmatpush.msra.mxu0 %v302
    %331 = vmatmul.f32.gmra.mxu0 %v313
    %v332 = vpop.f32.mrf.mxu0
    %v333 = vadd.f32 0.0, %v332
    %334 = vdwg.mxu0
    %v335 = vmul.f32 %v333, 0.5
    %v336 = vtanh.pop %v335
    %v337 = vmul.f32 %v335, %v336
    %v338 = vadd.f32 %v337, %v335
    %339 = vst [vmem:[#allocation2] sm:$0xff] %v338
    %v340 = vmul.f32 %v333, 2.5
    %v341 = vadd.f32 %v340, 5.5
    %v342 = vfloor.f32 %v341
    %vm343 = vcmp.eq.f32.partialorder %v342, 0.0
    %v344 = vsel %vm343, 1.0, 0.0
    %vm345 = vcmp.eq.f32.partialorder %v342, 1.0
    %v346 = vsel %vm345, 1.0, 0.0
    %vm347 = vcmp.eq.f32.partialorder %v342, 2.0
    %v348 = vsel %vm347, 1.0, 0.0
    %vm349 = vcmp.eq.f32.partialorder %v342, 3.0
    %v350 = vsel %vm349, 1.0, 0.0
    %vm351 = vcmp.eq.f32.partialorder %v342, 4.0
    %v352 = vsel %vm351, 1.0, 0.0
    %vm353 = vcmp.eq.f32.partialorder %v342, 5.0
    %v354 = vsel %vm353, 1.0, 0.0
    %vm355 = vcmp.eq.f32.partialorder %v342, 6.0
    %v356 = vsel %vm355, 1.0, 0.0
    %vm357 = vcmp.eq.f32.partialorder %v342, 7.0
    %v358 = vsel %vm357, 1.0, 0.0
    %vm359 = vcmp.eq.f32.partialorder %v342, 8.0
    %v360 = vsel %vm359, 1.0, 0.0
    %vm361 = vcmp.eq.f32.partialorder %v342, 9.0
    %v362 = vsel %vm361, 1.0, 0.0
    %vm363 = vcmp.eq.f32.partialorder %v342, 10.0
    %v364 = vsel %vm363, 1.0, 0.0
    %v365 = vsub.f32 %v341, 1.0
    %v366 = vsub.f32 %v341, 2.0
    %v367 = vsub.f32 %v341, 3.0
    %v368 = vsub.f32 %v341, 4.0
    %v369 = vsub.f32 %v341, 5.0
    %v370 = vsub.f32 %v341, 6.0
    %v371 = vsub.f32 %v341, 7.0
    %v372 = vsub.f32 %v341, 8.0
    %v373 = vsub.f32 %v341, 9.0
    %v374 = vsub.f32 %v341, 10.0
    %v375 = vmul.f32 %v341, %v344
    %v376 = vsub.f32 1.0, %v365
    %v377 = vmul.f32 %v376, %v346
    %v378 = vadd.f32 %v375, %v377
    %v379 = vmul.f32 %v365, %v346
    %v380 = vsub.f32 1.0, %v366
    %v381 = vmul.f32 %v380, %v348
    %v382 = vadd.f32 %v379, %v381
    %v383 = vmul.f32 %v366, %v348
    %v384 = vsub.f32 1.0, %v367
    %v385 = vmul.f32 %v384, %v350
    %v386 = vadd.f32 %v383, %v385
    %v387 = vmul.f32 %v367, %v350
    %v388 = vsub.f32 1.0, %v368
    %v389 = vmul.f32 %v388, %v352
    %v390 = vadd.f32 %v387, %v389
    %v391 = vmul.f32 %v368, %v352
    %v392 = vsub.f32 1.0, %v369
    %v393 = vmul.f32 %v392, %v354
    %v394 = vadd.f32 %v391, %v393
    %v395 = vmul.f32 %v369, %v354
    %v396 = vsub.f32 1.0, %v370
    %v397 = vmul.f32 %v396, %v356
    %v398 = vadd.f32 %v395, %v397
    %v399 = vmul.f32 %v370, %v356
    %v400 = vsub.f32 1.0, %v371
    %v401 = vmul.f32 %v400, %v358
    %v402 = vadd.f32 %v399, %v401
    %v403 = vmul.f32 %v371, %v358
    %v404 = vsub.f32 1.0, %v372
    %v405 = vmul.f32 %v404, %v360
    %v406 = vadd.f32 %v403, %v405
    %v407 = vmul.f32 %v372, %v360
    %v408 = vsub.f32 1.0, %v373
    %v409 = vmul.f32 %v408, %v362
    %v410 = vadd.f32 %v407, %v409
    %v411 = vmul.f32 %v373, %v362
    %v412 = vsub.f32 1.0, %v374
    %v413 = vmul.f32 %v412, %v364
    %v414 = vadd.f32 %v411, %v413
    %v415 = vmul.f32 %v341, 0.5
    %v416 = vmul.f32 %v365, 0.5
    %v417 = vmul.f32 %v366, 0.5
    %v418 = vmul.f32 %v367, 0.5
    %v419 = vmul.f32 %v368, 0.5
    %v420 = vmul.f32 %v369, 0.5
    %v421 = vmul.f32 %v370, 0.5
    %v422 = vmul.f32 %v371, 0.5
    %v423 = vmul.f32 %v372, 0.5
    %v424 = vmul.f32 %v373, 0.5
    %v425 = vmul.f32 %v415, %v378
    %v426 = vsub.f32 1.0, %v416
    %v427 = vmul.f32 %v426, %v382
    %v428 = vadd.f32 %v425, %v427
    %v429 = vmul.f32 %v416, %v382
    %v430 = vsub.f32 1.0, %v417
    %v431 = vmul.f32 %v430, %v386
    %v432 = vadd.f32 %v429, %v431
    %v433 = vmul.f32 %v417, %v386
    %v434 = vsub.f32 1.0, %v418
    %v435 = vmul.f32 %v434, %v390
    %v436 = vadd.f32 %v433, %v435
    %v437 = vmul.f32 %v418, %v390
    %v438 = vsub.f32 1.0, %v419
    %v439 = vmul.f32 %v438, %v394
    %v440 = vadd.f32 %v437, %v439
    %v441 = vmul.f32 %v419, %v394
    %v442 = vsub.f32 1.0, %v420
    %v443 = vmul.f32 %v442, %v398
    %v444 = vadd.f32 %v441, %v443
    %v445 = vmul.f32 %v420, %v398
    %v446 = vsub.f32 1.0, %v421
    %v447 = vmul.f32 %v446, %v402
    %v448 = vadd.f32 %v445, %v447
    %v449 = vmul.f32 %v421, %v402
    %v450 = vsub.f32 1.0, %v422
    %v451 = vmul.f32 %v450, %v406
    %v452 = vadd.f32 %v449, %v451
    %v453 = vmul.f32 %v422, %v406
    %v454 = vsub.f32 1.0, %v423
    %v455 = vmul.f32 %v454, %v410
    %v456 = vadd.f32 %v453, %v455
    %v457 = vmul.f32 %v423, %v410
    %v458 = vsub.f32 1.0, %v424
    %v459 = vmul.f32 %v458, %v414
    %v460 = vadd.f32 %v457, %v459
    %v461 = vmul.f32 %v341, 0.33333334
    %v462 = vmul.f32 %v365, 0.33333334
    %v463 = vmul.f32 %v366, 0.33333334
    %v464 = vmul.f32 %v367, 0.33333334
    %v465 = vmul.f32 %v368, 0.33333334
    %v466 = vmul.f32 %v369, 0.33333334
    %v467 = vmul.f32 %v370, 0.33333334
    %v468 = vmul.f32 %v371, 0.33333334
    %v469 = vmul.f32 %v372, 0.33333334
    %v470 = vmul.f32 %v461, %v428
    %v471 = vsub.f32 1.0, %v462
    %v472 = vmul.f32 %v471, %v432
    %v473 = vadd.f32 %v470, %v472
    %v474 = vmul.f32 %v462, %v432
    %v475 = vsub.f32 1.0, %v463
    %v476 = vmul.f32 %v475, %v436
    %v477 = vadd.f32 %v474, %v476
    %v478 = vmul.f32 %v463, %v436
    %v479 = vsub.f32 1.0, %v464
    %v480 = vmul.f32 %v479, %v440
    %v481 = vadd.f32 %v478, %v480
    %v482 = vmul.f32 %v464, %v440
    %v483 = vsub.f32 1.0, %v465
    %v484 = vmul.f32 %v483, %v444
    %v485 = vadd.f32 %v482, %v484
    %v486 = vmul.f32 %v465, %v444
    %v487 = vsub.f32 1.0, %v466
    %v488 = vmul.f32 %v487, %v448
    %v489 = vadd.f32 %v486, %v488
    %v490 = vmul.f32 %v466, %v448
    %v491 = vsub.f32 1.0, %v467
    %v492 = vmul.f32 %v491, %v452
    %v493 = vadd.f32 %v490, %v492
    %v494 = vmul.f32 %v467, %v452
    %v495 = vsub.f32 1.0, %v468
    %v496 = vmul.f32 %v495, %v456
    %v497 = vadd.f32 %v494, %v496
    %v498 = vmul.f32 %v468, %v456
    %v499 = vsub.f32 1.0, %v469
    %v500 = vmul.f32 %v499, %v460
    %v501 = vadd.f32 %v498, %v500
    %502 = vst [vmem:[#allocation2 + $0x8] sm:$0xff] %v473
    %503 = vst [vmem:[#allocation2 + $0x10] sm:$0xff] %v477
    %504 = vst [vmem:[#allocation2 + $0x18] sm:$0xff] %v481
    %505 = vst [vmem:[#allocation2 + $0x20] sm:$0xff] %v485
    %506 = vst [vmem:[#allocation2 + $0x28] sm:$0xff] %v489
    %507 = vst [vmem:[#allocation2 + $0x30] sm:$0xff] %v493
    %508 = vst [vmem:[#allocation2 + $0x38] sm:$0xff] %v497
    %509 = vst [vmem:[#allocation2 + $0x40] sm:$0xff] %v501
    %v510 = vld [vmem:[#allocation11] sm:$0xff]
    %v511 = vld [vmem:[#allocation2] sm:$0xff]
    %v512 = vld [vmem:[#allocation2 + $0x8] sm:$0xff]
    %v513 = vld [vmem:[#allocation2 + $0x10] sm:$0xff]
    %v514 = vld [vmem:[#allocation2 + $0x18] sm:$0xff]
    %v515 = vld [vmem:[#allocation2 + $0x20] sm:$0xff]
    %v516 = vld [vmem:[#allocation2 + $0x28] sm:$0xff]
    %v517 = vld [vmem:[#allocation2 + $0x30] sm:$0xff]
    %v518 = vld [vmem:[#allocation2 + $0x38] sm:$0xff]
    %v519 = vld [vmem:[#allocation2 + $0x40] sm:$0xff]
    %v521 = vsel %vm311, %v510, 0
    %523 = vmatpush.msra.mxu0 0.0
    %524 = vmatpush.msra.mxu0 0.0
    %525 = vmatpush.msra.mxu0 0.0
    %526 = vmatpush.msra.mxu0 0.0
    %527 = vmatpush.msra.mxu0 0.0
    %528 = vmatpush.msra.mxu0 0.0
    %529 = vmatpush.msra.mxu0 0.0
    %530 = vmatpush.msra.mxu0 %v519
    %531 = vmatpush.msra.mxu0 %v518
    %532 = vmatpush.msra.mxu0 %v517
    %533 = vmatpush.msra.mxu0 %v516
    %534 = vmatpush.msra.mxu0 %v515
    %535 = vmatpush.msra.mxu0 %v514
    %536 = vmatpush.msra.mxu0 %v513
    %537 = vmatpush.msra.mxu0 %v512
    %538 = vmatpush.msra.mxu0 %v511
    %539 = vmatmul.f32.gmra.mxu0 %v521
    %v540 = vpop.f32.mrf.mxu0
    %v541 = vadd.f32 0.0, %v540
    %542 = vdwg.mxu0
    %v543 = vld [vmem:[#allocation6] sm:$0xff]
    %v544 = vadd.f32 %v543, %v541
    %545 = vst [vmem:[#allocation15] sm:$0xff] %v544
    %v546 = vmul.f32 %v544, 0.5
    %v547 = vtanh.pop %v546
    %v548 = vmul.f32 %v546, %v547
    %v549 = vadd.f32 %v548, %v546
    %550 = vst [vmem:[#allocation2] sm:$0xff] %v549
    %v551 = vmul.f32 %v544, 2.5
    %v552 = vadd.f32 %v551, 5.5
    %v553 = vfloor.f32 %v552
    %vm554 = vcmp.eq.f32.partialorder %v553, 0.0
    %v555 = vsel %vm554, 1.0, 0.0
    %vm556 = vcmp.eq.f32.partialorder %v553, 1.0
    %v557 = vsel %vm556, 1.0, 0.0
    %vm558 = vcmp.eq.f32.partialorder %v553, 2.0
    %v559 = vsel %vm558, 1.0, 0.0
    %vm560 = vcmp.eq.f32.partialorder %v553, 3.0
    %v561 = vsel %vm560, 1.0, 0.0
    %vm562 = vcmp.eq.f32.partialorder %v553, 4.0
    %v563 = vsel %vm562, 1.0, 0.0
    %vm564 = vcmp.eq.f32.partialorder %v553, 5.0
    %v565 = vsel %vm564, 1.0, 0.0
    %vm566 = vcmp.eq.f32.partialorder %v553, 6.0
    %v567 = vsel %vm566, 1.0, 0.0
    %vm568 = vcmp.eq.f32.partialorder %v553, 7.0
    %v569 = vsel %vm568, 1.0, 0.0
    %vm570 = vcmp.eq.f32.partialorder %v553, 8.0
    %v571 = vsel %vm570, 1.0, 0.0
    %vm572 = vcmp.eq.f32.partialorder %v553, 9.0
    %v573 = vsel %vm572, 1.0, 0.0
    %vm574 = vcmp.eq.f32.partialorder %v553, 10.0
    %v575 = vsel %vm574, 1.0, 0.0
    %v576 = vsub.f32 %v552, 1.0
    %v577 = vsub.f32 %v552, 2.0
    %v578 = vsub.f32 %v552, 3.0
    %v579 = vsub.f32 %v552, 4.0
    %v580 = vsub.f32 %v552, 5.0
    %v581 = vsub.f32 %v552, 6.0
    %v582 = vsub.f32 %v552, 7.0
    %v583 = vsub.f32 %v552, 8.0
    %v584 = vsub.f32 %v552, 9.0
    %v585 = vsub.f32 %v552, 10.0
    %v586 = vmul.f32 %v552, %v555
    %v587 = vsub.f32 1.0, %v576
    %v588 = vmul.f32 %v587, %v557
    %v589 = vadd.f32 %v586, %v588
    %v590 = vmul.f32 %v576, %v557
    %v591 = vsub.f32 1.0, %v577
    %v592 = vmul.f32 %v591, %v559
    %v593 = vadd.f32 %v590, %v592
    %v594 = vmul.f32 %v577, %v559
    %v595 = vsub.f32 1.0, %v578
    %v596 = vmul.f32 %v595, %v561
    %v597 = vadd.f32 %v594, %v596
    %v598 = vmul.f32 %v578, %v561
    %v599 = vsub.f32 1.0, %v579
    %v600 = vmul.f32 %v599, %v563
    %v601 = vadd.f32 %v598, %v600
    %v602 = vmul.f32 %v579, %v563
    %v603 = vsub.f32 1.0, %v580
    %v604 = vmul.f32 %v603, %v565
    %v605 = vadd.f32 %v602, %v604
    %v606 = vmul.f32 %v580, %v565
    %v607 = vsub.f32 1.0, %v581
    %v608 = vmul.f32 %v607, %v567
    %v609 = vadd.f32 %v606, %v608
    %v610 = vmul.f32 %v581, %v567
    %v611 = vsub.f32 1.0, %v582
    %v612 = vmul.f32 %v611, %v569
    %v613 = vadd.f32 %v610, %v612
    %v614 = vmul.f32 %v582, %v569
    %v615 = vsub.f32 1.0, %v583
    %v616 = vmul.f32 %v615, %v571
    %v617 = vadd.f32 %v614, %v616
    %v618 = vmul.f32 %v583, %v571
    %v619 = vsub.f32 1.0, %v584
    %v620 = vmul.f32 %v619, %v573
    %v621 = vadd.f32 %v618, %v620
    %v622 = vmul.f32 %v584, %v573
    %v623 = vsub.f32 1.0, %v585
    %v624 = vmul.f32 %v623, %v575
    %v625 = vadd.f32 %v622, %v624
    %v626 = vmul.f32 %v552, 0.5
    %v627 = vmul.f32 %v576, 0.5
    %v628 = vmul.f32 %v577, 0.5
    %v629 = vmul.f32 %v578, 0.5
    %v630 = vmul.f32 %v579, 0.5
    %v631 = vmul.f32 %v580, 0.5
    %v632 = vmul.f32 %v581, 0.5
    %v633 = vmul.f32 %v582, 0.5
    %v634 = vmul.f32 %v583, 0.5
    %v635 = vmul.f32 %v584, 0.5
    %v636 = vmul.f32 %v626, %v589
    %v637 = vsub.f32 1.0, %v627
    %v638 = vmul.f32 %v637, %v593
    %v639 = vadd.f32 %v636, %v638
    %v640 = vmul.f32 %v627, %v593
    %v641 = vsub.f32 1.0, %v628
    %v642 = vmul.f32 %v641, %v597
    %v643 = vadd.f32 %v640, %v642
    %v644 = vmul.f32 %v628, %v597
    %v645 = vsub.f32 1.0, %v629
    %v646 = vmul.f32 %v645, %v601
    %v647 = vadd.f32 %v644, %v646
    %v648 = vmul.f32 %v629, %v601
    %v649 = vsub.f32 1.0, %v630
    %v650 = vmul.f32 %v649, %v605
    %v651 = vadd.f32 %v648, %v650
    %v652 = vmul.f32 %v630, %v605
    %v653 = vsub.f32 1.0, %v631
    %v654 = vmul.f32 %v653, %v609
    %v655 = vadd.f32 %v652, %v654
    %v656 = vmul.f32 %v631, %v609
    %v657 = vsub.f32 1.0, %v632
    %v658 = vmul.f32 %v657, %v613
    %v659 = vadd.f32 %v656, %v658
    %v660 = vmul.f32 %v632, %v613
    %v661 = vsub.f32 1.0, %v633
    %v662 = vmul.f32 %v661, %v617
    %v663 = vadd.f32 %v660, %v662
    %v664 = vmul.f32 %v633, %v617
    %v665 = vsub.f32 1.0, %v634
    %v666 = vmul.f32 %v665, %v621
    %v667 = vadd.f32 %v664, %v666
    %v668 = vmul.f32 %v634, %v621
    %v669 = vsub.f32 1.0, %v635
    %v670 = vmul.f32 %v669, %v625
    %v671 = vadd.f32 %v668, %v670
    %v672 = vmul.f32 %v552, 0.33333334
    %v673 = vmul.f32 %v576, 0.33333334
    %v674 = vmul.f32 %v577, 0.33333334
    %v675 = vmul.f32 %v578, 0.33333334
    %v676 = vmul.f32 %v579, 0.33333334
    %v677 = vmul.f32 %v580, 0.33333334
    %v678 = vmul.f32 %v581, 0.33333334
    %v679 = vmul.f32 %v582, 0.33333334
    %v680 = vmul.f32 %v583, 0.33333334
    %v681 = vmul.f32 %v672, %v639
    %v682 = vsub.f32 1.0, %v673
    %v683 = vmul.f32 %v682, %v643
    %v684 = vadd.f32 %v681, %v683
    %v685 = vmul.f32 %v673, %v643
    %v686 = vsub.f32 1.0, %v674
    %v687 = vmul.f32 %v686, %v647
    %v688 = vadd.f32 %v685, %v687
    %v689 = vmul.f32 %v674, %v647
    %v690 = vsub.f32 1.0, %v675
    %v691 = vmul.f32 %v690, %v651
    %v692 = vadd.f32 %v689, %v691
    %v693 = vmul.f32 %v675, %v651
    %v694 = vsub.f32 1.0, %v676
    %v695 = vmul.f32 %v694, %v655
    %v696 = vadd.f32 %v693, %v695
    %v697 = vmul.f32 %v676, %v655
    %v698 = vsub.f32 1.0, %v677
    %v699 = vmul.f32 %v698, %v659
    %v700 = vadd.f32 %v697, %v699
    %v701 = vmul.f32 %v677, %v659
    %v702 = vsub.f32 1.0, %v678
    %v703 = vmul.f32 %v702, %v663
    %v704 = vadd.f32 %v701, %v703
    %v705 = vmul.f32 %v678, %v663
    %v706 = vsub.f32 1.0, %v679
    %v707 = vmul.f32 %v706, %v667
    %v708 = vadd.f32 %v705, %v707
    %v709 = vmul.f32 %v679, %v667
    %v710 = vsub.f32 1.0, %v680
    %v711 = vmul.f32 %v710, %v671
    %v712 = vadd.f32 %v709, %v711
    %713 = vst [vmem:[#allocation2 + $0x8] sm:$0xff] %v684
    %714 = vst [vmem:[#allocation2 + $0x10] sm:$0xff] %v688
    %715 = vst [vmem:[#allocation2 + $0x18] sm:$0xff] %v692
    %716 = vst [vmem:[#allocation2 + $0x20] sm:$0xff] %v696
    %717 = vst [vmem:[#allocation2 + $0x28] sm:$0xff] %v700
    %718 = vst [vmem:[#allocation2 + $0x30] sm:$0xff] %v704
    %719 = vst [vmem:[#allocation2 + $0x38] sm:$0xff] %v708
    %720 = vst [vmem:[#allocation2 + $0x40] sm:$0xff] %v712
    %v721 = vld [vmem:[#allocation12] sm:$0xff]
    %v722 = vld [vmem:[#allocation2] sm:$0xff]
    %v723 = vld [vmem:[#allocation2 + $0x8] sm:$0xff]
    %v724 = vld [vmem:[#allocation2 + $0x10] sm:$0xff]
    %v725 = vld [vmem:[#allocation2 + $0x18] sm:$0xff]
    %v726 = vld [vmem:[#allocation2 + $0x20] sm:$0xff]
    %v727 = vld [vmem:[#allocation2 + $0x28] sm:$0xff]
    %v728 = vld [vmem:[#allocation2 + $0x30] sm:$0xff]
    %v729 = vld [vmem:[#allocation2 + $0x38] sm:$0xff]
    %v730 = vld [vmem:[#allocation2 + $0x40] sm:$0xff]
    %v732 = vsel %vm311, %v721, 0
    %734 = vmatpush.msra.mxu0 0.0
    %735 = vmatpush.msra.mxu0 0.0
    %736 = vmatpush.msra.mxu0 0.0
    %737 = vmatpush.msra.mxu0 0.0
    %738 = vmatpush.msra.mxu0 0.0
    %739 = vmatpush.msra.mxu0 0.0
    %740 = vmatpush.msra.mxu0 0.0
    %741 = vmatpush.msra.mxu0 %v730
    %742 = vmatpush.msra.mxu0 %v729
    %743 = vmatpush.msra.mxu0 %v728
    %744 = vmatpush.msra.mxu0 %v727
    %745 = vmatpush.msra.mxu0 %v726
    %746 = vmatpush.msra.mxu0 %v725
    %747 = vmatpush.msra.mxu0 %v724
    %748 = vmatpush.msra.mxu0 %v723
    %749 = vmatpush.msra.mxu0 %v722
    %750 = vmatmul.f32.gmra.mxu0 %v732
    %v751 = vpop.f32.mrf.mxu0
    %v752 = vadd.f32 0.0, %v751
    %753 = vdwg.mxu0
    %v754 = vmul.f32 %v752, 0.5
    %v755 = vtanh.pop %v754
    %v756 = vmul.f32 %v754, %v755
    %v757 = vadd.f32 %v756, %v754
    %758 = vst [vmem:[#allocation2] sm:$0xff] %v757
    %v759 = vmul.f32 %v752, 2.5
    %v760 = vadd.f32 %v759, 5.5
    %v761 = vfloor.f32 %v760
    %vm762 = vcmp.eq.f32.partialorder %v761, 0.0
    %v763 = vsel %vm762, 1.0, 0.0
    %vm764 = vcmp.eq.f32.partialorder %v761, 1.0
    %v765 = vsel %vm764, 1.0, 0.0
    %vm766 = vcmp.eq.f32.partialorder %v761, 2.0
    %v767 = vsel %vm766, 1.0, 0.0
    %vm768 = vcmp.eq.f32.partialorder %v761, 3.0
    %v769 = vsel %vm768, 1.0, 0.0
    %vm770 = vcmp.eq.f32.partialorder %v761, 4.0
    %v771 = vsel %vm770, 1.0, 0.0
    %vm772 = vcmp.eq.f32.partialorder %v761, 5.0
    %v773 = vsel %vm772, 1.0, 0.0
    %vm774 = vcmp.eq.f32.partialorder %v761, 6.0
    %v775 = vsel %vm774, 1.0, 0.0
    %vm776 = vcmp.eq.f32.partialorder %v761, 7.0
    %v777 = vsel %vm776, 1.0, 0.0
    %vm778 = vcmp.eq.f32.partialorder %v761, 8.0
    %v779 = vsel %vm778, 1.0, 0.0
    %vm780 = vcmp.eq.f32.partialorder %v761, 9.0
    %v781 = vsel %vm780, 1.0, 0.0
    %vm782 = vcmp.eq.f32.partialorder %v761, 10.0
    %v783 = vsel %vm782, 1.0, 0.0
    %v784 = vsub.f32 %v760, 1.0
    %v785 = vsub.f32 %v760, 2.0
    %v786 = vsub.f32 %v760, 3.0
    %v787 = vsub.f32 %v760, 4.0
    %v788 = vsub.f32 %v760, 5.0
    %v789 = vsub.f32 %v760, 6.0
    %v790 = vsub.f32 %v760, 7.0
    %v791 = vsub.f32 %v760, 8.0
    %v792 = vsub.f32 %v760, 9.0
    %v793 = vsub.f32 %v760, 10.0
    %v794 = vmul.f32 %v760, %v763
    %v795 = vsub.f32 1.0, %v784
    %v796 = vmul.f32 %v795, %v765
    %v797 = vadd.f32 %v794, %v796
    %v798 = vmul.f32 %v784, %v765
    %v799 = vsub.f32 1.0, %v785
    %v800 = vmul.f32 %v799, %v767
    %v801 = vadd.f32 %v798, %v800
    %v802 = vmul.f32 %v785, %v767
    %v803 = vsub.f32 1.0, %v786
    %v804 = vmul.f32 %v803, %v769
    %v805 = vadd.f32 %v802, %v804
    %v806 = vmul.f32 %v786, %v769
    %v807 = vsub.f32 1.0, %v787
    %v808 = vmul.f32 %v807, %v771
    %v809 = vadd.f32 %v806, %v808
    %v810 = vmul.f32 %v787, %v771
    %v811 = vsub.f32 1.0, %v788
    %v812 = vmul.f32 %v811, %v773
    %v813 = vadd.f32 %v810, %v812
    %v814 = vmul.f32 %v788, %v773
    %v815 = vsub.f32 1.0, %v789
    %v816 = vmul.f32 %v815, %v775
    %v817 = vadd.f32 %v814, %v816
    %v818 = vmul.f32 %v789, %v775
    %v819 = vsub.f32 1.0, %v790
    %v820 = vmul.f32 %v819, %v777
    %v821 = vadd.f32 %v818, %v820
    %v822 = vmul.f32 %v790, %v777
    %v823 = vsub.f32 1.0, %v791
    %v824 = vmul.f32 %v823, %v779
    %v825 = vadd.f32 %v822, %v824
    %v826 = vmul.f32 %v791, %v779
    %v827 = vsub.f32 1.0, %v792
    %v828 = vmul.f32 %v827, %v781
    %v829 = vadd.f32 %v826, %v828
    %v830 = vmul.f32 %v792, %v781
    %v831 = vsub.f32 1.0, %v793
    %v832 = vmul.f32 %v831, %v783
    %v833 = vadd.f32 %v830, %v832
    %v834 = vmul.f32 %v760, 0.5
    %v835 = vmul.f32 %v784, 0.5
    %v836 = vmul.f32 %v785, 0.5
    %v837 = vmul.f32 %v786, 0.5
    %v838 = vmul.f32 %v787, 0.5
    %v839 = vmul.f32 %v788, 0.5
    %v840 = vmul.f32 %v789, 0.5
    %v841 = vmul.f32 %v790, 0.5
    %v842 = vmul.f32 %v791, 0.5
    %v843 = vmul.f32 %v792, 0.5
    %v844 = vmul.f32 %v834, %v797
    %v845 = vsub.f32 1.0, %v835
    %v846 = vmul.f32 %v845, %v801
    %v847 = vadd.f32 %v844, %v846
    %v848 = vmul.f32 %v835, %v801
    %v849 = vsub.f32 1.0, %v836
    %v850 = vmul.f32 %v849, %v805
    %v851 = vadd.f32 %v848, %v850
    %v852 = vmul.f32 %v836, %v805
    %v853 = vsub.f32 1.0, %v837
    %v854 = vmul.f32 %v853, %v809
    %v855 = vadd.f32 %v852, %v854
    %v856 = vmul.f32 %v837, %v809
    %v857 = vsub.f32 1.0, %v838
    %v858 = vmul.f32 %v857, %v813
    %v859 = vadd.f32 %v856, %v858
    %v860 = vmul.f32 %v838, %v813
    %v861 = vsub.f32 1.0, %v839
    %v862 = vmul.f32 %v861, %v817
    %v863 = vadd.f32 %v860, %v862
    %v864 = vmul.f32 %v839, %v817
    %v865 = vsub.f32 1.0, %v840
    %v866 = vmul.f32 %v865, %v821
    %v867 = vadd.f32 %v864, %v866
    %v868 = vmul.f32 %v840, %v821
    %v869 = vsub.f32 1.0, %v841
    %v870 = vmul.f32 %v869, %v825
    %v871 = vadd.f32 %v868, %v870
    %v872 = vmul.f32 %v841, %v825
    %v873 = vsub.f32 1.0, %v842
    %v874 = vmul.f32 %v873, %v829
    %v875 = vadd.f32 %v872, %v874
    %v876 = vmul.f32 %v842, %v829
    %v877 = vsub.f32 1.0, %v843
    %v878 = vmul.f32 %v877, %v833
    %v879 = vadd.f32 %v876, %v878
    %v880 = vmul.f32 %v760, 0.33333334
    %v881 = vmul.f32 %v784, 0.33333334
    %v882 = vmul.f32 %v785, 0.33333334
    %v883 = vmul.f32 %v786, 0.33333334
    %v884 = vmul.f32 %v787, 0.33333334
    %v885 = vmul.f32 %v788, 0.33333334
    %v886 = vmul.f32 %v789, 0.33333334
    %v887 = vmul.f32 %v790, 0.33333334
    %v888 = vmul.f32 %v791, 0.33333334
    %v889 = vmul.f32 %v880, %v847
    %v890 = vsub.f32 1.0, %v881
    %v891 = vmul.f32 %v890, %v851
    %v892 = vadd.f32 %v889, %v891
    %v893 = vmul.f32 %v881, %v851
    %v894 = vsub.f32 1.0, %v882
    %v895 = vmul.f32 %v894, %v855
    %v896 = vadd.f32 %v893, %v895
    %v897 = vmul.f32 %v882, %v855
    %v898 = vsub.f32 1.0, %v883
    %v899 = vmul.f32 %v898, %v859
    %v900 = vadd.f32 %v897, %v899
    %v901 = vmul.f32 %v883, %v859
    %v902 = vsub.f32 1.0, %v884
    %v903 = vmul.f32 %v902, %v863
    %v904 = vadd.f32 %v901, %v903
    %v905 = vmul.f32 %v884, %v863
    %v906 = vsub.f32 1.0, %v885
    %v907 = vmul.f32 %v906, %v867
    %v908 = vadd.f32 %v905, %v907
    %v909 = vmul.f32 %v885, %v867
    %v910 = vsub.f32 1.0, %v886
    %v911 = vmul.f32 %v910, %v871
    %v912 = vadd.f32 %v909, %v911
    %v913 = vmul.f32 %v886, %v871
    %v914 = vsub.f32 1.0, %v887
    %v915 = vmul.f32 %v914, %v875
    %v916 = vadd.f32 %v913, %v915
    %v917 = vmul.f32 %v887, %v875
    %v918 = vsub.f32 1.0, %v888
    %v919 = vmul.f32 %v918, %v879
    %v920 = vadd.f32 %v917, %v919
    %921 = vst [vmem:[#allocation2 + $0x8] sm:$0xff] %v892
    %922 = vst [vmem:[#allocation2 + $0x10] sm:$0xff] %v896
    %923 = vst [vmem:[#allocation2 + $0x18] sm:$0xff] %v900
    %924 = vst [vmem:[#allocation2 + $0x20] sm:$0xff] %v904
    %925 = vst [vmem:[#allocation2 + $0x28] sm:$0xff] %v908
    %926 = vst [vmem:[#allocation2 + $0x30] sm:$0xff] %v912
    %927 = vst [vmem:[#allocation2 + $0x38] sm:$0xff] %v916
    %928 = vst [vmem:[#allocation2 + $0x40] sm:$0xff] %v920
    %v929 = vld [vmem:[#allocation14] sm:$0xff]
    %v930 = vld [vmem:[#allocation2] sm:$0xff]
    %v931 = vld [vmem:[#allocation2 + $0x8] sm:$0xff]
    %v932 = vld [vmem:[#allocation2 + $0x10] sm:$0xff]
    %v933 = vld [vmem:[#allocation2 + $0x18] sm:$0xff]
    %v934 = vld [vmem:[#allocation2 + $0x20] sm:$0xff]
    %v935 = vld [vmem:[#allocation2 + $0x28] sm:$0xff]
    %v936 = vld [vmem:[#allocation2 + $0x30] sm:$0xff]
    %v937 = vld [vmem:[#allocation2 + $0x38] sm:$0xff]
    %v938 = vld [vmem:[#allocation2 + $0x40] sm:$0xff]
    %v940 = vsel %vm311, %v929, 0
    %942 = vmatpush.msra.mxu0 0.0
    %943 = vmatpush.msra.mxu0 0.0
    %944 = vmatpush.msra.mxu0 0.0
    %945 = vmatpush.msra.mxu0 0.0
    %946 = vmatpush.msra.mxu0 0.0
    %947 = vmatpush.msra.mxu0 0.0
    %948 = vmatpush.msra.mxu0 0.0
    %949 = vmatpush.msra.mxu0 %v938
    %950 = vmatpush.msra.mxu0 %v937
    %951 = vmatpush.msra.mxu0 %v936
    %952 = vmatpush.msra.mxu0 %v935
    %953 = vmatpush.msra.mxu0 %v934
    %954 = vmatpush.msra.mxu0 %v933
    %955 = vmatpush.msra.mxu0 %v932
    %956 = vmatpush.msra.mxu0 %v931
    %957 = vmatpush.msra.mxu0 %v930
    %958 = vmatmul.f32.gmra.mxu0 %v940
    %v959 = vpop.f32.mrf.mxu0
    %v960 = vadd.f32 0.0, %v959
    %961 = vdwg.mxu0
    %v962 = vld [vmem:[#allocation8] sm:$0xff]
    %v963 = vadd.f32 %v962, %v960
    %964 = vst [vmem:[#allocation16] sm:$0xff] %v963
    // Predicated region
    $region58: #{tpu_custom_call.1} parent=1 // pred_check
      _
    $region59: #{tpu_custom_call.1} parent=1 // pred_check_branch
      %966 = sbr.rel (0) target = $region61
    $region60: #{tpu_custom_call.1} parent=1 // pred_region
      %968 = vsyncadd [#allocation5], 0
      %s970 = sshll.u32 [#allocation15], 4
      %s971 = int_to_ptr.vmem [resolvable:$true] %s970
      %s972 = sshll.u32 %s7, 4
      %s973 = int_to_ptr.hbm [resolvable:$true] %s972
      %975 = dma.vmem_to_hbm [thread:$0]  %s971, 128, %s973, [#allocation5]
    $region61: #{tpu_custom_call.1} parent=1 // pred_fallthru
      _
    // Predicated region
    $region62: #{tpu_custom_call.1} parent=1 // pred_check
      _
    $region63: #{tpu_custom_call.1} parent=1 // pred_check_branch
      %977 = sbr.rel (0) target = $region65
    $region64: #{tpu_custom_call.1} parent=1 // pred_region
      %979 = vsyncadd [#allocation17], 0
      %s981 = sshll.u32 [#allocation16], 4
      %s982 = int_to_ptr.vmem [resolvable:$true] %s981
      %s983 = sshll.u32 %s8, 4
      %s984 = int_to_ptr.hbm [resolvable:$true] %s983
      %986 = dma.vmem_to_hbm [thread:$0]  %s982, 128, %s984, [#allocation17]
    $region65: #{tpu_custom_call.1} parent=1 // pred_fallthru
      _
    // Predicated region
    $region66: #{tpu_custom_call.1} parent=1 // pred_check
      _
    $region67: #{tpu_custom_call.1} parent=1 // pred_check_branch
      %988 = sbr.rel (0) target = $region69
    $region68: #{tpu_custom_call.1} parent=1 // pred_region
      %990 = dma.done [#allocation5], 128
    $region69: #{tpu_custom_call.1} parent=1 // pred_fallthru
      _
    // Predicated region
    $region70: #{tpu_custom_call.1} parent=1 // pred_check
      _
    $region71: #{tpu_custom_call.1} parent=1 // pred_check_branch
      %992 = sbr.rel (0) target = $region73
    $region72: #{tpu_custom_call.1} parent=1 // pred_region
      %994 = dma.done [#allocation17], 128
    $region73: #{tpu_custom_call.1} parent=1 // pred_fallthru
      _
    %995 = vsyncpa [#allocation4], 1
    %996 = vsyncpa [#allocation7], 1
    %997 = vsyncpa [#allocation10], 1
    %998 = vsyncpa [#allocation13], 1
    %999 = vsyncpa [#allocation5], 1
    %1000 = vsyncpa [#allocation17], 1

</llo_original>
